<compile_context>
chip_gen: v7x
topology: tpu7x:2x2x1
jax: 0.10.0
libtpu: 0.0.40
codegen_flags: <defaults>
</compile_context>

<pallas_src>
import math
import functools

import jax
import jax.numpy as jnp
from jax.experimental import pallas as pl
from jax.experimental.pallas import tpu as pltpu


def _default_vmem_limit():
    # ~96 MiB on v5e/v6e (128 MiB VMEM), ~48 MiB on v7x (64 MiB per TensorCore).
    try:
        cap = pltpu.get_tpu_info().vmem_capacity_bytes
        return int(min(cap * 3 // 4, 96 * 1024 * 1024))
    except Exception:
        return 48 * 1024 * 1024


VMEM_LIMIT = _default_vmem_limit()
NEG_INF = -1e30


def _fit(dim, target, unit):
    """Pick a tile <= target and a (possibly zero-padded) extent it divides evenly."""
    if dim <= target:
        return dim, dim                      # single full-extent block (always legal)
    t = target
    while t > unit:
        if dim % t == 0:
            return t, dim
        t //= 2
    if dim % unit == 0:
        return unit, dim
    padded = ((dim + target - 1) // target) * target
    return target, padded


def _tile_div(dim, target, unit):
    """Largest divisor of dim that is <= target and a multiple of unit, else the full dim."""
    if dim <= target:
        return dim
    t = target
    while t >= unit:
        if dim % t == 0:
            return t
        t //= 2
    return dim


# ---------------------------------------------------------------------------
# Tiled linear (+ optional ReLU), bf16 matmul, f32 accumulation
# ---------------------------------------------------------------------------

def _linear_kernel(x_ref, w_ref, b_ref, o_ref, acc_ref, *, activation):
    @pl.when(pl.program_id(2) == 0)
    def _init():
        acc_ref[...] = jnp.zeros_like(acc_ref)

    acc_ref[...] += jnp.dot(x_ref[...], w_ref[...],
                            preferred_element_type=jnp.float32)

    @pl.when(pl.program_id(2) == pl.num_programs(2) - 1)
    def _finalize():
        y = acc_ref[...] + b_ref[...]
        if activation == "relu":
            y = jnp.maximum(y, 0.0)
        o_ref[...] = y.astype(o_ref.dtype)


def pallas_linear(x, w, b, activation=None, out_dtype=jnp.bfloat16,
                  tm=512, tn=1024, tk=1024):
    """y = act(x @ w + b).  x: [M, K] (bf16), w: [K, N] (bf16), b: [1, N] (f32)."""
    M, K = x.shape
    N = w.shape[1]
    tm, Mp = _fit(M, tm, 8)
    tn, Np = _fit(N, tn, 128)
    tk, Kp = _fit(K, tk, 128)
    if (Mp, Kp) != (M, K):
        x = jnp.pad(x, ((0, Mp - M), (0, Kp - K)))
    if (Kp, Np) != (K, N):
        w = jnp.pad(w, ((0, Kp - K), (0, Np - N)))
    if Np != N:
        b = jnp.pad(b, ((0, 0), (0, Np - N)))

    in_bytes = jnp.dtype(x.dtype).itemsize
    out_bytes = jnp.dtype(out_dtype).itemsize
    cost = pl.CostEstimate(
        flops=2 * Mp * Np * Kp, transcendentals=0,
        bytes_accessed=Mp * Kp * in_bytes + Kp * Np * 2 + Mp * Np * out_bytes + Np * 4)

    out = pl.pallas_call(
        functools.partial(_linear_kernel, activation=activation),
        out_shape=jax.ShapeDtypeStruct((Mp, Np), out_dtype),
        grid=(Mp // tm, Np // tn, Kp // tk),
        in_specs=[
            pl.BlockSpec((tm, tk), lambda i, j, k: (i, k)),
            pl.BlockSpec((tk, tn), lambda i, j, k: (k, j)),
            pl.BlockSpec((1, tn), lambda i, j, k: (0, j)),
        ],
        out_specs=pl.BlockSpec((tm, tn), lambda i, j, k: (i, j)),
        scratch_shapes=[pltpu.VMEM((tm, tn), jnp.float32)],
        compiler_params=pltpu.CompilerParams(
            dimension_semantics=("parallel", "parallel", "arbitrary"),
            vmem_limit_bytes=VMEM_LIMIT),
        cost_estimate=cost,
    )(x, w, b)
    if (Mp, Np) != (M, N):
        out = out[:M, :N]
    return out


# ---------------------------------------------------------------------------
# Fused linear + residual add + LayerNorm:  out = LN(residual + x @ w + b)
# ---------------------------------------------------------------------------

def _linear_res_ln_kernel(x_ref, w_ref, b_ref, r_ref, g_ref, bt_ref,
                          o_ref, acc_ref, *, eps):
    @pl.when(pl.program_id(1) == 0)
    def _init():
        acc_ref[...] = jnp.zeros_like(acc_ref)

    acc_ref[...] += jnp.dot(x_ref[...], w_ref[...],
                            preferred_element_type=jnp.float32)

    @pl.when(pl.program_id(1) == pl.num_programs(1) - 1)
    def _finalize():
        y = acc_ref[...] + b_ref[...] + r_ref[...].astype(jnp.float32)
        mu = jnp.mean(y, axis=-1, keepdims=True)
        var = jnp.mean(jnp.square(y - mu), axis=-1, keepdims=True)
        yn = (y - mu) * jax.lax.rsqrt(var + eps)
        o_ref[...] = (yn * g_ref[...] + bt_ref[...]).astype(o_ref.dtype)


def pallas_linear_residual_ln(x, w, b, residual, gamma, beta, eps=1e-5,
                              out_dtype=jnp.bfloat16, tm=128, tk=512):
    """LayerNorm(residual + x @ w + b) over the full last dim N (= d_model)."""
    M, K = x.shape
    N = w.shape[1]
    tm, Mp = _fit(M, tm, 8)
    tk, Kp = _fit(K, tk, 128)
    if (Mp, Kp) != (M, K):
        x = jnp.pad(x, ((0, Mp - M), (0, Kp - K)))
    if Kp != K:
        w = jnp.pad(w, ((0, Kp - K), (0, 0)))
    if Mp != M:
        residual = jnp.pad(residual, ((0, Mp - M), (0, 0)))

    cost = pl.CostEstimate(
        flops=2 * Mp * N * Kp + 8 * Mp * N, transcendentals=Mp,
        bytes_accessed=Mp * Kp * 2 + Kp * N * 2 + 2 * Mp * N * 2 + 3 * N * 4)

    out = pl.pallas_call(
        functools.partial(_linear_res_ln_kernel, eps=eps),
        out_shape=jax.ShapeDtypeStruct((Mp, N), out_dtype),
        grid=(Mp // tm, Kp // tk),
        in_specs=[
            pl.BlockSpec((tm, tk), lambda i, k: (i, k)),
            pl.BlockSpec((tk, N), lambda i, k: (k, 0)),
            pl.BlockSpec((1, N), lambda i, k: (0, 0)),
            pl.BlockSpec((tm, N), lambda i, k: (i, 0)),
            pl.BlockSpec((1, N), lambda i, k: (0, 0)),
            pl.BlockSpec((1, N), lambda i, k: (0, 0)),
        ],
        out_specs=pl.BlockSpec((tm, N), lambda i, k: (i, 0)),
        scratch_shapes=[pltpu.VMEM((tm, N), jnp.float32)],
        compiler_params=pltpu.CompilerParams(
            dimension_semantics=("parallel", "arbitrary"),
            vmem_limit_bytes=VMEM_LIMIT),
        cost_estimate=cost,
    )(x, w, b, residual, gamma, beta)
    if Mp != M:
        out = out[:M]
    return out


# ---------------------------------------------------------------------------
# Multi-head attention: KV-blocked, online softmax, all heads per grid step,
# [S, H*dk] layout, q/k/v chunks selected via BlockSpec index_map.
# ---------------------------------------------------------------------------

def _attn_kernel(*refs, num_heads, dk, has_mask):
    if has_mask:
        q_ref, k_ref, v_ref, m_ref, o_ref, m_sc, l_sc, acc_sc = refs
    else:
        q_ref, k_ref, v_ref, o_ref, m_sc, l_sc, acc_sc = refs

    kv_idx = pl.program_id(2)

    @pl.when(kv_idx == 0)
    def _init():
        m_sc[...] = jnp.full_like(m_sc, NEG_INF)
        l_sc[...] = jnp.zeros_like(l_sc)
        acc_sc[...] = jnp.zeros_like(acc_sc)

    q = q_ref[...]                               # [tq, D]  bf16 (scale folded into W_Q)
    k = k_ref[...]                               # [tkv, D] bf16
    v = v_ref[...]                               # [tkv, D] bf16
    if has_mask:
        keep = m_ref[...] != 0                   # [tq, tkv] bool (from int8 mask)

    for h in range(num_heads):
        lo = h * dk
        qh = q[:, lo:lo + dk]
        kh = k[:, lo:lo + dk]
        vh = v[:, lo:lo + dk]
        # scores: contract the head dims directly (no explicit transpose)
        s = jax.lax.dot_general(qh, kh, (((1,), (1,)), ((), ())),
                                preferred_element_type=jnp.float32)   # [tq, tkv]
        m_prev = m_sc[:, h:h + 1]
        m_new = jnp.maximum(m_prev, jnp.max(s, axis=-1, keepdims=True))
        p = jnp.exp(s - m_new)
        if has_mask:
            # Same running max is used for alpha and p, so zeroing masked
            # probabilities after exp is exact (and avoids -inf arithmetic).
            p = jnp.where(keep, p, 0.0)
        alpha = jnp.exp(m_prev - m_new)
        l_sc[:, h:h + 1] = alpha * l_sc[:, h:h + 1] + jnp.sum(p, axis=-1, keepdims=True)
        acc_sc[:, lo:lo + dk] = alpha * acc_sc[:, lo:lo + dk] + jax.lax.dot_general(
            p.astype(v.dtype), vh, (((1,), (0,)), ((), ())),
            preferred_element_type=jnp.float32)
        m_sc[:, h:h + 1] = m_new

    @pl.when(kv_idx == pl.num_programs(2) - 1)
    def _finalize():
        # Normalize the small [tq, dk] head outputs, not the [tq, Sk] probabilities.
        inv = pl.reciprocal(jnp.maximum(l_sc[...], 1e-30), approx=True)   # [tq, H]
        for h in range(num_heads):
            lo = h * dk
            o_ref[:, lo:lo + dk] = (acc_sc[:, lo:lo + dk]
                                    * inv[:, h:h + 1]).astype(o_ref.dtype)


def pallas_attention(q_arr, k_arr, v_arr, mask, num_heads, d_model,
                     q_chunk, k_chunk, v_chunk,
                     tq=256, tkv=512, out_dtype=jnp.bfloat16):
    """q_arr/k_arr/v_arr may be fused projections whose last dim holds several
    d_model chunks; the BlockSpec index_map picks the chunk, so no XLA slice
    copies are materialized.  mask is int8 (1=keep, 0=mask) or None."""
    B, Sq, _ = q_arr.shape
    Sk = k_arr.shape[1]
    D = d_model
    dk = D // num_heads
    tq = _tile_div(Sq, tq, 8)
    tkv = _tile_div(Sk, tkv, 128)
    has_mask = mask is not None

    in_specs = [
        pl.BlockSpec((None, tq, D), lambda b, qi, ki: (b, qi, q_chunk)),
        pl.BlockSpec((None, tkv, D), lambda b, qi, ki: (b, ki, k_chunk)),
        pl.BlockSpec((None, tkv, D), lambda b, qi, ki: (b, ki, v_chunk)),
    ]
    args = [q_arr, k_arr, v_arr]
    if has_mask:
        if mask.dtype != jnp.int8:
            mask = mask.astype(jnp.int8)
        in_specs.append(pl.BlockSpec((None, tq, tkv), lambda b, qi, ki: (b, qi, ki)))
        args.append(mask)

    cost = pl.CostEstimate(
        flops=4 * B * Sq * Sk * D,
        transcendentals=B * num_heads * Sq * Sk,
        bytes_accessed=2 * (2 * B * Sq * D + 2 * B * Sk * D)
        + (B * Sq * Sk if has_mask else 0))

    kernel = functools.partial(_attn_kernel, num_heads=num_heads, dk=dk,
                               has_mask=has_mask)
    return pl.pallas_call(
        kernel,
        out_shape=jax.ShapeDtypeStruct((B, Sq, D), out_dtype),
        grid=(B, Sq // tq, Sk // tkv),
        in_specs=in_specs,
        out_specs=pl.BlockSpec((None, tq, D), lambda b, qi, ki: (b, qi, 0)),
        scratch_shapes=[pltpu.VMEM((tq, num_heads), jnp.float32),   # running max
                        pltpu.VMEM((tq, num_heads), jnp.float32),   # running denom
                        pltpu.VMEM((tq, D), jnp.float32)],          # running context
        compiler_params=pltpu.CompilerParams(
            dimension_semantics=("parallel", "parallel", "arbitrary"),
            vmem_limit_bytes=VMEM_LIMIT),
        cost_estimate=cost,
    )(*args)


# ---------------------------------------------------------------------------
# Model glue (plain JAX around the kernels)
# ---------------------------------------------------------------------------

def self_attention(p, x2d, B, S, mask, num_heads, d_model):
    qkv = pallas_linear(x2d, p["wqkv"], p["bqkv"]).reshape(B, S, 3 * d_model)
    if d_model % 128 == 0:
        return pallas_attention(qkv, qkv, qkv, mask, num_heads, d_model, 0, 1, 2)
    # TODO(synk): lane-unaligned d_model falls back to XLA slices of the fused projection.
    q = qkv[..., :d_model]
    k = qkv[..., d_model:2 * d_model]
    v = qkv[..., 2 * d_model:]
    return pallas_attention(q, k, v, mask, num_heads, d_model, 0, 0, 0)


def cross_attention(p, x2d, B, S, enc, mask, num_heads, d_model):
    Sk = enc.shape[1]
    q = pallas_linear(x2d, p["wq"], p["bq"]).reshape(B, S, d_model)
    kv = pallas_linear(enc.reshape(-1, d_model), p["wkv"], p["bkv"]).reshape(B, Sk, 2 * d_model)
    if d_model % 128 == 0:
        return pallas_attention(q, kv, kv, mask, num_heads, d_model, 0, 0, 1)
    k = kv[..., :d_model]
    v = kv[..., d_model:]
    return pallas_attention(q, k, v, mask, num_heads, d_model, 0, 0, 0)


def decoder_layer(p, x, enc, src_mask, tgt_mask, num_heads):
    B, S, D = x.shape
    x2 = x.reshape(-1, D)
    # self attention -> fused (W_O + residual + LayerNorm)
    sa = self_attention(p["self_attn"], x2, B, S, tgt_mask, num_heads, D)
    x2 = pallas_linear_residual_ln(sa.reshape(-1, D), p["self_attn"]["wo"],
                                   p["self_attn"]["bo"], x2, p["ln1_g"], p["ln1_b"])
    # cross attention -> fused (W_O + residual + LayerNorm)
    ca = cross_attention(p["cross_attn"], x2, B, S, enc, src_mask, num_heads, D)
    x2 = pallas_linear_residual_ln(ca.reshape(-1, D), p["cross_attn"]["wo"],
                                   p["cross_attn"]["bo"], x2, p["ln2_g"], p["ln2_b"])
    # feed forward: W1 + ReLU, then fused (W2 + residual + LayerNorm)
    h = pallas_linear(x2, p["ffn"]["w1"], p["ffn"]["b1"], activation="relu")
    x2 = pallas_linear_residual_ln(h, p["ffn"]["w2"], p["ffn"]["b2"],
                                   x2, p["ln3_g"], p["ln3_b"])
    return x2.reshape(B, S, D)


def decoder_forward(params, tokens, enc_output, src_mask, tgt_mask, num_heads):
    B, S = tokens.shape
    D = params["embedding"].shape[1]
    # TODO(synk): embedding gather + sinusoidal PE add stay in XLA (no clean Pallas win).
    x = jnp.take(params["embedding"], tokens, axis=0) + params["pos_encoding"][:S][None, :, :]
    # dropout -> identity (inference)
    enc = enc_output.astype(jnp.bfloat16)
    src_i8 = None if src_mask is None else src_mask.astype(jnp.int8)
    tgt_i8 = None if tgt_mask is None else tgt_mask.astype(jnp.int8)
    for lp in params["layers"]:
        x = decoder_layer(lp, x, enc, src_i8, tgt_i8, num_heads)
    logits = pallas_linear(x.reshape(-1, D), params["fc_out_w"], params["fc_out_b"],
                           out_dtype=jnp.float32)
    return logits.reshape(B, S, -1)


# ---------------------------------------------------------------------------
# Deterministic parameter init (f32 reference params) + bf16 kernel prep
# ---------------------------------------------------------------------------

def sinusoidal_pe(max_len, d_model):
    pos = jnp.arange(max_len, dtype=jnp.float32)[:, None]
    i = jnp.arange(0, d_model, 2, dtype=jnp.float32)[None, :]
    div = jnp.exp(-i * (math.log(10000.0) / d_model))
    pe = jnp.zeros((max_len, d_model), jnp.float32)
    pe = pe.at[:, 0::2].set(jnp.sin(pos * div))
    pe = pe.at[:, 1::2].set(jnp.cos(pos * div))
    return pe


def init_params(key, vocab, d_model, num_heads, num_layers, d_ff, max_len):
    def dense(k, fan_in, fan_out):
        w = jax.random.normal(k, (fan_in, fan_out), jnp.float32) * 0.02
        b = jnp.zeros((fan_out,), jnp.float32)
        return w, b

    keys = jax.random.split(key, 2 + num_layers)
    params = {
        "embedding": jax.random.normal(keys[0], (vocab, d_model), jnp.float32) * 0.02,
        "pos_encoding": sinusoidal_pe(max_len, d_model),
    }
    layers = []
    for li in range(num_layers):
        lk = jax.random.split(keys[2 + li], 8)
        wqkv, bqkv = dense(lk[0], d_model, 3 * d_model)
        wo_s, bo_s = dense(lk[1], d_model, d_model)
        wq_c, bq_c = dense(lk[2], d_model, d_model)
        wkv_c, bkv_c = dense(lk[3], d_model, 2 * d_model)
        wo_c, bo_c = dense(lk[4], d_model, d_model)
        w1, b1 = dense(lk[5], d_model, d_ff)
        w2, b2 = dense(lk[6], d_ff, d_model)
        layers.append({
            "self_attn": {"wqkv": wqkv, "bqkv": bqkv, "wo": wo_s, "bo": bo_s},
            "cross_attn": {"wq": wq_c, "bq": bq_c, "wkv": wkv_c, "bkv": bkv_c,
                           "wo": wo_c, "bo": bo_c},
            "ffn": {"w1": w1, "b1": b1, "w2": w2, "b2": b2},
            "ln1_g": jnp.ones((d_model,), jnp.float32), "ln1_b": jnp.zeros((d_model,), jnp.float32),
            "ln2_g": jnp.ones((d_model,), jnp.float32), "ln2_b": jnp.zeros((d_model,), jnp.float32),
            "ln3_g": jnp.ones((d_model,), jnp.float32), "ln3_b": jnp.zeros((d_model,), jnp.float32),
        })
    params["layers"] = layers
    fw, fb = dense(keys[1], d_model, vocab)
    params["fc_out_w"] = fw
    params["fc_out_b"] = fb
    return params


def prepare_params(raw, num_heads):
    """One-time prep: bf16 weights, (1,N) f32 biases / LN params, 1/sqrt(dk)
    folded into the Q projections, bf16 embedding / positional encoding."""
    D = raw["embedding"].shape[1]
    dk = D // num_heads
    scale = 1.0 / math.sqrt(dk)

    def wb(w):
        return w.astype(jnp.bfloat16)

    def brow(b):
        return b.reshape(1, -1).astype(jnp.float32)

    out = {
        "embedding": raw["embedding"].astype(jnp.bfloat16),
        "pos_encoding": raw["pos_encoding"].astype(jnp.bfloat16),
        "fc_out_w": wb(raw["fc_out_w"]),
        "fc_out_b": brow(raw["fc_out_b"]),
        "layers": [],
    }
    for lp in raw["layers"]:
        sa, ca, ff = lp["self_attn"], lp["cross_attn"], lp["ffn"]
        wqkv = sa["wqkv"].at[:, :D].multiply(scale)
        bqkv = sa["bqkv"].at[:D].multiply(scale)
        out["layers"].append({
            "self_attn": {"wqkv": wb(wqkv), "bqkv": brow(bqkv),
                          "wo": wb(sa["wo"]), "bo": brow(sa["bo"])},
            "cross_attn": {"wq": wb(ca["wq"] * scale), "bq": brow(ca["bq"] * scale),
                           "wkv": wb(ca["wkv"]), "bkv": brow(ca["bkv"]),
                           "wo": wb(ca["wo"]), "bo": brow(ca["bo"])},
            "ffn": {"w1": wb(ff["w1"]), "b1": brow(ff["b1"]),
                    "w2": wb(ff["w2"]), "b2": brow(ff["b2"])},
            "ln1_g": brow(lp["ln1_g"]), "ln1_b": brow(lp["ln1_b"]),
            "ln2_g": brow(lp["ln2_g"]), "ln2_b": brow(lp["ln2_b"]),
            "ln3_g": brow(lp["ln3_g"]), "ln3_b": brow(lp["ln3_b"]),
        })
    return out


# ---------------------------------------------------------------------------
# Main
# ---------------------------------------------------------------------------

if __name__ == "__main__":
    B, S = 2, 8
    d_model, num_heads, num_layers, d_ff = 128, 4, 2, 256
    vocab = 256
    max_len = 64

    key = jax.random.PRNGKey(0)
    k_par, k_tok, k_enc = jax.random.split(key, 3)

    raw = init_params(k_par, vocab, d_model, num_heads, num_layers, d_ff, max_len)
    params = prepare_params(raw, num_heads)

    tokens = jax.random.randint(k_tok, (B, S), 0, vocab, dtype=jnp.int32)
    enc_output = jax.random.normal(k_enc, (B, S, d_model), jnp.float32)

    # tgt_mask: causal lower-triangular (1=keep, 0=mask); src_mask: None (module default).
    tgt_mask = jnp.tril(jnp.ones((S, S), jnp.float32))[None].repeat(B, axis=0)
    src_mask = None

    fwd = jax.jit(functools.partial(decoder_forward, num_heads=num_heads))
    logits = fwd(params, tokens, enc_output, src_mask, tgt_mask)
    logits = jax.block_until_ready(logits)

    assert logits.shape == (B, S, vocab), logits.shape
    assert bool(jnp.all(jnp.isfinite(logits)))
    print("KERNEL_OK")
</pallas_src>

<mosaic_0001>
module attributes {stable_mosaic.version = 11 : i64} {
  func.func @_linear_res_ln_kernel(%arg0: i32, %arg1: i32, %arg2: memref<16x128xbf16, #tpu.memory_space<vmem>>, %arg3: memref<128x128xbf16, #tpu.memory_space<vmem>>, %arg4: memref<1x128xf32, #tpu.memory_space<vmem>>, %arg5: memref<16x128xbf16, #tpu.memory_space<vmem>>, %arg6: memref<1x128xf32, #tpu.memory_space<vmem>>, %arg7: memref<1x128xf32, #tpu.memory_space<vmem>>, %arg8: memref<16x128xbf16, #tpu.memory_space<vmem>>, %arg9: memref<16x128xf32, #tpu.memory_space<vmem>>) attributes {dimension_semantics = [#tpu.dimension_semantics<parallel>, #tpu.dimension_semantics<arbitrary>], iteration_bounds = array<i64: 1, 1>, scalar_prefetch = 0 : i64, scratch_operands = 1 : i64, tpu.core_type = #tpu.core_type<tc>, window_params = [{transform_indices = @transform_0, window_bounds = array<i64: 16, 128>}, {transform_indices = @transform_1, window_bounds = array<i64: 128, 128>}, {pipeline_mode = #tpu.pipeline_mode<synchronous>, transform_indices = @transform_2, window_bounds = array<i64: 1, 128>}, {transform_indices = @transform_3, window_bounds = array<i64: 16, 128>}, {pipeline_mode = #tpu.pipeline_mode<synchronous>, transform_indices = @transform_4, window_bounds = array<i64: 1, 128>}, {pipeline_mode = #tpu.pipeline_mode<synchronous>, transform_indices = @transform_5, window_bounds = array<i64: 1, 128>}, {transform_indices = @transform_6, window_bounds = array<i64: 16, 128>}]} {
    %c0_i32 = arith.constant 0 : i32
    %0 = arith.cmpi eq, %arg1, %c0_i32 : i32
    %1 = arith.extui %0 : i1 to i32
    %c0_i32_0 = arith.constant 0 : i32
    %2 = arith.cmpi ne, %1, %c0_i32_0 : i32
    scf.if %2 {
      %cst_10 = arith.constant 0.000000e+00 : f32
      %12 = vector.broadcast %cst_10 : f32 to vector<16x128xf32>
      %c0_11 = arith.constant 0 : index
      %c0_12 = arith.constant 0 : index
      %13 = vector.load %arg9[%c0_11, %c0_12] : memref<16x128xf32, #tpu.memory_space<vmem>>, vector<16x128xf32>
      tpu.vector_store %arg9[%c0_11, %c0_12], %12 {strides = array<i32>} : memref<16x128xf32, #tpu.memory_space<vmem>>, vector<16x128xf32>,
    } else {
    }
    %c0 = arith.constant 0 : index
    %c0_1 = arith.constant 0 : index
    %3 = vector.load %arg9[%c0, %c0_1] : memref<16x128xf32, #tpu.memory_space<vmem>>, vector<16x128xf32>
    %c0_2 = arith.constant 0 : index
    %c0_3 = arith.constant 0 : index
    %4 = vector.load %arg2[%c0_2, %c0_3] : memref<16x128xbf16, #tpu.memory_space<vmem>>, vector<16x128xbf16>
    %c0_4 = arith.constant 0 : index
    %c0_5 = arith.constant 0 : index
    %5 = vector.load %arg3[%c0_4, %c0_5] : memref<128x128xbf16, #tpu.memory_space<vmem>>, vector<128x128xbf16>
    %cst = arith.constant dense<0.000000e+00> : vector<16x128xf32>
    %6 = tpu.matmul %4, %5, %cst {dimension_numbers = #tpu.dot_dimension_numbers<[1], [0], [0], [1], [0, 0, 1, 1], [], []>} : vector<16x128xbf16>, vector<128x128xbf16>, vector<16x128xf32> -> vector<16x128xf32>
    %7 = arith.addf %3, %6 : vector<16x128xf32>
    %c0_6 = arith.constant 0 : index
    %c0_7 = arith.constant 0 : index
    %8 = vector.load %arg9[%c0_6, %c0_7] : memref<16x128xf32, #tpu.memory_space<vmem>>, vector<16x128xf32>
    tpu.vector_store %arg9[%c0_6, %c0_7], %7 {strides = array<i32>} : memref<16x128xf32, #tpu.memory_space<vmem>>, vector<16x128xf32>,
    %c0_i32_8 = arith.constant 0 : i32
    %9 = arith.cmpi eq, %arg1, %c0_i32_8 : i32
    %10 = arith.extui %9 : i1 to i32
    %c0_i32_9 = arith.constant 0 : i32
    %11 = arith.cmpi ne, %10, %c0_i32_9 : i32
    scf.if %11 {
      %c0_10 = arith.constant 0 : index
      %c0_11 = arith.constant 0 : index
      %12 = vector.load %arg9[%c0_10, %c0_11] : memref<16x128xf32, #tpu.memory_space<vmem>>, vector<16x128xf32>
      %c0_12 = arith.constant 0 : index
      %c0_13 = arith.constant 0 : index
      %13 = vector.load %arg4[%c0_12, %c0_13] : memref<1x128xf32, #tpu.memory_space<vmem>>, vector<1x128xf32>
      %14 = vector.broadcast %13 : vector<1x128xf32> to vector<16x128xf32>
      %15 = arith.addf %12, %14 : vector<16x128xf32>
      %c0_14 = arith.constant 0 : index
      %c0_15 = arith.constant 0 : index
      %16 = vector.load %arg5[%c0_14, %c0_15] : memref<16x128xbf16, #tpu.memory_space<vmem>>, vector<16x128xbf16>
      %17 = arith.extf %16 : vector<16x128xbf16> to vector<16x128xf32>
      %18 = arith.addf %15, %17 : vector<16x128xf32>
      %cst_16 = arith.constant dense<0.000000e+00> : vector<16xf32>
      %19 = vector.multi_reduction <add>, %18, %cst_16 [1] : vector<16x128xf32> to vector<16xf32>
      %20 = vector.shape_cast %19 : vector<16xf32> to vector<16x1xf32>
      %cst_17 = arith.constant 1.280000e+02 : f32
      %21 = vector.broadcast %cst_17 : f32 to vector<16x1xf32>
      %22 = arith.divf %20, %21 : vector<16x1xf32>
      %23 = vector.broadcast %22 : vector<16x1xf32> to vector<16x128xf32>
      %24 = arith.subf %18, %23 : vector<16x128xf32>
      %25 = arith.mulf %24, %24 : vector<16x128xf32>
      %cst_18 = arith.constant dense<0.000000e+00> : vector<16xf32>
      %26 = vector.multi_reduction <add>, %25, %cst_18 [1] : vector<16x128xf32> to vector<16xf32>
      %27 = vector.shape_cast %26 : vector<16xf32> to vector<16x1xf32>
      %cst_19 = arith.constant 1.280000e+02 : f32
      %28 = vector.broadcast %cst_19 : f32 to vector<16x1xf32>
      %29 = arith.divf %27, %28 : vector<16x1xf32>
      %30 = vector.broadcast %22 : vector<16x1xf32> to vector<16x128xf32>
      %31 = arith.subf %18, %30 : vector<16x128xf32>
      %cst_20 = arith.constant 9.99999974E-6 : f32
      %32 = vector.broadcast %cst_20 : f32 to vector<16x1xf32>
      %33 = arith.addf %29, %32 : vector<16x1xf32>
      %34 = math.rsqrt %33 : vector<16x1xf32>
      %35 = vector.broadcast %34 : vector<16x1xf32> to vector<16x128xf32>
      %36 = arith.mulf %31, %35 : vector<16x128xf32>
      %c0_21 = arith.constant 0 : index
      %c0_22 = arith.constant 0 : index
      %37 = vector.load %arg6[%c0_21, %c0_22] : memref<1x128xf32, #tpu.memory_space<vmem>>, vector<1x128xf32>
      %38 = vector.broadcast %37 : vector<1x128xf32> to vector<16x128xf32>
      %39 = arith.mulf %36, %38 : vector<16x128xf32>
      %c0_23 = arith.constant 0 : index
      %c0_24 = arith.constant 0 : index
      %40 = vector.load %arg7[%c0_23, %c0_24] : memref<1x128xf32, #tpu.memory_space<vmem>>, vector<1x128xf32>
      %41 = vector.broadcast %40 : vector<1x128xf32> to vector<16x128xf32>
      %42 = arith.addf %39, %41 : vector<16x128xf32>
      %43 = arith.truncf %42 : vector<16x128xf32> to vector<16x128xbf16>
      %c0_25 = arith.constant 0 : index
      %c0_26 = arith.constant 0 : index
      %44 = vector.load %arg8[%c0_25, %c0_26] : memref<16x128xbf16, #tpu.memory_space<vmem>>, vector<16x128xbf16>
      tpu.vector_store %arg8[%c0_25, %c0_26], %43 {strides = array<i32>} : memref<16x128xbf16, #tpu.memory_space<vmem>>, vector<16x128xbf16>,
    } else {
    }
    return
  }
  func.func @transform_0(%arg0: i32, %arg1: i32) -> (i32, i32) {
    %c0_i32 = arith.constant 0 : i32
    return %arg0, %arg1 : i32, i32
  }
  func.func @transform_1(%arg0: i32, %arg1: i32) -> (i32, i32) {
    %c0_i32 = arith.constant 0 : i32
    %c0_i32_0 = arith.constant 0 : i32
    return %arg1, %c0_i32 : i32, i32
  }
  func.func @transform_2(%arg0: i32, %arg1: i32) -> (i32, i32) {
    %c0_i32 = arith.constant 0 : i32
    %c0_i32_0 = arith.constant 0 : i32
    %c0_i32_1 = arith.constant 0 : i32
    return %c0_i32, %c0_i32_0 : i32, i32
  }
  func.func @transform_3(%arg0: i32, %arg1: i32) -> (i32, i32) {
    %c0_i32 = arith.constant 0 : i32
    %c0_i32_0 = arith.constant 0 : i32
    return %arg0, %c0_i32 : i32, i32
  }
  func.func @transform_4(%arg0: i32, %arg1: i32) -> (i32, i32) {
    %c0_i32 = arith.constant 0 : i32
    %c0_i32_0 = arith.constant 0 : i32
    %c0_i32_1 = arith.constant 0 : i32
    return %c0_i32, %c0_i32_0 : i32, i32
  }
  func.func @transform_5(%arg0: i32, %arg1: i32) -> (i32, i32) {
    %c0_i32 = arith.constant 0 : i32
    %c0_i32_0 = arith.constant 0 : i32
    %c0_i32_1 = arith.constant 0 : i32
    return %c0_i32, %c0_i32_0 : i32, i32
  }
  func.func @transform_6(%arg0: i32, %arg1: i32) -> (i32, i32) {
    %c0_i32 = arith.constant 0 : i32
    %c0_i32_0 = arith.constant 0 : i32
    return %arg0, %c0_i32 : i32, i32
  }
}

module attributes {stable_mosaic.version = 11 : i64} {
  func.func @_linear_kernel(%arg0: i32, %arg1: i32, %arg2: i32, %arg3: memref<16x128xbf16, #tpu.memory_space<vmem>>, %arg4: memref<128x384xbf16, #tpu.memory_space<vmem>>, %arg5: memref<1x384xf32, #tpu.memory_space<vmem>>, %arg6: memref<16x384xbf16, #tpu.memory_space<vmem>>, %arg7: memref<16x384xf32, #tpu.memory_space<vmem>>) attributes {dimension_semantics = [#tpu.dimension_semantics<parallel>, #tpu.dimension_semantics<parallel>, #tpu.dimension_semantics<arbitrary>], iteration_bounds = array<i64: 1, 1, 1>, scalar_prefetch = 0 : i64, scratch_operands = 1 : i64, tpu.core_type = #tpu.core_type<tc>, window_params = [{transform_indices = @transform_0, window_bounds = array<i64: 16, 128>}, {transform_indices = @transform_1, window_bounds = array<i64: 128, 384>}, {transform_indices = @transform_2, window_bounds = array<i64: 1, 384>}, {transform_indices = @transform_3, window_bounds = array<i64: 16, 384>}]} {
    %c0_i32 = arith.constant 0 : i32
    %0 = arith.cmpi eq, %arg2, %c0_i32 : i32
    %1 = arith.extui %0 : i1 to i32
    %c0_i32_0 = arith.constant 0 : i32
    %2 = arith.cmpi ne, %1, %c0_i32_0 : i32
    scf.if %2 {
      %cst_10 = arith.constant 0.000000e+00 : f32
      %12 = vector.broadcast %cst_10 : f32 to vector<16x384xf32>
      %c0_11 = arith.constant 0 : index
      %c0_12 = arith.constant 0 : index
      %13 = vector.load %arg7[%c0_11, %c0_12] : memref<16x384xf32, #tpu.memory_space<vmem>>, vector<16x384xf32>
      tpu.vector_store %arg7[%c0_11, %c0_12], %12 {strides = array<i32>} : memref<16x384xf32, #tpu.memory_space<vmem>>, vector<16x384xf32>,
    } else {
    }
    %c0 = arith.constant 0 : index
    %c0_1 = arith.constant 0 : index
    %3 = vector.load %arg7[%c0, %c0_1] : memref<16x384xf32, #tpu.memory_space<vmem>>, vector<16x384xf32>
    %c0_2 = arith.constant 0 : index
    %c0_3 = arith.constant 0 : index
    %4 = vector.load %arg3[%c0_2, %c0_3] : memref<16x128xbf16, #tpu.memory_space<vmem>>, vector<16x128xbf16>
    %c0_4 = arith.constant 0 : index
    %c0_5 = arith.constant 0 : index
    %5 = vector.load %arg4[%c0_4, %c0_5] : memref<128x384xbf16, #tpu.memory_space<vmem>>, vector<128x384xbf16>
    %cst = arith.constant dense<0.000000e+00> : vector<16x384xf32>
    %6 = tpu.matmul %4, %5, %cst {dimension_numbers = #tpu.dot_dimension_numbers<[1], [0], [0], [1], [0, 0, 1, 1], [], []>} : vector<16x128xbf16>, vector<128x384xbf16>, vector<16x384xf32> -> vector<16x384xf32>
    %7 = arith.addf %3, %6 : vector<16x384xf32>
    %c0_6 = arith.constant 0 : index
    %c0_7 = arith.constant 0 : index
    %8 = vector.load %arg7[%c0_6, %c0_7] : memref<16x384xf32, #tpu.memory_space<vmem>>, vector<16x384xf32>
    tpu.vector_store %arg7[%c0_6, %c0_7], %7 {strides = array<i32>} : memref<16x384xf32, #tpu.memory_space<vmem>>, vector<16x384xf32>,
    %c0_i32_8 = arith.constant 0 : i32
    %9 = arith.cmpi eq, %arg2, %c0_i32_8 : i32
    %10 = arith.extui %9 : i1 to i32
    %c0_i32_9 = arith.constant 0 : i32
    %11 = arith.cmpi ne, %10, %c0_i32_9 : i32
    scf.if %11 {
      %c0_10 = arith.constant 0 : index
      %c0_11 = arith.constant 0 : index
      %12 = vector.load %arg7[%c0_10, %c0_11] : memref<16x384xf32, #tpu.memory_space<vmem>>, vector<16x384xf32>
      %c0_12 = arith.constant 0 : index
      %c0_13 = arith.constant 0 : index
      %13 = vector.load %arg5[%c0_12, %c0_13] : memref<1x384xf32, #tpu.memory_space<vmem>>, vector<1x384xf32>
      %14 = vector.broadcast %13 : vector<1x384xf32> to vector<16x384xf32>
      %15 = arith.addf %12, %14 : vector<16x384xf32>
      %16 = arith.truncf %15 : vector<16x384xf32> to vector<16x384xbf16>
      %c0_14 = arith.constant 0 : index
      %c0_15 = arith.constant 0 : index
      %17 = vector.load %arg6[%c0_14, %c0_15] : memref<16x384xbf16, #tpu.memory_space<vmem>>, vector<16x384xbf16>
      tpu.vector_store %arg6[%c0_14, %c0_15], %16 {strides = array<i32>} : memref<16x384xbf16, #tpu.memory_space<vmem>>, vector<16x384xbf16>,
    } else {
    }
    return
  }
  func.func @transform_0(%arg0: i32, %arg1: i32, %arg2: i32) -> (i32, i32) {
    %c0_i32 = arith.constant 0 : i32
    return %arg0, %arg2 : i32, i32
  }
  func.func @transform_1(%arg0: i32, %arg1: i32, %arg2: i32) -> (i32, i32) {
    %c0_i32 = arith.constant 0 : i32
    return %arg2, %arg1 : i32, i32
  }
  func.func @transform_2(%arg0: i32, %arg1: i32, %arg2: i32) -> (i32, i32) {
    %c0_i32 = arith.constant 0 : i32
    %c0_i32_0 = arith.constant 0 : i32
    return %c0_i32, %arg1 : i32, i32
  }
  func.func @transform_3(%arg0: i32, %arg1: i32, %arg2: i32) -> (i32, i32) {
    %c0_i32 = arith.constant 0 : i32
    return %arg0, %arg1 : i32, i32
  }
}

module attributes {stable_mosaic.version = 11 : i64} {
  func.func @_linear_kernel(%arg0: i32, %arg1: i32, %arg2: i32, %arg3: memref<16x128xbf16, #tpu.memory_space<vmem>>, %arg4: memref<128x128xbf16, #tpu.memory_space<vmem>>, %arg5: memref<1x128xf32, #tpu.memory_space<vmem>>, %arg6: memref<16x128xbf16, #tpu.memory_space<vmem>>, %arg7: memref<16x128xf32, #tpu.memory_space<vmem>>) attributes {dimension_semantics = [#tpu.dimension_semantics<parallel>, #tpu.dimension_semantics<parallel>, #tpu.dimension_semantics<arbitrary>], iteration_bounds = array<i64: 1, 1, 1>, scalar_prefetch = 0 : i64, scratch_operands = 1 : i64, tpu.core_type = #tpu.core_type<tc>, window_params = [{transform_indices = @transform_0, window_bounds = array<i64: 16, 128>}, {transform_indices = @transform_1, window_bounds = array<i64: 128, 128>}, {transform_indices = @transform_2, window_bounds = array<i64: 1, 128>}, {transform_indices = @transform_3, window_bounds = array<i64: 16, 128>}]} {
    %c0_i32 = arith.constant 0 : i32
    %0 = arith.cmpi eq, %arg2, %c0_i32 : i32
    %1 = arith.extui %0 : i1 to i32
    %c0_i32_0 = arith.constant 0 : i32
    %2 = arith.cmpi ne, %1, %c0_i32_0 : i32
    scf.if %2 {
      %cst_10 = arith.constant 0.000000e+00 : f32
      %12 = vector.broadcast %cst_10 : f32 to vector<16x128xf32>
      %c0_11 = arith.constant 0 : index
      %c0_12 = arith.constant 0 : index
      %13 = vector.load %arg7[%c0_11, %c0_12] : memref<16x128xf32, #tpu.memory_space<vmem>>, vector<16x128xf32>
      tpu.vector_store %arg7[%c0_11, %c0_12], %12 {strides = array<i32>} : memref<16x128xf32, #tpu.memory_space<vmem>>, vector<16x128xf32>,
    } else {
    }
    %c0 = arith.constant 0 : index
    %c0_1 = arith.constant 0 : index
    %3 = vector.load %arg7[%c0, %c0_1] : memref<16x128xf32, #tpu.memory_space<vmem>>, vector<16x128xf32>
    %c0_2 = arith.constant 0 : index
    %c0_3 = arith.constant 0 : index
    %4 = vector.load %arg3[%c0_2, %c0_3] : memref<16x128xbf16, #tpu.memory_space<vmem>>, vector<16x128xbf16>
    %c0_4 = arith.constant 0 : index
    %c0_5 = arith.constant 0 : index
    %5 = vector.load %arg4[%c0_4, %c0_5] : memref<128x128xbf16, #tpu.memory_space<vmem>>, vector<128x128xbf16>
    %cst = arith.constant dense<0.000000e+00> : vector<16x128xf32>
    %6 = tpu.matmul %4, %5, %cst {dimension_numbers = #tpu.dot_dimension_numbers<[1], [0], [0], [1], [0, 0, 1, 1], [], []>} : vector<16x128xbf16>, vector<128x128xbf16>, vector<16x128xf32> -> vector<16x128xf32>
    %7 = arith.addf %3, %6 : vector<16x128xf32>
    %c0_6 = arith.constant 0 : index
    %c0_7 = arith.constant 0 : index
    %8 = vector.load %arg7[%c0_6, %c0_7] : memref<16x128xf32, #tpu.memory_space<vmem>>, vector<16x128xf32>
    tpu.vector_store %arg7[%c0_6, %c0_7], %7 {strides = array<i32>} : memref<16x128xf32, #tpu.memory_space<vmem>>, vector<16x128xf32>,
    %c0_i32_8 = arith.constant 0 : i32
    %9 = arith.cmpi eq, %arg2, %c0_i32_8 : i32
    %10 = arith.extui %9 : i1 to i32
    %c0_i32_9 = arith.constant 0 : i32
    %11 = arith.cmpi ne, %10, %c0_i32_9 : i32
    scf.if %11 {
      %c0_10 = arith.constant 0 : index
      %c0_11 = arith.constant 0 : index
      %12 = vector.load %arg7[%c0_10, %c0_11] : memref<16x128xf32, #tpu.memory_space<vmem>>, vector<16x128xf32>
      %c0_12 = arith.constant 0 : index
      %c0_13 = arith.constant 0 : index
      %13 = vector.load %arg5[%c0_12, %c0_13] : memref<1x128xf32, #tpu.memory_space<vmem>>, vector<1x128xf32>
      %14 = vector.broadcast %13 : vector<1x128xf32> to vector<16x128xf32>
      %15 = arith.addf %12, %14 : vector<16x128xf32>
      %16 = arith.truncf %15 : vector<16x128xf32> to vector<16x128xbf16>
      %c0_14 = arith.constant 0 : index
      %c0_15 = arith.constant 0 : index
      %17 = vector.load %arg6[%c0_14, %c0_15] : memref<16x128xbf16, #tpu.memory_space<vmem>>, vector<16x128xbf16>
      tpu.vector_store %arg6[%c0_14, %c0_15], %16 {strides = array<i32>} : memref<16x128xbf16, #tpu.memory_space<vmem>>, vector<16x128xbf16>,
    } else {
    }
    return
  }
  func.func @transform_0(%arg0: i32, %arg1: i32, %arg2: i32) -> (i32, i32) {
    %c0_i32 = arith.constant 0 : i32
    return %arg0, %arg2 : i32, i32
  }
  func.func @transform_1(%arg0: i32, %arg1: i32, %arg2: i32) -> (i32, i32) {
    %c0_i32 = arith.constant 0 : i32
    return %arg2, %arg1 : i32, i32
  }
  func.func @transform_2(%arg0: i32, %arg1: i32, %arg2: i32) -> (i32, i32) {
    %c0_i32 = arith.constant 0 : i32
    %c0_i32_0 = arith.constant 0 : i32
    return %c0_i32, %arg1 : i32, i32
  }
  func.func @transform_3(%arg0: i32, %arg1: i32, %arg2: i32) -> (i32, i32) {
    %c0_i32 = arith.constant 0 : i32
    return %arg0, %arg1 : i32, i32
  }
}

module attributes {stable_mosaic.version = 11 : i64} {
  func.func @_attn_kernel(%arg0: i32, %arg1: i32, %arg2: i32, %arg3: memref<1x8x128xbf16, #tpu.memory_space<vmem>>, %arg4: memref<1x8x128xbf16, #tpu.memory_space<vmem>>, %arg5: memref<1x8x128xbf16, #tpu.memory_space<vmem>>, %arg6: memref<1x8x8xi8, #tpu.memory_space<vmem>>, %arg7: memref<1x8x128xbf16, #tpu.memory_space<vmem>>, %arg8: memref<8x4xf32, #tpu.memory_space<vmem>>, %arg9: memref<8x4xf32, #tpu.memory_space<vmem>>, %arg10: memref<8x128xf32, #tpu.memory_space<vmem>>) attributes {dimension_semantics = [#tpu.dimension_semantics<parallel>, #tpu.dimension_semantics<parallel>, #tpu.dimension_semantics<arbitrary>], iteration_bounds = array<i64: 2, 1, 1>, scalar_prefetch = 0 : i64, scratch_operands = 3 : i64, tpu.core_type = #tpu.core_type<tc>, window_params = [{transform_indices = @transform_0, window_bounds = array<i64: 1, 8, 128>}, {transform_indices = @transform_1, window_bounds = array<i64: 1, 8, 128>}, {transform_indices = @transform_2, window_bounds = array<i64: 1, 8, 128>}, {transform_indices = @transform_3, window_bounds = array<i64: 1, 8, 8>}, {transform_indices = @transform_4, window_bounds = array<i64: 1, 8, 128>}]} {
    %c0_i32 = arith.constant 0 : i32
    %0 = arith.cmpi eq, %arg2, %c0_i32 : i32
    %1 = arith.extui %0 : i1 to i32
    %c0_i32_0 = arith.constant 0 : i32
    %2 = arith.cmpi ne, %1, %c0_i32_0 : i32
    scf.if %2 {
      %cst_75 = arith.constant -1.000000e+30 : f32
      %132 = vector.broadcast %cst_75 : f32 to vector<8x4xf32>
      %c0_76 = arith.constant 0 : index
      %c0_77 = arith.constant 0 : index
      %133 = vector.load %arg8[%c0_76, %c0_77] : memref<8x4xf32, #tpu.memory_space<vmem>>, vector<8x4xf32>
      tpu.vector_store %arg8[%c0_76, %c0_77], %132 {strides = array<i32>} : memref<8x4xf32, #tpu.memory_space<vmem>>, vector<8x4xf32>,
      %cst_78 = arith.constant 0.000000e+00 : f32
      %134 = vector.broadcast %cst_78 : f32 to vector<8x4xf32>
      %c0_79 = arith.constant 0 : index
      %c0_80 = arith.constant 0 : index
      %135 = vector.load %arg9[%c0_79, %c0_80] : memref<8x4xf32, #tpu.memory_space<vmem>>, vector<8x4xf32>
      tpu.vector_store %arg9[%c0_79, %c0_80], %134 {strides = array<i32>} : memref<8x4xf32, #tpu.memory_space<vmem>>, vector<8x4xf32>,
      %cst_81 = arith.constant 0.000000e+00 : f32
      %136 = vector.broadcast %cst_81 : f32 to vector<8x128xf32>
      %c0_82 = arith.constant 0 : index
      %c0_83 = arith.constant 0 : index
      %137 = vector.load %arg10[%c0_82, %c0_83] : memref<8x128xf32, #tpu.memory_space<vmem>>, vector<8x128xf32>
      tpu.vector_store %arg10[%c0_82, %c0_83], %136 {strides = array<i32>} : memref<8x128xf32, #tpu.memory_space<vmem>>, vector<8x128xf32>,
    } else {
    }
    %c0 = arith.constant 0 : index
    %c0_1 = arith.constant 0 : index
    %c0_2 = arith.constant 0 : index
    %3 = vector.load %arg3[%c0, %c0_1, %c0_2] : memref<1x8x128xbf16, #tpu.memory_space<vmem>>, vector<1x8x128xbf16>
    %4 = vector.shape_cast %3 : vector<1x8x128xbf16> to vector<8x128xbf16>
    %c0_3 = arith.constant 0 : index
    %c0_4 = arith.constant 0 : index
    %c0_5 = arith.constant 0 : index
    %5 = vector.load %arg4[%c0_3, %c0_4, %c0_5] : memref<1x8x128xbf16, #tpu.memory_space<vmem>>, vector<1x8x128xbf16>
    %6 = vector.shape_cast %5 : vector<1x8x128xbf16> to vector<8x128xbf16>
    %c0_6 = arith.constant 0 : index
    %c0_7 = arith.constant 0 : index
    %c0_8 = arith.constant 0 : index
    %7 = vector.load %arg5[%c0_6, %c0_7, %c0_8] : memref<1x8x128xbf16, #tpu.memory_space<vmem>>, vector<1x8x128xbf16>
    %8 = vector.shape_cast %7 : vector<1x8x128xbf16> to vector<8x128xbf16>
    %c0_9 = arith.constant 0 : index
    %c0_10 = arith.constant 0 : index
    %c0_11 = arith.constant 0 : index
    %9 = vector.load %arg6[%c0_9, %c0_10, %c0_11] : memref<1x8x8xi8, #tpu.memory_space<vmem>>, vector<1x8x8xi8>
    %10 = vector.shape_cast %9 : vector<1x8x8xi8> to vector<8x8xi8>
    %c0_i8 = arith.constant 0 : i8
    %11 = vector.broadcast %c0_i8 : i8 to vector<8x8xi8>
    %12 = arith.cmpi ne, %10, %11 : vector<8x8xi8>
    %13 = vector.extract_strided_slice %4 {offsets = [0, 0], sizes = [8, 32], strides = [1, 1]} : vector<8x128xbf16> to vector<8x32xbf16>
    %14 = vector.extract_strided_slice %6 {offsets = [0, 0], sizes = [8, 32], strides = [1, 1]} : vector<8x128xbf16> to vector<8x32xbf16>
    %15 = vector.extract_strided_slice %8 {offsets = [0, 0], sizes = [8, 32], strides = [1, 1]} : vector<8x128xbf16> to vector<8x32xbf16>
    %cst = arith.constant dense<0.000000e+00> : vector<8x8xf32>
    %16 = tpu.matmul %13, %14, %cst {dimension_numbers = #tpu.dot_dimension_numbers<[1], [1], [0], [0], [0, 0, 1, 0], [], []>} : vector<8x32xbf16>, vector<8x32xbf16>, vector<8x8xf32> -> vector<8x8xf32>
    %c0_12 = arith.constant 0 : index
    %c0_13 = arith.constant 0 : index
    %17 = vector.load %arg8[%c0_12, %c0_13] : memref<8x4xf32, #tpu.memory_space<vmem>>, vector<8x1xf32>
    %cst_14 = arith.constant dense<0xFF800000> : vector<8xf32>
    %18 = vector.multi_reduction <maximumf>, %16, %cst_14 [1] : vector<8x8xf32> to vector<8xf32>
    %19 = vector.shape_cast %18 : vector<8xf32> to vector<8x1xf32>
    %20 = arith.maximumf %17, %19 : vector<8x1xf32>
    %21 = vector.broadcast %20 : vector<8x1xf32> to vector<8x8xf32>
    %22 = arith.subf %16, %21 : vector<8x8xf32>
    %23 = math.exp %22 : vector<8x8xf32>
    %cst_15 = arith.constant 0.000000e+00 : f32
    %24 = vector.broadcast %cst_15 : f32 to vector<8x8xf32>
    %25 = arith.select %12, %23, %24 : vector<8x8xi1>, vector<8x8xf32>
    %26 = arith.subf %17, %20 : vector<8x1xf32>
    %27 = math.exp %26 : vector<8x1xf32>
    %c0_16 = arith.constant 0 : index
    %c0_17 = arith.constant 0 : index
    %28 = vector.load %arg9[%c0_16, %c0_17] : memref<8x4xf32, #tpu.memory_space<vmem>>, vector<8x1xf32>
    %29 = arith.mulf %27, %28 : vector<8x1xf32>
    %cst_18 = arith.constant dense<0.000000e+00> : vector<8xf32>
    %30 = vector.multi_reduction <add>, %25, %cst_18 [1] : vector<8x8xf32> to vector<8xf32>
    %31 = vector.shape_cast %30 : vector<8xf32> to vector<8x1xf32>
    %32 = arith.addf %29, %31 : vector<8x1xf32>
    %c0_19 = arith.constant 0 : index
    %c0_20 = arith.constant 0 : index
    %33 = vector.load %arg9[%c0_19, %c0_20] : memref<8x4xf32, #tpu.memory_space<vmem>>, vector<8x1xf32>
    tpu.vector_store %arg9[%c0_19, %c0_20], %32 {strides = array<i32>} : memref<8x4xf32, #tpu.memory_space<vmem>>, vector<8x1xf32>,
    %c0_21 = arith.constant 0 : index
    %c0_22 = arith.constant 0 : index
    %34 = vector.load %arg10[%c0_21, %c0_22] : memref<8x128xf32, #tpu.memory_space<vmem>>, vector<8x32xf32>
    %35 = vector.broadcast %27 : vector<8x1xf32> to vector<8x32xf32>
    %36 = arith.mulf %35, %34 : vector<8x32xf32>
    %37 = arith.truncf %25 : vector<8x8xf32> to vector<8x8xbf16>
    %cst_23 = arith.constant dense<0.000000e+00> : vector<8x32xf32>
    %38 = tpu.matmul %37, %15, %cst_23 {dimension_numbers = #tpu.dot_dimension_numbers<[1], [0], [0], [1], [0, 0, 1, 1], [], []>} : vector<8x8xbf16>, vector<8x32xbf16>, vector<8x32xf32> -> vector<8x32xf32>
    %39 = arith.addf %36, %38 : vector<8x32xf32>
    %c0_24 = arith.constant 0 : index
    %c0_25 = arith.constant 0 : index
    %40 = vector.load %arg10[%c0_24, %c0_25] : memref<8x128xf32, #tpu.memory_space<vmem>>, vector<8x32xf32>
    tpu.vector_store %arg10[%c0_24, %c0_25], %39 {strides = array<i32>} : memref<8x128xf32, #tpu.memory_space<vmem>>, vector<8x32xf32>,
    %c0_26 = arith.constant 0 : index
    %c0_27 = arith.constant 0 : index
    %41 = vector.load %arg8[%c0_26, %c0_27] : memref<8x4xf32, #tpu.memory_space<vmem>>, vector<8x1xf32>
    tpu.vector_store %arg8[%c0_26, %c0_27], %20 {strides = array<i32>} : memref<8x4xf32, #tpu.memory_space<vmem>>, vector<8x1xf32>,
    %42 = vector.extract_strided_slice %4 {offsets = [0, 32], sizes = [8, 32], strides = [1, 1]} : vector<8x128xbf16> to vector<8x32xbf16>
    %43 = vector.extract_strided_slice %6 {offsets = [0, 32], sizes = [8, 32], strides = [1, 1]} : vector<8x128xbf16> to vector<8x32xbf16>
    %44 = vector.extract_strided_slice %8 {offsets = [0, 32], sizes = [8, 32], strides = [1, 1]} : vector<8x128xbf16> to vector<8x32xbf16>
    %cst_28 = arith.constant dense<0.000000e+00> : vector<8x8xf32>
    %45 = tpu.matmul %42, %43, %cst_28 {dimension_numbers = #tpu.dot_dimension_numbers<[1], [1], [0], [0], [0, 0, 1, 0], [], []>} : vector<8x32xbf16>, vector<8x32xbf16>, vector<8x8xf32> -> vector<8x8xf32>
    %c0_29 = arith.constant 0 : index
    %c1 = arith.constant 1 : index
    %46 = vector.load %arg8[%c0_29, %c1] : memref<8x4xf32, #tpu.memory_space<vmem>>, vector<8x1xf32>
    %cst_30 = arith.constant dense<0xFF800000> : vector<8xf32>
    %47 = vector.multi_reduction <maximumf>, %45, %cst_30 [1] : vector<8x8xf32> to vector<8xf32>
    %48 = vector.shape_cast %47 : vector<8xf32> to vector<8x1xf32>
    %49 = arith.maximumf %46, %48 : vector<8x1xf32>
    %50 = vector.broadcast %49 : vector<8x1xf32> to vector<8x8xf32>
    %51 = arith.subf %45, %50 : vector<8x8xf32>
    %52 = math.exp %51 : vector<8x8xf32>
    %cst_31 = arith.constant 0.000000e+00 : f32
    %53 = vector.broadcast %cst_31 : f32 to vector<8x8xf32>
    %54 = arith.select %12, %52, %53 : vector<8x8xi1>, vector<8x8xf32>
    %55 = arith.subf %46, %49 : vector<8x1xf32>
    %56 = math.exp %55 : vector<8x1xf32>
    %c0_32 = arith.constant 0 : index
    %c1_33 = arith.constant 1 : index
    %57 = vector.load %arg9[%c0_32, %c1_33] : memref<8x4xf32, #tpu.memory_space<vmem>>, vector<8x1xf32>
    %58 = arith.mulf %56, %57 : vector<8x1xf32>
    %cst_34 = arith.constant dense<0.000000e+00> : vector<8xf32>
    %59 = vector.multi_reduction <add>, %54, %cst_34 [1] : vector<8x8xf32> to vector<8xf32>
    %60 = vector.shape_cast %59 : vector<8xf32> to vector<8x1xf32>
    %61 = arith.addf %58, %60 : vector<8x1xf32>
    %c0_35 = arith.constant 0 : index
    %c1_36 = arith.constant 1 : index
    %62 = vector.load %arg9[%c0_35, %c1_36] : memref<8x4xf32, #tpu.memory_space<vmem>>, vector<8x1xf32>
    tpu.vector_store %arg9[%c0_35, %c1_36], %61 {strides = array<i32>} : memref<8x4xf32, #tpu.memory_space<vmem>>, vector<8x1xf32>,
    %c0_37 = arith.constant 0 : index
    %c32 = arith.constant 32 : index
    %63 = vector.load %arg10[%c0_37, %c32] : memref<8x128xf32, #tpu.memory_space<vmem>>, vector<8x32xf32>
    %64 = vector.broadcast %56 : vector<8x1xf32> to vector<8x32xf32>
    %65 = arith.mulf %64, %63 : vector<8x32xf32>
    %66 = arith.truncf %54 : vector<8x8xf32> to vector<8x8xbf16>
    %cst_38 = arith.constant dense<0.000000e+00> : vector<8x32xf32>
    %67 = tpu.matmul %66, %44, %cst_38 {dimension_numbers = #tpu.dot_dimension_numbers<[1], [0], [0], [1], [0, 0, 1, 1], [], []>} : vector<8x8xbf16>, vector<8x32xbf16>, vector<8x32xf32> -> vector<8x32xf32>
    %68 = arith.addf %65, %67 : vector<8x32xf32>
    %c0_39 = arith.constant 0 : index
    %c32_40 = arith.constant 32 : index
    %69 = vector.load %arg10[%c0_39, %c32_40] : memref<8x128xf32, #tpu.memory_space<vmem>>, vector<8x32xf32>
    tpu.vector_store %arg10[%c0_39, %c32_40], %68 {strides = array<i32>} : memref<8x128xf32, #tpu.memory_space<vmem>>, vector<8x32xf32>,
    %c0_41 = arith.constant 0 : index
    %c1_42 = arith.constant 1 : index
    %70 = vector.load %arg8[%c0_41, %c1_42] : memref<8x4xf32, #tpu.memory_space<vmem>>, vector<8x1xf32>
    tpu.vector_store %arg8[%c0_41, %c1_42], %49 {strides = array<i32>} : memref<8x4xf32, #tpu.memory_space<vmem>>, vector<8x1xf32>,
    %71 = vector.extract_strided_slice %4 {offsets = [0, 64], sizes = [8, 32], strides = [1, 1]} : vector<8x128xbf16> to vector<8x32xbf16>
    %72 = vector.extract_strided_slice %6 {offsets = [0, 64], sizes = [8, 32], strides = [1, 1]} : vector<8x128xbf16> to vector<8x32xbf16>
    %73 = vector.extract_strided_slice %8 {offsets = [0, 64], sizes = [8, 32], strides = [1, 1]} : vector<8x128xbf16> to vector<8x32xbf16>
    %cst_43 = arith.constant dense<0.000000e+00> : vector<8x8xf32>
    %74 = tpu.matmul %71, %72, %cst_43 {dimension_numbers = #tpu.dot_dimension_numbers<[1], [1], [0], [0], [0, 0, 1, 0], [], []>} : vector<8x32xbf16>, vector<8x32xbf16>, vector<8x8xf32> -> vector<8x8xf32>
    %c0_44 = arith.constant 0 : index
    %c2 = arith.constant 2 : index
    %75 = vector.load %arg8[%c0_44, %c2] : memref<8x4xf32, #tpu.memory_space<vmem>>, vector<8x1xf32>
    %cst_45 = arith.constant dense<0xFF800000> : vector<8xf32>
    %76 = vector.multi_reduction <maximumf>, %74, %cst_45 [1] : vector<8x8xf32> to vector<8xf32>
    %77 = vector.shape_cast %76 : vector<8xf32> to vector<8x1xf32>
    %78 = arith.maximumf %75, %77 : vector<8x1xf32>
    %79 = vector.broadcast %78 : vector<8x1xf32> to vector<8x8xf32>
    %80 = arith.subf %74, %79 : vector<8x8xf32>
    %81 = math.exp %80 : vector<8x8xf32>
    %cst_46 = arith.constant 0.000000e+00 : f32
    %82 = vector.broadcast %cst_46 : f32 to vector<8x8xf32>
    %83 = arith.select %12, %81, %82 : vector<8x8xi1>, vector<8x8xf32>
    %84 = arith.subf %75, %78 : vector<8x1xf32>
    %85 = math.exp %84 : vector<8x1xf32>
    %c0_47 = arith.constant 0 : index
    %c2_48 = arith.constant 2 : index
    %86 = vector.load %arg9[%c0_47, %c2_48] : memref<8x4xf32, #tpu.memory_space<vmem>>, vector<8x1xf32>
    %87 = arith.mulf %85, %86 : vector<8x1xf32>
    %cst_49 = arith.constant dense<0.000000e+00> : vector<8xf32>
    %88 = vector.multi_reduction <add>, %83, %cst_49 [1] : vector<8x8xf32> to vector<8xf32>
    %89 = vector.shape_cast %88 : vector<8xf32> to vector<8x1xf32>
    %90 = arith.addf %87, %89 : vector<8x1xf32>
    %c0_50 = arith.constant 0 : index
    %c2_51 = arith.constant 2 : index
    %91 = vector.load %arg9[%c0_50, %c2_51] : memref<8x4xf32, #tpu.memory_space<vmem>>, vector<8x1xf32>
    tpu.vector_store %arg9[%c0_50, %c2_51], %90 {strides = array<i32>} : memref<8x4xf32, #tpu.memory_space<vmem>>, vector<8x1xf32>,
    %c0_52 = arith.constant 0 : index
    %c64 = arith.constant 64 : index
    %92 = vector.load %arg10[%c0_52, %c64] : memref<8x128xf32, #tpu.memory_space<vmem>>, vector<8x32xf32>
    %93 = vector.broadcast %85 : vector<8x1xf32> to vector<8x32xf32>
    %94 = arith.mulf %93, %92 : vector<8x32xf32>
    %95 = arith.truncf %83 : vector<8x8xf32> to vector<8x8xbf16>
    %cst_53 = arith.constant dense<0.000000e+00> : vector<8x32xf32>
    %96 = tpu.matmul %95, %73, %cst_53 {dimension_numbers = #tpu.dot_dimension_numbers<[1], [0], [0], [1], [0, 0, 1, 1], [], []>} : vector<8x8xbf16>, vector<8x32xbf16>, vector<8x32xf32> -> vector<8x32xf32>
    %97 = arith.addf %94, %96 : vector<8x32xf32>
    %c0_54 = arith.constant 0 : index
    %c64_55 = arith.constant 64 : index
    %98 = vector.load %arg10[%c0_54, %c64_55] : memref<8x128xf32, #tpu.memory_space<vmem>>, vector<8x32xf32>
    tpu.vector_store %arg10[%c0_54, %c64_55], %97 {strides = array<i32>} : memref<8x128xf32, #tpu.memory_space<vmem>>, vector<8x32xf32>,
    %c0_56 = arith.constant 0 : index
    %c2_57 = arith.constant 2 : index
    %99 = vector.load %arg8[%c0_56, %c2_57] : memref<8x4xf32, #tpu.memory_space<vmem>>, vector<8x1xf32>
    tpu.vector_store %arg8[%c0_56, %c2_57], %78 {strides = array<i32>} : memref<8x4xf32, #tpu.memory_space<vmem>>, vector<8x1xf32>,
    %100 = vector.extract_strided_slice %4 {offsets = [0, 96], sizes = [8, 32], strides = [1, 1]} : vector<8x128xbf16> to vector<8x32xbf16>
    %101 = vector.extract_strided_slice %6 {offsets = [0, 96], sizes = [8, 32], strides = [1, 1]} : vector<8x128xbf16> to vector<8x32xbf16>
    %102 = vector.extract_strided_slice %8 {offsets = [0, 96], sizes = [8, 32], strides = [1, 1]} : vector<8x128xbf16> to vector<8x32xbf16>
    %cst_58 = arith.constant dense<0.000000e+00> : vector<8x8xf32>
    %103 = tpu.matmul %100, %101, %cst_58 {dimension_numbers = #tpu.dot_dimension_numbers<[1], [1], [0], [0], [0, 0, 1, 0], [], []>} : vector<8x32xbf16>, vector<8x32xbf16>, vector<8x8xf32> -> vector<8x8xf32>
    %c0_59 = arith.constant 0 : index
    %c3 = arith.constant 3 : index
    %104 = vector.load %arg8[%c0_59, %c3] : memref<8x4xf32, #tpu.memory_space<vmem>>, vector<8x1xf32>
    %cst_60 = arith.constant dense<0xFF800000> : vector<8xf32>
    %105 = vector.multi_reduction <maximumf>, %103, %cst_60 [1] : vector<8x8xf32> to vector<8xf32>
    %106 = vector.shape_cast %105 : vector<8xf32> to vector<8x1xf32>
    %107 = arith.maximumf %104, %106 : vector<8x1xf32>
    %108 = vector.broadcast %107 : vector<8x1xf32> to vector<8x8xf32>
    %109 = arith.subf %103, %108 : vector<8x8xf32>
    %110 = math.exp %109 : vector<8x8xf32>
    %cst_61 = arith.constant 0.000000e+00 : f32
    %111 = vector.broadcast %cst_61 : f32 to vector<8x8xf32>
    %112 = arith.select %12, %110, %111 : vector<8x8xi1>, vector<8x8xf32>
    %113 = arith.subf %104, %107 : vector<8x1xf32>
    %114 = math.exp %113 : vector<8x1xf32>
    %c0_62 = arith.constant 0 : index
    %c3_63 = arith.constant 3 : index
    %115 = vector.load %arg9[%c0_62, %c3_63] : memref<8x4xf32, #tpu.memory_space<vmem>>, vector<8x1xf32>
    %116 = arith.mulf %114, %115 : vector<8x1xf32>
    %cst_64 = arith.constant dense<0.000000e+00> : vector<8xf32>
    %117 = vector.multi_reduction <add>, %112, %cst_64 [1] : vector<8x8xf32> to vector<8xf32>
    %118 = vector.shape_cast %117 : vector<8xf32> to vector<8x1xf32>
    %119 = arith.addf %116, %118 : vector<8x1xf32>
    %c0_65 = arith.constant 0 : index
    %c3_66 = arith.constant 3 : index
    %120 = vector.load %arg9[%c0_65, %c3_66] : memref<8x4xf32, #tpu.memory_space<vmem>>, vector<8x1xf32>
    tpu.vector_store %arg9[%c0_65, %c3_66], %119 {strides = array<i32>} : memref<8x4xf32, #tpu.memory_space<vmem>>, vector<8x1xf32>,
    %c0_67 = arith.constant 0 : index
    %c96 = arith.constant 96 : index
    %121 = vector.load %arg10[%c0_67, %c96] : memref<8x128xf32, #tpu.memory_space<vmem>>, vector<8x32xf32>
    %122 = vector.broadcast %114 : vector<8x1xf32> to vector<8x32xf32>
    %123 = arith.mulf %122, %121 : vector<8x32xf32>
    %124 = arith.truncf %112 : vector<8x8xf32> to vector<8x8xbf16>
    %cst_68 = arith.constant dense<0.000000e+00> : vector<8x32xf32>
    %125 = tpu.matmul %124, %102, %cst_68 {dimension_numbers = #tpu.dot_dimension_numbers<[1], [0], [0], [1], [0, 0, 1, 1], [], []>} : vector<8x8xbf16>, vector<8x32xbf16>, vector<8x32xf32> -> vector<8x32xf32>
    %126 = arith.addf %123, %125 : vector<8x32xf32>
    %c0_69 = arith.constant 0 : index
    %c96_70 = arith.constant 96 : index
    %127 = vector.load %arg10[%c0_69, %c96_70] : memref<8x128xf32, #tpu.memory_space<vmem>>, vector<8x32xf32>
    tpu.vector_store %arg10[%c0_69, %c96_70], %126 {strides = array<i32>} : memref<8x128xf32, #tpu.memory_space<vmem>>, vector<8x32xf32>,
    %c0_71 = arith.constant 0 : index
    %c3_72 = arith.constant 3 : index
    %128 = vector.load %arg8[%c0_71, %c3_72] : memref<8x4xf32, #tpu.memory_space<vmem>>, vector<8x1xf32>
    tpu.vector_store %arg8[%c0_71, %c3_72], %107 {strides = array<i32>} : memref<8x4xf32, #tpu.memory_space<vmem>>, vector<8x1xf32>,
    %c0_i32_73 = arith.constant 0 : i32
    %129 = arith.cmpi eq, %arg2, %c0_i32_73 : i32
    %130 = arith.extui %129 : i1 to i32
    %c0_i32_74 = arith.constant 0 : i32
    %131 = arith.cmpi ne, %130, %c0_i32_74 : i32
    scf.if %131 {
      %c0_75 = arith.constant 0 : index
      %c0_76 = arith.constant 0 : index
      %132 = vector.load %arg9[%c0_75, %c0_76] : memref<8x4xf32, #tpu.memory_space<vmem>>, vector<8x4xf32>
      %cst_77 = arith.constant 1.000000e-30 : f32
      %133 = vector.broadcast %cst_77 : f32 to vector<8x4xf32>
      %134 = arith.maximumf %132, %133 : vector<8x4xf32>
      %135 = tpu.reciprocal %134 {approx = true} : vector<8x4xf32> -> vector<8x4xf32>
      %c0_78 = arith.constant 0 : index
      %c0_79 = arith.constant 0 : index
      %136 = vector.load %arg10[%c0_78, %c0_79] : memref<8x128xf32, #tpu.memory_space<vmem>>, vector<8x32xf32>
      %137 = vector.extract_strided_slice %135 {offsets = [0, 0], sizes = [8, 1], strides = [1, 1]} : vector<8x4xf32> to vector<8x1xf32>
      %138 = vector.broadcast %137 : vector<8x1xf32> to vector<8x32xf32>
      %139 = arith.mulf %136, %138 : vector<8x32xf32>
      %140 = arith.truncf %139 : vector<8x32xf32> to vector<8x32xbf16>
      %c0_80 = arith.constant 0 : index
      %c0_81 = arith.constant 0 : index
      %c0_82 = arith.constant 0 : index
      %141 = vector.load %arg7[%c0_80, %c0_81, %c0_82] : memref<1x8x128xbf16, #tpu.memory_space<vmem>>, vector<1x8x32xbf16>
      %142 = vector.shape_cast %141 : vector<1x8x32xbf16> to vector<8x32xbf16>
      %143 = vector.shape_cast %140 : vector<8x32xbf16> to vector<1x8x32xbf16>
      tpu.vector_store %arg7[%c0_80, %c0_81, %c0_82], %143 {strides = array<i32>} : memref<1x8x128xbf16, #tpu.memory_space<vmem>>, vector<1x8x32xbf16>,
      %c0_83 = arith.constant 0 : index
      %c32_84 = arith.constant 32 : index
      %144 = vector.load %arg10[%c0_83, %c32_84] : memref<8x128xf32, #tpu.memory_space<vmem>>, vector<8x32xf32>
      %145 = vector.extract_strided_slice %135 {offsets = [0, 1], sizes = [8, 1], strides = [1, 1]} : vector<8x4xf32> to vector<8x1xf32>
      %146 = vector.broadcast %145 : vector<8x1xf32> to vector<8x32xf32>
      %147 = arith.mulf %144, %146 : vector<8x32xf32>
      %148 = arith.truncf %147 : vector<8x32xf32> to vector<8x32xbf16>
      %c0_85 = arith.constant 0 : index
      %c0_86 = arith.constant 0 : index
      %c32_87 = arith.constant 32 : index
      %149 = vector.load %arg7[%c0_85, %c0_86, %c32_87] : memref<1x8x128xbf16, #tpu.memory_space<vmem>>, vector<1x8x32xbf16>
      %150 = vector.shape_cast %149 : vector<1x8x32xbf16> to vector<8x32xbf16>
      %151 = vector.shape_cast %148 : vector<8x32xbf16> to vector<1x8x32xbf16>
      tpu.vector_store %arg7[%c0_85, %c0_86, %c32_87], %151 {strides = array<i32>} : memref<1x8x128xbf16, #tpu.memory_space<vmem>>, vector<1x8x32xbf16>,
      %c0_88 = arith.constant 0 : index
      %c64_89 = arith.constant 64 : index
      %152 = vector.load %arg10[%c0_88, %c64_89] : memref<8x128xf32, #tpu.memory_space<vmem>>, vector<8x32xf32>
      %153 = vector.extract_strided_slice %135 {offsets = [0, 2], sizes = [8, 1], strides = [1, 1]} : vector<8x4xf32> to vector<8x1xf32>
      %154 = vector.broadcast %153 : vector<8x1xf32> to vector<8x32xf32>
      %155 = arith.mulf %152, %154 : vector<8x32xf32>
      %156 = arith.truncf %155 : vector<8x32xf32> to vector<8x32xbf16>
      %c0_90 = arith.constant 0 : index
      %c0_91 = arith.constant 0 : index
      %c64_92 = arith.constant 64 : index
      %157 = vector.load %arg7[%c0_90, %c0_91, %c64_92] : memref<1x8x128xbf16, #tpu.memory_space<vmem>>, vector<1x8x32xbf16>
      %158 = vector.shape_cast %157 : vector<1x8x32xbf16> to vector<8x32xbf16>
      %159 = vector.shape_cast %156 : vector<8x32xbf16> to vector<1x8x32xbf16>
      tpu.vector_store %arg7[%c0_90, %c0_91, %c64_92], %159 {strides = array<i32>} : memref<1x8x128xbf16, #tpu.memory_space<vmem>>, vector<1x8x32xbf16>,
      %c0_93 = arith.constant 0 : index
      %c96_94 = arith.constant 96 : index
      %160 = vector.load %arg10[%c0_93, %c96_94] : memref<8x128xf32, #tpu.memory_space<vmem>>, vector<8x32xf32>
      %161 = vector.extract_strided_slice %135 {offsets = [0, 3], sizes = [8, 1], strides = [1, 1]} : vector<8x4xf32> to vector<8x1xf32>
      %162 = vector.broadcast %161 : vector<8x1xf32> to vector<8x32xf32>
      %163 = arith.mulf %160, %162 : vector<8x32xf32>
      %164 = arith.truncf %163 : vector<8x32xf32> to vector<8x32xbf16>
      %c0_95 = arith.constant 0 : index
      %c0_96 = arith.constant 0 : index
      %c96_97 = arith.constant 96 : index
      %165 = vector.load %arg7[%c0_95, %c0_96, %c96_97] : memref<1x8x128xbf16, #tpu.memory_space<vmem>>, vector<1x8x32xbf16>
      %166 = vector.shape_cast %165 : vector<1x8x32xbf16> to vector<8x32xbf16>
      %167 = vector.shape_cast %164 : vector<8x32xbf16> to vector<1x8x32xbf16>
      tpu.vector_store %arg7[%c0_95, %c0_96, %c96_97], %167 {strides = array<i32>} : memref<1x8x128xbf16, #tpu.memory_space<vmem>>, vector<1x8x32xbf16>,
    } else {
    }
    return
  }
  func.func @transform_0(%arg0: i32, %arg1: i32, %arg2: i32) -> (i32, i32, i32) {
    %c0_i32 = arith.constant 0 : i32
    %c0_i32_0 = arith.constant 0 : i32
    return %arg0, %arg1, %c0_i32 : i32, i32, i32
  }
  func.func @transform_1(%arg0: i32, %arg1: i32, %arg2: i32) -> (i32, i32, i32) {
    %c1_i32 = arith.constant 1 : i32
    %c0_i32 = arith.constant 0 : i32
    return %arg0, %arg2, %c1_i32 : i32, i32, i32
  }
  func.func @transform_2(%arg0: i32, %arg1: i32, %arg2: i32) -> (i32, i32, i32) {
    %c2_i32 = arith.constant 2 : i32
    %c0_i32 = arith.constant 0 : i32
    return %arg0, %arg2, %c2_i32 : i32, i32, i32
  }
  func.func @transform_3(%arg0: i32, %arg1: i32, %arg2: i32) -> (i32, i32, i32) {
    %c0_i32 = arith.constant 0 : i32
    return %arg0, %arg1, %arg2 : i32, i32, i32
  }
  func.func @transform_4(%arg0: i32, %arg1: i32, %arg2: i32) -> (i32, i32, i32) {
    %c0_i32 = arith.constant 0 : i32
    %c0_i32_0 = arith.constant 0 : i32
    return %arg0, %arg1, %c0_i32 : i32, i32, i32
  }
}

module attributes {stable_mosaic.version = 11 : i64} {
  func.func @_linear_kernel(%arg0: i32, %arg1: i32, %arg2: i32, %arg3: memref<16x128xbf16, #tpu.memory_space<vmem>>, %arg4: memref<128x256xbf16, #tpu.memory_space<vmem>>, %arg5: memref<1x256xf32, #tpu.memory_space<vmem>>, %arg6: memref<16x256xbf16, #tpu.memory_space<vmem>>, %arg7: memref<16x256xf32, #tpu.memory_space<vmem>>) attributes {dimension_semantics = [#tpu.dimension_semantics<parallel>, #tpu.dimension_semantics<parallel>, #tpu.dimension_semantics<arbitrary>], iteration_bounds = array<i64: 1, 1, 1>, scalar_prefetch = 0 : i64, scratch_operands = 1 : i64, tpu.core_type = #tpu.core_type<tc>, window_params = [{transform_indices = @transform_0, window_bounds = array<i64: 16, 128>}, {transform_indices = @transform_1, window_bounds = array<i64: 128, 256>}, {transform_indices = @transform_2, window_bounds = array<i64: 1, 256>}, {transform_indices = @transform_3, window_bounds = array<i64: 16, 256>}]} {
    %c0_i32 = arith.constant 0 : i32
    %0 = arith.cmpi eq, %arg2, %c0_i32 : i32
    %1 = arith.extui %0 : i1 to i32
    %c0_i32_0 = arith.constant 0 : i32
    %2 = arith.cmpi ne, %1, %c0_i32_0 : i32
    scf.if %2 {
      %cst_10 = arith.constant 0.000000e+00 : f32
      %12 = vector.broadcast %cst_10 : f32 to vector<16x256xf32>
      %c0_11 = arith.constant 0 : index
      %c0_12 = arith.constant 0 : index
      %13 = vector.load %arg7[%c0_11, %c0_12] : memref<16x256xf32, #tpu.memory_space<vmem>>, vector<16x256xf32>
      tpu.vector_store %arg7[%c0_11, %c0_12], %12 {strides = array<i32>} : memref<16x256xf32, #tpu.memory_space<vmem>>, vector<16x256xf32>,
    } else {
    }
    %c0 = arith.constant 0 : index
    %c0_1 = arith.constant 0 : index
    %3 = vector.load %arg7[%c0, %c0_1] : memref<16x256xf32, #tpu.memory_space<vmem>>, vector<16x256xf32>
    %c0_2 = arith.constant 0 : index
    %c0_3 = arith.constant 0 : index
    %4 = vector.load %arg3[%c0_2, %c0_3] : memref<16x128xbf16, #tpu.memory_space<vmem>>, vector<16x128xbf16>
    %c0_4 = arith.constant 0 : index
    %c0_5 = arith.constant 0 : index
    %5 = vector.load %arg4[%c0_4, %c0_5] : memref<128x256xbf16, #tpu.memory_space<vmem>>, vector<128x256xbf16>
    %cst = arith.constant dense<0.000000e+00> : vector<16x256xf32>
    %6 = tpu.matmul %4, %5, %cst {dimension_numbers = #tpu.dot_dimension_numbers<[1], [0], [0], [1], [0, 0, 1, 1], [], []>} : vector<16x128xbf16>, vector<128x256xbf16>, vector<16x256xf32> -> vector<16x256xf32>
    %7 = arith.addf %3, %6 : vector<16x256xf32>
    %c0_6 = arith.constant 0 : index
    %c0_7 = arith.constant 0 : index
    %8 = vector.load %arg7[%c0_6, %c0_7] : memref<16x256xf32, #tpu.memory_space<vmem>>, vector<16x256xf32>
    tpu.vector_store %arg7[%c0_6, %c0_7], %7 {strides = array<i32>} : memref<16x256xf32, #tpu.memory_space<vmem>>, vector<16x256xf32>,
    %c0_i32_8 = arith.constant 0 : i32
    %9 = arith.cmpi eq, %arg2, %c0_i32_8 : i32
    %10 = arith.extui %9 : i1 to i32
    %c0_i32_9 = arith.constant 0 : i32
    %11 = arith.cmpi ne, %10, %c0_i32_9 : i32
    scf.if %11 {
      %c0_10 = arith.constant 0 : index
      %c0_11 = arith.constant 0 : index
      %12 = vector.load %arg7[%c0_10, %c0_11] : memref<16x256xf32, #tpu.memory_space<vmem>>, vector<16x256xf32>
      %c0_12 = arith.constant 0 : index
      %c0_13 = arith.constant 0 : index
      %13 = vector.load %arg5[%c0_12, %c0_13] : memref<1x256xf32, #tpu.memory_space<vmem>>, vector<1x256xf32>
      %14 = vector.broadcast %13 : vector<1x256xf32> to vector<16x256xf32>
      %15 = arith.addf %12, %14 : vector<16x256xf32>
      %cst_14 = arith.constant 0.000000e+00 : f32
      %16 = vector.broadcast %cst_14 : f32 to vector<16x256xf32>
      %17 = arith.maximumf %15, %16 : vector<16x256xf32>
      %18 = arith.truncf %17 : vector<16x256xf32> to vector<16x256xbf16>
      %c0_15 = arith.constant 0 : index
      %c0_16 = arith.constant 0 : index
      %19 = vector.load %arg6[%c0_15, %c0_16] : memref<16x256xbf16, #tpu.memory_space<vmem>>, vector<16x256xbf16>
      tpu.vector_store %arg6[%c0_15, %c0_16], %18 {strides = array<i32>} : memref<16x256xbf16, #tpu.memory_space<vmem>>, vector<16x256xbf16>,
    } else {
    }
    return
  }
  func.func @transform_0(%arg0: i32, %arg1: i32, %arg2: i32) -> (i32, i32) {
    %c0_i32 = arith.constant 0 : i32
    return %arg0, %arg2 : i32, i32
  }
  func.func @transform_1(%arg0: i32, %arg1: i32, %arg2: i32) -> (i32, i32) {
    %c0_i32 = arith.constant 0 : i32
    return %arg2, %arg1 : i32, i32
  }
  func.func @transform_2(%arg0: i32, %arg1: i32, %arg2: i32) -> (i32, i32) {
    %c0_i32 = arith.constant 0 : i32
    %c0_i32_0 = arith.constant 0 : i32
    return %c0_i32, %arg1 : i32, i32
  }
  func.func @transform_3(%arg0: i32, %arg1: i32, %arg2: i32) -> (i32, i32) {
    %c0_i32 = arith.constant 0 : i32
    return %arg0, %arg1 : i32, i32
  }
}

module attributes {stable_mosaic.version = 11 : i64} {
  func.func @_attn_kernel(%arg0: i32, %arg1: i32, %arg2: i32, %arg3: memref<1x8x128xbf16, #tpu.memory_space<vmem>>, %arg4: memref<1x8x128xbf16, #tpu.memory_space<vmem>>, %arg5: memref<1x8x128xbf16, #tpu.memory_space<vmem>>, %arg6: memref<1x8x128xbf16, #tpu.memory_space<vmem>>, %arg7: memref<8x4xf32, #tpu.memory_space<vmem>>, %arg8: memref<8x4xf32, #tpu.memory_space<vmem>>, %arg9: memref<8x128xf32, #tpu.memory_space<vmem>>) attributes {dimension_semantics = [#tpu.dimension_semantics<parallel>, #tpu.dimension_semantics<parallel>, #tpu.dimension_semantics<arbitrary>], iteration_bounds = array<i64: 2, 1, 1>, scalar_prefetch = 0 : i64, scratch_operands = 3 : i64, tpu.core_type = #tpu.core_type<tc>, window_params = [{transform_indices = @transform_0, window_bounds = array<i64: 1, 8, 128>}, {transform_indices = @transform_1, window_bounds = array<i64: 1, 8, 128>}, {transform_indices = @transform_2, window_bounds = array<i64: 1, 8, 128>}, {transform_indices = @transform_3, window_bounds = array<i64: 1, 8, 128>}]} {
    %c0_i32 = arith.constant 0 : i32
    %0 = arith.cmpi eq, %arg2, %c0_i32 : i32
    %1 = arith.extui %0 : i1 to i32
    %c0_i32_0 = arith.constant 0 : i32
    %2 = arith.cmpi ne, %1, %c0_i32_0 : i32
    scf.if %2 {
      %cst_68 = arith.constant -1.000000e+30 : f32
      %120 = vector.broadcast %cst_68 : f32 to vector<8x4xf32>
      %c0_69 = arith.constant 0 : index
      %c0_70 = arith.constant 0 : index
      %121 = vector.load %arg7[%c0_69, %c0_70] : memref<8x4xf32, #tpu.memory_space<vmem>>, vector<8x4xf32>
      tpu.vector_store %arg7[%c0_69, %c0_70], %120 {strides = array<i32>} : memref<8x4xf32, #tpu.memory_space<vmem>>, vector<8x4xf32>,
      %cst_71 = arith.constant 0.000000e+00 : f32
      %122 = vector.broadcast %cst_71 : f32 to vector<8x4xf32>
      %c0_72 = arith.constant 0 : index
      %c0_73 = arith.constant 0 : index
      %123 = vector.load %arg8[%c0_72, %c0_73] : memref<8x4xf32, #tpu.memory_space<vmem>>, vector<8x4xf32>
      tpu.vector_store %arg8[%c0_72, %c0_73], %122 {strides = array<i32>} : memref<8x4xf32, #tpu.memory_space<vmem>>, vector<8x4xf32>,
      %cst_74 = arith.constant 0.000000e+00 : f32
      %124 = vector.broadcast %cst_74 : f32 to vector<8x128xf32>
      %c0_75 = arith.constant 0 : index
      %c0_76 = arith.constant 0 : index
      %125 = vector.load %arg9[%c0_75, %c0_76] : memref<8x128xf32, #tpu.memory_space<vmem>>, vector<8x128xf32>
      tpu.vector_store %arg9[%c0_75, %c0_76], %124 {strides = array<i32>} : memref<8x128xf32, #tpu.memory_space<vmem>>, vector<8x128xf32>,
    } else {
    }
    %c0 = arith.constant 0 : index
    %c0_1 = arith.constant 0 : index
    %c0_2 = arith.constant 0 : index
    %3 = vector.load %arg3[%c0, %c0_1, %c0_2] : memref<1x8x128xbf16, #tpu.memory_space<vmem>>, vector<1x8x128xbf16>
    %4 = vector.shape_cast %3 : vector<1x8x128xbf16> to vector<8x128xbf16>
    %c0_3 = arith.constant 0 : index
    %c0_4 = arith.constant 0 : index
    %c0_5 = arith.constant 0 : index
    %5 = vector.load %arg4[%c0_3, %c0_4, %c0_5] : memref<1x8x128xbf16, #tpu.memory_space<vmem>>, vector<1x8x128xbf16>
    %6 = vector.shape_cast %5 : vector<1x8x128xbf16> to vector<8x128xbf16>
    %c0_6 = arith.constant 0 : index
    %c0_7 = arith.constant 0 : index
    %c0_8 = arith.constant 0 : index
    %7 = vector.load %arg5[%c0_6, %c0_7, %c0_8] : memref<1x8x128xbf16, #tpu.memory_space<vmem>>, vector<1x8x128xbf16>
    %8 = vector.shape_cast %7 : vector<1x8x128xbf16> to vector<8x128xbf16>
    %9 = vector.extract_strided_slice %4 {offsets = [0, 0], sizes = [8, 32], strides = [1, 1]} : vector<8x128xbf16> to vector<8x32xbf16>
    %10 = vector.extract_strided_slice %6 {offsets = [0, 0], sizes = [8, 32], strides = [1, 1]} : vector<8x128xbf16> to vector<8x32xbf16>
    %11 = vector.extract_strided_slice %8 {offsets = [0, 0], sizes = [8, 32], strides = [1, 1]} : vector<8x128xbf16> to vector<8x32xbf16>
    %cst = arith.constant dense<0.000000e+00> : vector<8x8xf32>
    %12 = tpu.matmul %9, %10, %cst {dimension_numbers = #tpu.dot_dimension_numbers<[1], [1], [0], [0], [0, 0, 1, 0], [], []>} : vector<8x32xbf16>, vector<8x32xbf16>, vector<8x8xf32> -> vector<8x8xf32>
    %c0_9 = arith.constant 0 : index
    %c0_10 = arith.constant 0 : index
    %13 = vector.load %arg7[%c0_9, %c0_10] : memref<8x4xf32, #tpu.memory_space<vmem>>, vector<8x1xf32>
    %cst_11 = arith.constant dense<0xFF800000> : vector<8xf32>
    %14 = vector.multi_reduction <maximumf>, %12, %cst_11 [1] : vector<8x8xf32> to vector<8xf32>
    %15 = vector.shape_cast %14 : vector<8xf32> to vector<8x1xf32>
    %16 = arith.maximumf %13, %15 : vector<8x1xf32>
    %17 = vector.broadcast %16 : vector<8x1xf32> to vector<8x8xf32>
    %18 = arith.subf %12, %17 : vector<8x8xf32>
    %19 = math.exp %18 : vector<8x8xf32>
    %20 = arith.subf %13, %16 : vector<8x1xf32>
    %21 = math.exp %20 : vector<8x1xf32>
    %c0_12 = arith.constant 0 : index
    %c0_13 = arith.constant 0 : index
    %22 = vector.load %arg8[%c0_12, %c0_13] : memref<8x4xf32, #tpu.memory_space<vmem>>, vector<8x1xf32>
    %23 = arith.mulf %21, %22 : vector<8x1xf32>
    %cst_14 = arith.constant dense<0.000000e+00> : vector<8xf32>
    %24 = vector.multi_reduction <add>, %19, %cst_14 [1] : vector<8x8xf32> to vector<8xf32>
    %25 = vector.shape_cast %24 : vector<8xf32> to vector<8x1xf32>
    %26 = arith.addf %23, %25 : vector<8x1xf32>
    %c0_15 = arith.constant 0 : index
    %c0_16 = arith.constant 0 : index
    %27 = vector.load %arg8[%c0_15, %c0_16] : memref<8x4xf32, #tpu.memory_space<vmem>>, vector<8x1xf32>
    tpu.vector_store %arg8[%c0_15, %c0_16], %26 {strides = array<i32>} : memref<8x4xf32, #tpu.memory_space<vmem>>, vector<8x1xf32>,
    %c0_17 = arith.constant 0 : index
    %c0_18 = arith.constant 0 : index
    %28 = vector.load %arg9[%c0_17, %c0_18] : memref<8x128xf32, #tpu.memory_space<vmem>>, vector<8x32xf32>
    %29 = vector.broadcast %21 : vector<8x1xf32> to vector<8x32xf32>
    %30 = arith.mulf %29, %28 : vector<8x32xf32>
    %31 = arith.truncf %19 : vector<8x8xf32> to vector<8x8xbf16>
    %cst_19 = arith.constant dense<0.000000e+00> : vector<8x32xf32>
    %32 = tpu.matmul %31, %11, %cst_19 {dimension_numbers = #tpu.dot_dimension_numbers<[1], [0], [0], [1], [0, 0, 1, 1], [], []>} : vector<8x8xbf16>, vector<8x32xbf16>, vector<8x32xf32> -> vector<8x32xf32>
    %33 = arith.addf %30, %32 : vector<8x32xf32>
    %c0_20 = arith.constant 0 : index
    %c0_21 = arith.constant 0 : index
    %34 = vector.load %arg9[%c0_20, %c0_21] : memref<8x128xf32, #tpu.memory_space<vmem>>, vector<8x32xf32>
    tpu.vector_store %arg9[%c0_20, %c0_21], %33 {strides = array<i32>} : memref<8x128xf32, #tpu.memory_space<vmem>>, vector<8x32xf32>,
    %c0_22 = arith.constant 0 : index
    %c0_23 = arith.constant 0 : index
    %35 = vector.load %arg7[%c0_22, %c0_23] : memref<8x4xf32, #tpu.memory_space<vmem>>, vector<8x1xf32>
    tpu.vector_store %arg7[%c0_22, %c0_23], %16 {strides = array<i32>} : memref<8x4xf32, #tpu.memory_space<vmem>>, vector<8x1xf32>,
    %36 = vector.extract_strided_slice %4 {offsets = [0, 32], sizes = [8, 32], strides = [1, 1]} : vector<8x128xbf16> to vector<8x32xbf16>
    %37 = vector.extract_strided_slice %6 {offsets = [0, 32], sizes = [8, 32], strides = [1, 1]} : vector<8x128xbf16> to vector<8x32xbf16>
    %38 = vector.extract_strided_slice %8 {offsets = [0, 32], sizes = [8, 32], strides = [1, 1]} : vector<8x128xbf16> to vector<8x32xbf16>
    %cst_24 = arith.constant dense<0.000000e+00> : vector<8x8xf32>
    %39 = tpu.matmul %36, %37, %cst_24 {dimension_numbers = #tpu.dot_dimension_numbers<[1], [1], [0], [0], [0, 0, 1, 0], [], []>} : vector<8x32xbf16>, vector<8x32xbf16>, vector<8x8xf32> -> vector<8x8xf32>
    %c0_25 = arith.constant 0 : index
    %c1 = arith.constant 1 : index
    %40 = vector.load %arg7[%c0_25, %c1] : memref<8x4xf32, #tpu.memory_space<vmem>>, vector<8x1xf32>
    %cst_26 = arith.constant dense<0xFF800000> : vector<8xf32>
    %41 = vector.multi_reduction <maximumf>, %39, %cst_26 [1] : vector<8x8xf32> to vector<8xf32>
    %42 = vector.shape_cast %41 : vector<8xf32> to vector<8x1xf32>
    %43 = arith.maximumf %40, %42 : vector<8x1xf32>
    %44 = vector.broadcast %43 : vector<8x1xf32> to vector<8x8xf32>
    %45 = arith.subf %39, %44 : vector<8x8xf32>
    %46 = math.exp %45 : vector<8x8xf32>
    %47 = arith.subf %40, %43 : vector<8x1xf32>
    %48 = math.exp %47 : vector<8x1xf32>
    %c0_27 = arith.constant 0 : index
    %c1_28 = arith.constant 1 : index
    %49 = vector.load %arg8[%c0_27, %c1_28] : memref<8x4xf32, #tpu.memory_space<vmem>>, vector<8x1xf32>
    %50 = arith.mulf %48, %49 : vector<8x1xf32>
    %cst_29 = arith.constant dense<0.000000e+00> : vector<8xf32>
    %51 = vector.multi_reduction <add>, %46, %cst_29 [1] : vector<8x8xf32> to vector<8xf32>
    %52 = vector.shape_cast %51 : vector<8xf32> to vector<8x1xf32>
    %53 = arith.addf %50, %52 : vector<8x1xf32>
    %c0_30 = arith.constant 0 : index
    %c1_31 = arith.constant 1 : index
    %54 = vector.load %arg8[%c0_30, %c1_31] : memref<8x4xf32, #tpu.memory_space<vmem>>, vector<8x1xf32>
    tpu.vector_store %arg8[%c0_30, %c1_31], %53 {strides = array<i32>} : memref<8x4xf32, #tpu.memory_space<vmem>>, vector<8x1xf32>,
    %c0_32 = arith.constant 0 : index
    %c32 = arith.constant 32 : index
    %55 = vector.load %arg9[%c0_32, %c32] : memref<8x128xf32, #tpu.memory_space<vmem>>, vector<8x32xf32>
    %56 = vector.broadcast %48 : vector<8x1xf32> to vector<8x32xf32>
    %57 = arith.mulf %56, %55 : vector<8x32xf32>
    %58 = arith.truncf %46 : vector<8x8xf32> to vector<8x8xbf16>
    %cst_33 = arith.constant dense<0.000000e+00> : vector<8x32xf32>
    %59 = tpu.matmul %58, %38, %cst_33 {dimension_numbers = #tpu.dot_dimension_numbers<[1], [0], [0], [1], [0, 0, 1, 1], [], []>} : vector<8x8xbf16>, vector<8x32xbf16>, vector<8x32xf32> -> vector<8x32xf32>
    %60 = arith.addf %57, %59 : vector<8x32xf32>
    %c0_34 = arith.constant 0 : index
    %c32_35 = arith.constant 32 : index
    %61 = vector.load %arg9[%c0_34, %c32_35] : memref<8x128xf32, #tpu.memory_space<vmem>>, vector<8x32xf32>
    tpu.vector_store %arg9[%c0_34, %c32_35], %60 {strides = array<i32>} : memref<8x128xf32, #tpu.memory_space<vmem>>, vector<8x32xf32>,
    %c0_36 = arith.constant 0 : index
    %c1_37 = arith.constant 1 : index
    %62 = vector.load %arg7[%c0_36, %c1_37] : memref<8x4xf32, #tpu.memory_space<vmem>>, vector<8x1xf32>
    tpu.vector_store %arg7[%c0_36, %c1_37], %43 {strides = array<i32>} : memref<8x4xf32, #tpu.memory_space<vmem>>, vector<8x1xf32>,
    %63 = vector.extract_strided_slice %4 {offsets = [0, 64], sizes = [8, 32], strides = [1, 1]} : vector<8x128xbf16> to vector<8x32xbf16>
    %64 = vector.extract_strided_slice %6 {offsets = [0, 64], sizes = [8, 32], strides = [1, 1]} : vector<8x128xbf16> to vector<8x32xbf16>
    %65 = vector.extract_strided_slice %8 {offsets = [0, 64], sizes = [8, 32], strides = [1, 1]} : vector<8x128xbf16> to vector<8x32xbf16>
    %cst_38 = arith.constant dense<0.000000e+00> : vector<8x8xf32>
    %66 = tpu.matmul %63, %64, %cst_38 {dimension_numbers = #tpu.dot_dimension_numbers<[1], [1], [0], [0], [0, 0, 1, 0], [], []>} : vector<8x32xbf16>, vector<8x32xbf16>, vector<8x8xf32> -> vector<8x8xf32>
    %c0_39 = arith.constant 0 : index
    %c2 = arith.constant 2 : index
    %67 = vector.load %arg7[%c0_39, %c2] : memref<8x4xf32, #tpu.memory_space<vmem>>, vector<8x1xf32>
    %cst_40 = arith.constant dense<0xFF800000> : vector<8xf32>
    %68 = vector.multi_reduction <maximumf>, %66, %cst_40 [1] : vector<8x8xf32> to vector<8xf32>
    %69 = vector.shape_cast %68 : vector<8xf32> to vector<8x1xf32>
    %70 = arith.maximumf %67, %69 : vector<8x1xf32>
    %71 = vector.broadcast %70 : vector<8x1xf32> to vector<8x8xf32>
    %72 = arith.subf %66, %71 : vector<8x8xf32>
    %73 = math.exp %72 : vector<8x8xf32>
    %74 = arith.subf %67, %70 : vector<8x1xf32>
    %75 = math.exp %74 : vector<8x1xf32>
    %c0_41 = arith.constant 0 : index
    %c2_42 = arith.constant 2 : index
    %76 = vector.load %arg8[%c0_41, %c2_42] : memref<8x4xf32, #tpu.memory_space<vmem>>, vector<8x1xf32>
    %77 = arith.mulf %75, %76 : vector<8x1xf32>
    %cst_43 = arith.constant dense<0.000000e+00> : vector<8xf32>
    %78 = vector.multi_reduction <add>, %73, %cst_43 [1] : vector<8x8xf32> to vector<8xf32>
    %79 = vector.shape_cast %78 : vector<8xf32> to vector<8x1xf32>
    %80 = arith.addf %77, %79 : vector<8x1xf32>
    %c0_44 = arith.constant 0 : index
    %c2_45 = arith.constant 2 : index
    %81 = vector.load %arg8[%c0_44, %c2_45] : memref<8x4xf32, #tpu.memory_space<vmem>>, vector<8x1xf32>
    tpu.vector_store %arg8[%c0_44, %c2_45], %80 {strides = array<i32>} : memref<8x4xf32, #tpu.memory_space<vmem>>, vector<8x1xf32>,
    %c0_46 = arith.constant 0 : index
    %c64 = arith.constant 64 : index
    %82 = vector.load %arg9[%c0_46, %c64] : memref<8x128xf32, #tpu.memory_space<vmem>>, vector<8x32xf32>
    %83 = vector.broadcast %75 : vector<8x1xf32> to vector<8x32xf32>
    %84 = arith.mulf %83, %82 : vector<8x32xf32>
    %85 = arith.truncf %73 : vector<8x8xf32> to vector<8x8xbf16>
    %cst_47 = arith.constant dense<0.000000e+00> : vector<8x32xf32>
    %86 = tpu.matmul %85, %65, %cst_47 {dimension_numbers = #tpu.dot_dimension_numbers<[1], [0], [0], [1], [0, 0, 1, 1], [], []>} : vector<8x8xbf16>, vector<8x32xbf16>, vector<8x32xf32> -> vector<8x32xf32>
    %87 = arith.addf %84, %86 : vector<8x32xf32>
    %c0_48 = arith.constant 0 : index
    %c64_49 = arith.constant 64 : index
    %88 = vector.load %arg9[%c0_48, %c64_49] : memref<8x128xf32, #tpu.memory_space<vmem>>, vector<8x32xf32>
    tpu.vector_store %arg9[%c0_48, %c64_49], %87 {strides = array<i32>} : memref<8x128xf32, #tpu.memory_space<vmem>>, vector<8x32xf32>,
    %c0_50 = arith.constant 0 : index
    %c2_51 = arith.constant 2 : index
    %89 = vector.load %arg7[%c0_50, %c2_51] : memref<8x4xf32, #tpu.memory_space<vmem>>, vector<8x1xf32>
    tpu.vector_store %arg7[%c0_50, %c2_51], %70 {strides = array<i32>} : memref<8x4xf32, #tpu.memory_space<vmem>>, vector<8x1xf32>,
    %90 = vector.extract_strided_slice %4 {offsets = [0, 96], sizes = [8, 32], strides = [1, 1]} : vector<8x128xbf16> to vector<8x32xbf16>
    %91 = vector.extract_strided_slice %6 {offsets = [0, 96], sizes = [8, 32], strides = [1, 1]} : vector<8x128xbf16> to vector<8x32xbf16>
    %92 = vector.extract_strided_slice %8 {offsets = [0, 96], sizes = [8, 32], strides = [1, 1]} : vector<8x128xbf16> to vector<8x32xbf16>
    %cst_52 = arith.constant dense<0.000000e+00> : vector<8x8xf32>
    %93 = tpu.matmul %90, %91, %cst_52 {dimension_numbers = #tpu.dot_dimension_numbers<[1], [1], [0], [0], [0, 0, 1, 0], [], []>} : vector<8x32xbf16>, vector<8x32xbf16>, vector<8x8xf32> -> vector<8x8xf32>
    %c0_53 = arith.constant 0 : index
    %c3 = arith.constant 3 : index
    %94 = vector.load %arg7[%c0_53, %c3] : memref<8x4xf32, #tpu.memory_space<vmem>>, vector<8x1xf32>
    %cst_54 = arith.constant dense<0xFF800000> : vector<8xf32>
    %95 = vector.multi_reduction <maximumf>, %93, %cst_54 [1] : vector<8x8xf32> to vector<8xf32>
    %96 = vector.shape_cast %95 : vector<8xf32> to vector<8x1xf32>
    %97 = arith.maximumf %94, %96 : vector<8x1xf32>
    %98 = vector.broadcast %97 : vector<8x1xf32> to vector<8x8xf32>
    %99 = arith.subf %93, %98 : vector<8x8xf32>
    %100 = math.exp %99 : vector<8x8xf32>
    %101 = arith.subf %94, %97 : vector<8x1xf32>
    %102 = math.exp %101 : vector<8x1xf32>
    %c0_55 = arith.constant 0 : index
    %c3_56 = arith.constant 3 : index
    %103 = vector.load %arg8[%c0_55, %c3_56] : memref<8x4xf32, #tpu.memory_space<vmem>>, vector<8x1xf32>
    %104 = arith.mulf %102, %103 : vector<8x1xf32>
    %cst_57 = arith.constant dense<0.000000e+00> : vector<8xf32>
    %105 = vector.multi_reduction <add>, %100, %cst_57 [1] : vector<8x8xf32> to vector<8xf32>
    %106 = vector.shape_cast %105 : vector<8xf32> to vector<8x1xf32>
    %107 = arith.addf %104, %106 : vector<8x1xf32>
    %c0_58 = arith.constant 0 : index
    %c3_59 = arith.constant 3 : index
    %108 = vector.load %arg8[%c0_58, %c3_59] : memref<8x4xf32, #tpu.memory_space<vmem>>, vector<8x1xf32>
    tpu.vector_store %arg8[%c0_58, %c3_59], %107 {strides = array<i32>} : memref<8x4xf32, #tpu.memory_space<vmem>>, vector<8x1xf32>,
    %c0_60 = arith.constant 0 : index
    %c96 = arith.constant 96 : index
    %109 = vector.load %arg9[%c0_60, %c96] : memref<8x128xf32, #tpu.memory_space<vmem>>, vector<8x32xf32>
    %110 = vector.broadcast %102 : vector<8x1xf32> to vector<8x32xf32>
    %111 = arith.mulf %110, %109 : vector<8x32xf32>
    %112 = arith.truncf %100 : vector<8x8xf32> to vector<8x8xbf16>
    %cst_61 = arith.constant dense<0.000000e+00> : vector<8x32xf32>
    %113 = tpu.matmul %112, %92, %cst_61 {dimension_numbers = #tpu.dot_dimension_numbers<[1], [0], [0], [1], [0, 0, 1, 1], [], []>} : vector<8x8xbf16>, vector<8x32xbf16>, vector<8x32xf32> -> vector<8x32xf32>
    %114 = arith.addf %111, %113 : vector<8x32xf32>
    %c0_62 = arith.constant 0 : index
    %c96_63 = arith.constant 96 : index
    %115 = vector.load %arg9[%c0_62, %c96_63] : memref<8x128xf32, #tpu.memory_space<vmem>>, vector<8x32xf32>
    tpu.vector_store %arg9[%c0_62, %c96_63], %114 {strides = array<i32>} : memref<8x128xf32, #tpu.memory_space<vmem>>, vector<8x32xf32>,
    %c0_64 = arith.constant 0 : index
    %c3_65 = arith.constant 3 : index
    %116 = vector.load %arg7[%c0_64, %c3_65] : memref<8x4xf32, #tpu.memory_space<vmem>>, vector<8x1xf32>
    tpu.vector_store %arg7[%c0_64, %c3_65], %97 {strides = array<i32>} : memref<8x4xf32, #tpu.memory_space<vmem>>, vector<8x1xf32>,
    %c0_i32_66 = arith.constant 0 : i32
    %117 = arith.cmpi eq, %arg2, %c0_i32_66 : i32
    %118 = arith.extui %117 : i1 to i32
    %c0_i32_67 = arith.constant 0 : i32
    %119 = arith.cmpi ne, %118, %c0_i32_67 : i32
    scf.if %119 {
      %c0_68 = arith.constant 0 : index
      %c0_69 = arith.constant 0 : index
      %120 = vector.load %arg8[%c0_68, %c0_69] : memref<8x4xf32, #tpu.memory_space<vmem>>, vector<8x4xf32>
      %cst_70 = arith.constant 1.000000e-30 : f32
      %121 = vector.broadcast %cst_70 : f32 to vector<8x4xf32>
      %122 = arith.maximumf %120, %121 : vector<8x4xf32>
      %123 = tpu.reciprocal %122 {approx = true} : vector<8x4xf32> -> vector<8x4xf32>
      %c0_71 = arith.constant 0 : index
      %c0_72 = arith.constant 0 : index
      %124 = vector.load %arg9[%c0_71, %c0_72] : memref<8x128xf32, #tpu.memory_space<vmem>>, vector<8x32xf32>
      %125 = vector.extract_strided_slice %123 {offsets = [0, 0], sizes = [8, 1], strides = [1, 1]} : vector<8x4xf32> to vector<8x1xf32>
      %126 = vector.broadcast %125 : vector<8x1xf32> to vector<8x32xf32>
      %127 = arith.mulf %124, %126 : vector<8x32xf32>
      %128 = arith.truncf %127 : vector<8x32xf32> to vector<8x32xbf16>
      %c0_73 = arith.constant 0 : index
      %c0_74 = arith.constant 0 : index
      %c0_75 = arith.constant 0 : index
      %129 = vector.load %arg6[%c0_73, %c0_74, %c0_75] : memref<1x8x128xbf16, #tpu.memory_space<vmem>>, vector<1x8x32xbf16>
      %130 = vector.shape_cast %129 : vector<1x8x32xbf16> to vector<8x32xbf16>
      %131 = vector.shape_cast %128 : vector<8x32xbf16> to vector<1x8x32xbf16>
      tpu.vector_store %arg6[%c0_73, %c0_74, %c0_75], %131 {strides = array<i32>} : memref<1x8x128xbf16, #tpu.memory_space<vmem>>, vector<1x8x32xbf16>,
      %c0_76 = arith.constant 0 : index
      %c32_77 = arith.constant 32 : index
      %132 = vector.load %arg9[%c0_76, %c32_77] : memref<8x128xf32, #tpu.memory_space<vmem>>, vector<8x32xf32>
      %133 = vector.extract_strided_slice %123 {offsets = [0, 1], sizes = [8, 1], strides = [1, 1]} : vector<8x4xf32> to vector<8x1xf32>
      %134 = vector.broadcast %133 : vector<8x1xf32> to vector<8x32xf32>
      %135 = arith.mulf %132, %134 : vector<8x32xf32>
      %136 = arith.truncf %135 : vector<8x32xf32> to vector<8x32xbf16>
      %c0_78 = arith.constant 0 : index
      %c0_79 = arith.constant 0 : index
      %c32_80 = arith.constant 32 : index
      %137 = vector.load %arg6[%c0_78, %c0_79, %c32_80] : memref<1x8x128xbf16, #tpu.memory_space<vmem>>, vector<1x8x32xbf16>
      %138 = vector.shape_cast %137 : vector<1x8x32xbf16> to vector<8x32xbf16>
      %139 = vector.shape_cast %136 : vector<8x32xbf16> to vector<1x8x32xbf16>
      tpu.vector_store %arg6[%c0_78, %c0_79, %c32_80], %139 {strides = array<i32>} : memref<1x8x128xbf16, #tpu.memory_space<vmem>>, vector<1x8x32xbf16>,
      %c0_81 = arith.constant 0 : index
      %c64_82 = arith.constant 64 : index
      %140 = vector.load %arg9[%c0_81, %c64_82] : memref<8x128xf32, #tpu.memory_space<vmem>>, vector<8x32xf32>
      %141 = vector.extract_strided_slice %123 {offsets = [0, 2], sizes = [8, 1], strides = [1, 1]} : vector<8x4xf32> to vector<8x1xf32>
      %142 = vector.broadcast %141 : vector<8x1xf32> to vector<8x32xf32>
      %143 = arith.mulf %140, %142 : vector<8x32xf32>
      %144 = arith.truncf %143 : vector<8x32xf32> to vector<8x32xbf16>
      %c0_83 = arith.constant 0 : index
      %c0_84 = arith.constant 0 : index
      %c64_85 = arith.constant 64 : index
      %145 = vector.load %arg6[%c0_83, %c0_84, %c64_85] : memref<1x8x128xbf16, #tpu.memory_space<vmem>>, vector<1x8x32xbf16>
      %146 = vector.shape_cast %145 : vector<1x8x32xbf16> to vector<8x32xbf16>
      %147 = vector.shape_cast %144 : vector<8x32xbf16> to vector<1x8x32xbf16>
      tpu.vector_store %arg6[%c0_83, %c0_84, %c64_85], %147 {strides = array<i32>} : memref<1x8x128xbf16, #tpu.memory_space<vmem>>, vector<1x8x32xbf16>,
      %c0_86 = arith.constant 0 : index
      %c96_87 = arith.constant 96 : index
      %148 = vector.load %arg9[%c0_86, %c96_87] : memref<8x128xf32, #tpu.memory_space<vmem>>, vector<8x32xf32>
      %149 = vector.extract_strided_slice %123 {offsets = [0, 3], sizes = [8, 1], strides = [1, 1]} : vector<8x4xf32> to vector<8x1xf32>
      %150 = vector.broadcast %149 : vector<8x1xf32> to vector<8x32xf32>
      %151 = arith.mulf %148, %150 : vector<8x32xf32>
      %152 = arith.truncf %151 : vector<8x32xf32> to vector<8x32xbf16>
      %c0_88 = arith.constant 0 : index
      %c0_89 = arith.constant 0 : index
      %c96_90 = arith.constant 96 : index
      %153 = vector.load %arg6[%c0_88, %c0_89, %c96_90] : memref<1x8x128xbf16, #tpu.memory_space<vmem>>, vector<1x8x32xbf16>
      %154 = vector.shape_cast %153 : vector<1x8x32xbf16> to vector<8x32xbf16>
      %155 = vector.shape_cast %152 : vector<8x32xbf16> to vector<1x8x32xbf16>
      tpu.vector_store %arg6[%c0_88, %c0_89, %c96_90], %155 {strides = array<i32>} : memref<1x8x128xbf16, #tpu.memory_space<vmem>>, vector<1x8x32xbf16>,
    } else {
    }
    return
  }
  func.func @transform_0(%arg0: i32, %arg1: i32, %arg2: i32) -> (i32, i32, i32) {
    %c0_i32 = arith.constant 0 : i32
    %c0_i32_0 = arith.constant 0 : i32
    return %arg0, %arg1, %c0_i32 : i32, i32, i32
  }
  func.func @transform_1(%arg0: i32, %arg1: i32, %arg2: i32) -> (i32, i32, i32) {
    %c0_i32 = arith.constant 0 : i32
    %c0_i32_0 = arith.constant 0 : i32
    return %arg0, %arg2, %c0_i32 : i32, i32, i32
  }
  func.func @transform_2(%arg0: i32, %arg1: i32, %arg2: i32) -> (i32, i32, i32) {
    %c1_i32 = arith.constant 1 : i32
    %c0_i32 = arith.constant 0 : i32
    return %arg0, %arg2, %c1_i32 : i32, i32, i32
  }
  func.func @transform_3(%arg0: i32, %arg1: i32, %arg2: i32) -> (i32, i32, i32) {
    %c0_i32 = arith.constant 0 : i32
    %c0_i32_0 = arith.constant 0 : i32
    return %arg0, %arg1, %c0_i32 : i32, i32, i32
  }
}

module attributes {stable_mosaic.version = 11 : i64} {
  func.func @_linear_kernel(%arg0: i32, %arg1: i32, %arg2: i32, %arg3: memref<16x128xbf16, #tpu.memory_space<vmem>>, %arg4: memref<128x256xbf16, #tpu.memory_space<vmem>>, %arg5: memref<1x256xf32, #tpu.memory_space<vmem>>, %arg6: memref<16x256xbf16, #tpu.memory_space<vmem>>, %arg7: memref<16x256xf32, #tpu.memory_space<vmem>>) attributes {dimension_semantics = [#tpu.dimension_semantics<parallel>, #tpu.dimension_semantics<parallel>, #tpu.dimension_semantics<arbitrary>], iteration_bounds = array<i64: 1, 1, 1>, scalar_prefetch = 0 : i64, scratch_operands = 1 : i64, tpu.core_type = #tpu.core_type<tc>, window_params = [{transform_indices = @transform_0, window_bounds = array<i64: 16, 128>}, {transform_indices = @transform_1, window_bounds = array<i64: 128, 256>}, {transform_indices = @transform_2, window_bounds = array<i64: 1, 256>}, {transform_indices = @transform_3, window_bounds = array<i64: 16, 256>}]} {
    %c0_i32 = arith.constant 0 : i32
    %0 = arith.cmpi eq, %arg2, %c0_i32 : i32
    %1 = arith.extui %0 : i1 to i32
    %c0_i32_0 = arith.constant 0 : i32
    %2 = arith.cmpi ne, %1, %c0_i32_0 : i32
    scf.if %2 {
      %cst_10 = arith.constant 0.000000e+00 : f32
      %12 = vector.broadcast %cst_10 : f32 to vector<16x256xf32>
      %c0_11 = arith.constant 0 : index
      %c0_12 = arith.constant 0 : index
      %13 = vector.load %arg7[%c0_11, %c0_12] : memref<16x256xf32, #tpu.memory_space<vmem>>, vector<16x256xf32>
      tpu.vector_store %arg7[%c0_11, %c0_12], %12 {strides = array<i32>} : memref<16x256xf32, #tpu.memory_space<vmem>>, vector<16x256xf32>,
    } else {
    }
    %c0 = arith.constant 0 : index
    %c0_1 = arith.constant 0 : index
    %3 = vector.load %arg7[%c0, %c0_1] : memref<16x256xf32, #tpu.memory_space<vmem>>, vector<16x256xf32>
    %c0_2 = arith.constant 0 : index
    %c0_3 = arith.constant 0 : index
    %4 = vector.load %arg3[%c0_2, %c0_3] : memref<16x128xbf16, #tpu.memory_space<vmem>>, vector<16x128xbf16>
    %c0_4 = arith.constant 0 : index
    %c0_5 = arith.constant 0 : index
    %5 = vector.load %arg4[%c0_4, %c0_5] : memref<128x256xbf16, #tpu.memory_space<vmem>>, vector<128x256xbf16>
    %cst = arith.constant dense<0.000000e+00> : vector<16x256xf32>
    %6 = tpu.matmul %4, %5, %cst {dimension_numbers = #tpu.dot_dimension_numbers<[1], [0], [0], [1], [0, 0, 1, 1], [], []>} : vector<16x128xbf16>, vector<128x256xbf16>, vector<16x256xf32> -> vector<16x256xf32>
    %7 = arith.addf %3, %6 : vector<16x256xf32>
    %c0_6 = arith.constant 0 : index
    %c0_7 = arith.constant 0 : index
    %8 = vector.load %arg7[%c0_6, %c0_7] : memref<16x256xf32, #tpu.memory_space<vmem>>, vector<16x256xf32>
    tpu.vector_store %arg7[%c0_6, %c0_7], %7 {strides = array<i32>} : memref<16x256xf32, #tpu.memory_space<vmem>>, vector<16x256xf32>,
    %c0_i32_8 = arith.constant 0 : i32
    %9 = arith.cmpi eq, %arg2, %c0_i32_8 : i32
    %10 = arith.extui %9 : i1 to i32
    %c0_i32_9 = arith.constant 0 : i32
    %11 = arith.cmpi ne, %10, %c0_i32_9 : i32
    scf.if %11 {
      %c0_10 = arith.constant 0 : index
      %c0_11 = arith.constant 0 : index
      %12 = vector.load %arg7[%c0_10, %c0_11] : memref<16x256xf32, #tpu.memory_space<vmem>>, vector<16x256xf32>
      %c0_12 = arith.constant 0 : index
      %c0_13 = arith.constant 0 : index
      %13 = vector.load %arg5[%c0_12, %c0_13] : memref<1x256xf32, #tpu.memory_space<vmem>>, vector<1x256xf32>
      %14 = vector.broadcast %13 : vector<1x256xf32> to vector<16x256xf32>
      %15 = arith.addf %12, %14 : vector<16x256xf32>
      %16 = arith.truncf %15 : vector<16x256xf32> to vector<16x256xbf16>
      %c0_14 = arith.constant 0 : index
      %c0_15 = arith.constant 0 : index
      %17 = vector.load %arg6[%c0_14, %c0_15] : memref<16x256xbf16, #tpu.memory_space<vmem>>, vector<16x256xbf16>
      tpu.vector_store %arg6[%c0_14, %c0_15], %16 {strides = array<i32>} : memref<16x256xbf16, #tpu.memory_space<vmem>>, vector<16x256xbf16>,
    } else {
    }
    return
  }
  func.func @transform_0(%arg0: i32, %arg1: i32, %arg2: i32) -> (i32, i32) {
    %c0_i32 = arith.constant 0 : i32
    return %arg0, %arg2 : i32, i32
  }
  func.func @transform_1(%arg0: i32, %arg1: i32, %arg2: i32) -> (i32, i32) {
    %c0_i32 = arith.constant 0 : i32
    return %arg2, %arg1 : i32, i32
  }
  func.func @transform_2(%arg0: i32, %arg1: i32, %arg2: i32) -> (i32, i32) {
    %c0_i32 = arith.constant 0 : i32
    %c0_i32_0 = arith.constant 0 : i32
    return %c0_i32, %arg1 : i32, i32
  }
  func.func @transform_3(%arg0: i32, %arg1: i32, %arg2: i32) -> (i32, i32) {
    %c0_i32 = arith.constant 0 : i32
    return %arg0, %arg1 : i32, i32
  }
}

module attributes {stable_mosaic.version = 11 : i64} {
  func.func @_linear_res_ln_kernel(%arg0: i32, %arg1: i32, %arg2: memref<16x256xbf16, #tpu.memory_space<vmem>>, %arg3: memref<256x128xbf16, #tpu.memory_space<vmem>>, %arg4: memref<1x128xf32, #tpu.memory_space<vmem>>, %arg5: memref<16x128xbf16, #tpu.memory_space<vmem>>, %arg6: memref<1x128xf32, #tpu.memory_space<vmem>>, %arg7: memref<1x128xf32, #tpu.memory_space<vmem>>, %arg8: memref<16x128xbf16, #tpu.memory_space<vmem>>, %arg9: memref<16x128xf32, #tpu.memory_space<vmem>>) attributes {dimension_semantics = [#tpu.dimension_semantics<parallel>, #tpu.dimension_semantics<arbitrary>], iteration_bounds = array<i64: 1, 1>, scalar_prefetch = 0 : i64, scratch_operands = 1 : i64, tpu.core_type = #tpu.core_type<tc>, window_params = [{transform_indices = @transform_0, window_bounds = array<i64: 16, 256>}, {transform_indices = @transform_1, window_bounds = array<i64: 256, 128>}, {pipeline_mode = #tpu.pipeline_mode<synchronous>, transform_indices = @transform_2, window_bounds = array<i64: 1, 128>}, {transform_indices = @transform_3, window_bounds = array<i64: 16, 128>}, {pipeline_mode = #tpu.pipeline_mode<synchronous>, transform_indices = @transform_4, window_bounds = array<i64: 1, 128>}, {pipeline_mode = #tpu.pipeline_mode<synchronous>, transform_indices = @transform_5, window_bounds = array<i64: 1, 128>}, {transform_indices = @transform_6, window_bounds = array<i64: 16, 128>}]} {
    %c0_i32 = arith.constant 0 : i32
    %0 = arith.cmpi eq, %arg1, %c0_i32 : i32
    %1 = arith.extui %0 : i1 to i32
    %c0_i32_0 = arith.constant 0 : i32
    %2 = arith.cmpi ne, %1, %c0_i32_0 : i32
    scf.if %2 {
      %cst_10 = arith.constant 0.000000e+00 : f32
      %12 = vector.broadcast %cst_10 : f32 to vector<16x128xf32>
      %c0_11 = arith.constant 0 : index
      %c0_12 = arith.constant 0 : index
      %13 = vector.load %arg9[%c0_11, %c0_12] : memref<16x128xf32, #tpu.memory_space<vmem>>, vector<16x128xf32>
      tpu.vector_store %arg9[%c0_11, %c0_12], %12 {strides = array<i32>} : memref<16x128xf32, #tpu.memory_space<vmem>>, vector<16x128xf32>,
    } else {
    }
    %c0 = arith.constant 0 : index
    %c0_1 = arith.constant 0 : index
    %3 = vector.load %arg9[%c0, %c0_1] : memref<16x128xf32, #tpu.memory_space<vmem>>, vector<16x128xf32>
    %c0_2 = arith.constant 0 : index
    %c0_3 = arith.constant 0 : index
    %4 = vector.load %arg2[%c0_2, %c0_3] : memref<16x256xbf16, #tpu.memory_space<vmem>>, vector<16x256xbf16>
    %c0_4 = arith.constant 0 : index
    %c0_5 = arith.constant 0 : index
    %5 = vector.load %arg3[%c0_4, %c0_5] : memref<256x128xbf16, #tpu.memory_space<vmem>>, vector<256x128xbf16>
    %cst = arith.constant dense<0.000000e+00> : vector<16x128xf32>
    %6 = tpu.matmul %4, %5, %cst {dimension_numbers = #tpu.dot_dimension_numbers<[1], [0], [0], [1], [0, 0, 1, 1], [], []>} : vector<16x256xbf16>, vector<256x128xbf16>, vector<16x128xf32> -> vector<16x128xf32>
    %7 = arith.addf %3, %6 : vector<16x128xf32>
    %c0_6 = arith.constant 0 : index
    %c0_7 = arith.constant 0 : index
    %8 = vector.load %arg9[%c0_6, %c0_7] : memref<16x128xf32, #tpu.memory_space<vmem>>, vector<16x128xf32>
    tpu.vector_store %arg9[%c0_6, %c0_7], %7 {strides = array<i32>} : memref<16x128xf32, #tpu.memory_space<vmem>>, vector<16x128xf32>,
    %c0_i32_8 = arith.constant 0 : i32
    %9 = arith.cmpi eq, %arg1, %c0_i32_8 : i32
    %10 = arith.extui %9 : i1 to i32
    %c0_i32_9 = arith.constant 0 : i32
    %11 = arith.cmpi ne, %10, %c0_i32_9 : i32
    scf.if %11 {
      %c0_10 = arith.constant 0 : index
      %c0_11 = arith.constant 0 : index
      %12 = vector.load %arg9[%c0_10, %c0_11] : memref<16x128xf32, #tpu.memory_space<vmem>>, vector<16x128xf32>
      %c0_12 = arith.constant 0 : index
      %c0_13 = arith.constant 0 : index
      %13 = vector.load %arg4[%c0_12, %c0_13] : memref<1x128xf32, #tpu.memory_space<vmem>>, vector<1x128xf32>
      %14 = vector.broadcast %13 : vector<1x128xf32> to vector<16x128xf32>
      %15 = arith.addf %12, %14 : vector<16x128xf32>
      %c0_14 = arith.constant 0 : index
      %c0_15 = arith.constant 0 : index
      %16 = vector.load %arg5[%c0_14, %c0_15] : memref<16x128xbf16, #tpu.memory_space<vmem>>, vector<16x128xbf16>
      %17 = arith.extf %16 : vector<16x128xbf16> to vector<16x128xf32>
      %18 = arith.addf %15, %17 : vector<16x128xf32>
      %cst_16 = arith.constant dense<0.000000e+00> : vector<16xf32>
      %19 = vector.multi_reduction <add>, %18, %cst_16 [1] : vector<16x128xf32> to vector<16xf32>
      %20 = vector.shape_cast %19 : vector<16xf32> to vector<16x1xf32>
      %cst_17 = arith.constant 1.280000e+02 : f32
      %21 = vector.broadcast %cst_17 : f32 to vector<16x1xf32>
      %22 = arith.divf %20, %21 : vector<16x1xf32>
      %23 = vector.broadcast %22 : vector<16x1xf32> to vector<16x128xf32>
      %24 = arith.subf %18, %23 : vector<16x128xf32>
      %25 = arith.mulf %24, %24 : vector<16x128xf32>
      %cst_18 = arith.constant dense<0.000000e+00> : vector<16xf32>
      %26 = vector.multi_reduction <add>, %25, %cst_18 [1] : vector<16x128xf32> to vector<16xf32>
      %27 = vector.shape_cast %26 : vector<16xf32> to vector<16x1xf32>
      %cst_19 = arith.constant 1.280000e+02 : f32
      %28 = vector.broadcast %cst_19 : f32 to vector<16x1xf32>
      %29 = arith.divf %27, %28 : vector<16x1xf32>
      %30 = vector.broadcast %22 : vector<16x1xf32> to vector<16x128xf32>
      %31 = arith.subf %18, %30 : vector<16x128xf32>
      %cst_20 = arith.constant 9.99999974E-6 : f32
      %32 = vector.broadcast %cst_20 : f32 to vector<16x1xf32>
      %33 = arith.addf %29, %32 : vector<16x1xf32>
      %34 = math.rsqrt %33 : vector<16x1xf32>
      %35 = vector.broadcast %34 : vector<16x1xf32> to vector<16x128xf32>
      %36 = arith.mulf %31, %35 : vector<16x128xf32>
      %c0_21 = arith.constant 0 : index
      %c0_22 = arith.constant 0 : index
      %37 = vector.load %arg6[%c0_21, %c0_22] : memref<1x128xf32, #tpu.memory_space<vmem>>, vector<1x128xf32>
      %38 = vector.broadcast %37 : vector<1x128xf32> to vector<16x128xf32>
      %39 = arith.mulf %36, %38 : vector<16x128xf32>
      %c0_23 = arith.constant 0 : index
      %c0_24 = arith.constant 0 : index
      %40 = vector.load %arg7[%c0_23, %c0_24] : memref<1x128xf32, #tpu.memory_space<vmem>>, vector<1x128xf32>
      %41 = vector.broadcast %40 : vector<1x128xf32> to vector<16x128xf32>
      %42 = arith.addf %39, %41 : vector<16x128xf32>
      %43 = arith.truncf %42 : vector<16x128xf32> to vector<16x128xbf16>
      %c0_25 = arith.constant 0 : index
      %c0_26 = arith.constant 0 : index
      %44 = vector.load %arg8[%c0_25, %c0_26] : memref<16x128xbf16, #tpu.memory_space<vmem>>, vector<16x128xbf16>
      tpu.vector_store %arg8[%c0_25, %c0_26], %43 {strides = array<i32>} : memref<16x128xbf16, #tpu.memory_space<vmem>>, vector<16x128xbf16>,
    } else {
    }
    return
  }
  func.func @transform_0(%arg0: i32, %arg1: i32) -> (i32, i32) {
    %c0_i32 = arith.constant 0 : i32
    return %arg0, %arg1 : i32, i32
  }
  func.func @transform_1(%arg0: i32, %arg1: i32) -> (i32, i32) {
    %c0_i32 = arith.constant 0 : i32
    %c0_i32_0 = arith.constant 0 : i32
    return %arg1, %c0_i32 : i32, i32
  }
  func.func @transform_2(%arg0: i32, %arg1: i32) -> (i32, i32) {
    %c0_i32 = arith.constant 0 : i32
    %c0_i32_0 = arith.constant 0 : i32
    %c0_i32_1 = arith.constant 0 : i32
    return %c0_i32, %c0_i32_0 : i32, i32
  }
  func.func @transform_3(%arg0: i32, %arg1: i32) -> (i32, i32) {
    %c0_i32 = arith.constant 0 : i32
    %c0_i32_0 = arith.constant 0 : i32
    return %arg0, %c0_i32 : i32, i32
  }
  func.func @transform_4(%arg0: i32, %arg1: i32) -> (i32, i32) {
    %c0_i32 = arith.constant 0 : i32
    %c0_i32_0 = arith.constant 0 : i32
    %c0_i32_1 = arith.constant 0 : i32
    return %c0_i32, %c0_i32_0 : i32, i32
  }
  func.func @transform_5(%arg0: i32, %arg1: i32) -> (i32, i32) {
    %c0_i32 = arith.constant 0 : i32
    %c0_i32_0 = arith.constant 0 : i32
    %c0_i32_1 = arith.constant 0 : i32
    return %c0_i32, %c0_i32_0 : i32, i32
  }
  func.func @transform_6(%arg0: i32, %arg1: i32) -> (i32, i32) {
    %c0_i32 = arith.constant 0 : i32
    %c0_i32_0 = arith.constant 0 : i32
    return %arg0, %c0_i32 : i32, i32
  }
}

module attributes {stable_mosaic.version = 11 : i64} {
  func.func @_linear_kernel(%arg0: i32, %arg1: i32, %arg2: i32, %arg3: memref<16x128xbf16, #tpu.memory_space<vmem>>, %arg4: memref<128x256xbf16, #tpu.memory_space<vmem>>, %arg5: memref<1x256xf32, #tpu.memory_space<vmem>>, %arg6: memref<16x256xf32, #tpu.memory_space<vmem>>, %arg7: memref<16x256xf32, #tpu.memory_space<vmem>>) attributes {dimension_semantics = [#tpu.dimension_semantics<parallel>, #tpu.dimension_semantics<parallel>, #tpu.dimension_semantics<arbitrary>], iteration_bounds = array<i64: 1, 1, 1>, scalar_prefetch = 0 : i64, scratch_operands = 1 : i64, tpu.core_type = #tpu.core_type<tc>, window_params = [{transform_indices = @transform_0, window_bounds = array<i64: 16, 128>}, {transform_indices = @transform_1, window_bounds = array<i64: 128, 256>}, {transform_indices = @transform_2, window_bounds = array<i64: 1, 256>}, {transform_indices = @transform_3, window_bounds = array<i64: 16, 256>}]} {
    %c0_i32 = arith.constant 0 : i32
    %0 = arith.cmpi eq, %arg2, %c0_i32 : i32
    %1 = arith.extui %0 : i1 to i32
    %c0_i32_0 = arith.constant 0 : i32
    %2 = arith.cmpi ne, %1, %c0_i32_0 : i32
    scf.if %2 {
      %cst_10 = arith.constant 0.000000e+00 : f32
      %12 = vector.broadcast %cst_10 : f32 to vector<16x256xf32>
      %c0_11 = arith.constant 0 : index
      %c0_12 = arith.constant 0 : index
      %13 = vector.load %arg7[%c0_11, %c0_12] : memref<16x256xf32, #tpu.memory_space<vmem>>, vector<16x256xf32>
      tpu.vector_store %arg7[%c0_11, %c0_12], %12 {strides = array<i32>} : memref<16x256xf32, #tpu.memory_space<vmem>>, vector<16x256xf32>,
    } else {
    }
    %c0 = arith.constant 0 : index
    %c0_1 = arith.constant 0 : index
    %3 = vector.load %arg7[%c0, %c0_1] : memref<16x256xf32, #tpu.memory_space<vmem>>, vector<16x256xf32>
    %c0_2 = arith.constant 0 : index
    %c0_3 = arith.constant 0 : index
    %4 = vector.load %arg3[%c0_2, %c0_3] : memref<16x128xbf16, #tpu.memory_space<vmem>>, vector<16x128xbf16>
    %c0_4 = arith.constant 0 : index
    %c0_5 = arith.constant 0 : index
    %5 = vector.load %arg4[%c0_4, %c0_5] : memref<128x256xbf16, #tpu.memory_space<vmem>>, vector<128x256xbf16>
    %cst = arith.constant dense<0.000000e+00> : vector<16x256xf32>
    %6 = tpu.matmul %4, %5, %cst {dimension_numbers = #tpu.dot_dimension_numbers<[1], [0], [0], [1], [0, 0, 1, 1], [], []>} : vector<16x128xbf16>, vector<128x256xbf16>, vector<16x256xf32> -> vector<16x256xf32>
    %7 = arith.addf %3, %6 : vector<16x256xf32>
    %c0_6 = arith.constant 0 : index
    %c0_7 = arith.constant 0 : index
    %8 = vector.load %arg7[%c0_6, %c0_7] : memref<16x256xf32, #tpu.memory_space<vmem>>, vector<16x256xf32>
    tpu.vector_store %arg7[%c0_6, %c0_7], %7 {strides = array<i32>} : memref<16x256xf32, #tpu.memory_space<vmem>>, vector<16x256xf32>,
    %c0_i32_8 = arith.constant 0 : i32
    %9 = arith.cmpi eq, %arg2, %c0_i32_8 : i32
    %10 = arith.extui %9 : i1 to i32
    %c0_i32_9 = arith.constant 0 : i32
    %11 = arith.cmpi ne, %10, %c0_i32_9 : i32
    scf.if %11 {
      %c0_10 = arith.constant 0 : index
      %c0_11 = arith.constant 0 : index
      %12 = vector.load %arg7[%c0_10, %c0_11] : memref<16x256xf32, #tpu.memory_space<vmem>>, vector<16x256xf32>
      %c0_12 = arith.constant 0 : index
      %c0_13 = arith.constant 0 : index
      %13 = vector.load %arg5[%c0_12, %c0_13] : memref<1x256xf32, #tpu.memory_space<vmem>>, vector<1x256xf32>
      %14 = vector.broadcast %13 : vector<1x256xf32> to vector<16x256xf32>
      %15 = arith.addf %12, %14 : vector<16x256xf32>
      %c0_14 = arith.constant 0 : index
      %c0_15 = arith.constant 0 : index
      %16 = vector.load %arg6[%c0_14, %c0_15] : memref<16x256xf32, #tpu.memory_space<vmem>>, vector<16x256xf32>
      tpu.vector_store %arg6[%c0_14, %c0_15], %15 {strides = array<i32>} : memref<16x256xf32, #tpu.memory_space<vmem>>, vector<16x256xf32>,
    } else {
    }
    return
  }
  func.func @transform_0(%arg0: i32, %arg1: i32, %arg2: i32) -> (i32, i32) {
    %c0_i32 = arith.constant 0 : i32
    return %arg0, %arg2 : i32, i32
  }
  func.func @transform_1(%arg0: i32, %arg1: i32, %arg2: i32) -> (i32, i32) {
    %c0_i32 = arith.constant 0 : i32
    return %arg2, %arg1 : i32, i32
  }
  func.func @transform_2(%arg0: i32, %arg1: i32, %arg2: i32) -> (i32, i32) {
    %c0_i32 = arith.constant 0 : i32
    %c0_i32_0 = arith.constant 0 : i32
    return %c0_i32, %arg1 : i32, i32
  }
  func.func @transform_3(%arg0: i32, %arg1: i32, %arg2: i32) -> (i32, i32) {
    %c0_i32 = arith.constant 0 : i32
    return %arg0, %arg1 : i32, i32
  }
}

</mosaic_0001>

<llo_original>
// kernel: decoder_forward.21
$region0: #{decoder_forward.21}
  #allocation0 [shape = 'u32[]', space=smem, size = 0x4, offset = 0x4, fixed_abs, tag = 'smem constant byte address 0x4 - core index']
  #allocation1 [shape = 'u32[144,128]{1,0:T(1,128)}', space=vmem, size = 0x12000, scoped, tag = 'internal scratch']
  #allocation2 [shape = 'f32[16,128]{1,0:T(8,128)}', space=vmem, size = 0x2000, scoped, tag = 'scratch operand']
  %s0 = inlined_call_operand.vmem [shape: bf16[16,128], index: 0, kind: input, shape index: {}]
  %s1 = inlined_call_operand.vmem [shape: bf16[128,128], index: 1, kind: input, shape index: {}]
  %s2 = inlined_call_operand.vmem [shape: f32[1,128], index: 2, kind: input, shape index: {}]
  %s3 = inlined_call_operand.vmem [shape: bf16[16,128], index: 3, kind: input, shape index: {}]
  %s4 = inlined_call_operand.vmem [shape: f32[1,128], index: 4, kind: input, shape index: {}]
  %s5 = inlined_call_operand.vmem [shape: f32[1,128], index: 5, kind: input, shape index: {}]
  %s6 = inlined_call_operand.vmem [shape: bf16[16,128], index: 6, kind: output, shape index: {}]
  %s7 = sld [smem:[#allocation0]]
  $region42: #{decoder_forward.21} parent=0
    _
  %s9 = ssub.s32 1, %s7
  %s10 = scalar_select 0, %s9, %s7
  // Predicated region
  $region2: #{decoder_forward.21} parent=0 // pred_check
    _
  $region3: #{decoder_forward.21} parent=0 // pred_check_branch
    %12 = sbr.rel (0) target = $region5
  $region4: #{decoder_forward.21} parent=0 // pred_region
    _
  $region5: #{decoder_forward.21} parent=0 // pred_fallthru
    _
  // Predicated region
  $region6: #{decoder_forward.21} parent=0 // pred_check
    _
  $region7: #{decoder_forward.21} parent=0 // pred_check_branch
    %14 = sbr.rel (0) target = $region9
  $region8: #{decoder_forward.21} parent=0 // pred_region
    _
  $region9: #{decoder_forward.21} parent=0 // pred_fallthru
    _
  // Predicated region
  $region10: #{decoder_forward.21} parent=0 // pred_check
    _
  $region11: #{decoder_forward.21} parent=0 // pred_check_branch
    %16 = sbr.rel (0) target = $region13
  $region12: #{decoder_forward.21} parent=0 // pred_region
    _
  $region13: #{decoder_forward.21} parent=0 // pred_fallthru
    _
  // Predicated region
  $region14: #{decoder_forward.21} parent=0 // pred_check
    _
  $region15: #{decoder_forward.21} parent=0 // pred_check_branch
    %18 = sbr.rel (0) target = $region17
  $region16: #{decoder_forward.21} parent=0 // pred_region
    _
  $region17: #{decoder_forward.21} parent=0 // pred_fallthru
    _
  // Predicated region
  $region18: #{decoder_forward.21} parent=0 // pred_check
    _
  $region19: #{decoder_forward.21} parent=0 // pred_check_branch
    %20 = sbr.rel (0) target = $region21
  $region20: #{decoder_forward.21} parent=0 // pred_region
    _
  $region21: #{decoder_forward.21} parent=0 // pred_fallthru
    _
  // Predicated region
  $region22: #{decoder_forward.21} parent=0 // pred_check
    _
  $region23: #{decoder_forward.21} parent=0 // pred_check_branch
    %22 = sbr.rel (0) target = $region25
  $region24: #{decoder_forward.21} parent=0 // pred_region
    _
  $region25: #{decoder_forward.21} parent=0 // pred_fallthru
    _
  %p24 = scmp.eq.s32.totalorder 0, 0
  // Predicated region
  $region26: #{decoder_forward.21} parent=0 // pred_check
    %p25 = pneg %p24
  $region27: #{decoder_forward.21} parent=0 // pred_check_branch
    %27 = sbr.rel (%p25) target = $region29
  $region28: #{decoder_forward.21} parent=0 // pred_region
    %28 = vst [vmem:[#allocation2] sm:$0xff] 0.0
    %29 = vst [vmem:[#allocation2 + $0x8] sm:$0xff] 0.0
  $region29: #{decoder_forward.21} parent=0 // pred_fallthru
    _
  %v30 = vld [vmem:[#allocation2] sm:$0xff]
  %v31 = vld [vmem:[#allocation2 + $0x8] sm:$0xff]
  %v32 = vld [vmem:[%s0] sm:$0xf]
  %v33 = vld [vmem:[%s0 + $0x4] sm:$0xf]
  %v34 = vld [vmem:[%s1] sm:$0xf]
  %v35 = vld [vmem:[%s1 + $0x4] sm:$0xf]
  %v36 = vld [vmem:[%s1 + $0x8] sm:$0xf]
  %v37 = vld [vmem:[%s1 + $0xc] sm:$0xf]
  %v38 = vld [vmem:[%s1 + $0x10] sm:$0xf]
  %v39 = vld [vmem:[%s1 + $0x14] sm:$0xf]
  %v40 = vld [vmem:[%s1 + $0x18] sm:$0xf]
  %v41 = vld [vmem:[%s1 + $0x1c] sm:$0xf]
  %v42 = vld [vmem:[%s1 + $0x20] sm:$0xf]
  %v43 = vld [vmem:[%s1 + $0x24] sm:$0xf]
  %v44 = vld [vmem:[%s1 + $0x28] sm:$0xf]
  %v45 = vld [vmem:[%s1 + $0x2c] sm:$0xf]
  %v46 = vld [vmem:[%s1 + $0x30] sm:$0xf]
  %v47 = vld [vmem:[%s1 + $0x34] sm:$0xf]
  %v48 = vld [vmem:[%s1 + $0x38] sm:$0xf]
  %v49 = vld [vmem:[%s1 + $0x3c] sm:$0xf]
  %v52 = vunpack.c.l.b16 %v32
  %v53 = vunpack.c.l.b16 %v33
  %v54 = vpack.c.b16 %v53, %v52
  %v72 = vunpack.c.l.b16 %v34
  %v73 = vunpack.c.l.b16 %v35
  %v74 = vunpack.c.l.b16 %v36
  %v75 = vunpack.c.l.b16 %v37
  %v76 = vunpack.c.l.b16 %v38
  %v77 = vunpack.c.l.b16 %v39
  %v78 = vunpack.c.l.b16 %v40
  %v79 = vunpack.c.l.b16 %v41
  %v80 = vunpack.c.l.b16 %v42
  %v81 = vunpack.c.l.b16 %v43
  %v82 = vunpack.c.l.b16 %v44
  %v83 = vunpack.c.l.b16 %v45
  %v84 = vunpack.c.l.b16 %v46
  %v85 = vunpack.c.l.b16 %v47
  %v86 = vunpack.c.l.b16 %v48
  %v87 = vunpack.c.l.b16 %v49
  %v88 = vpack.c.b16 %v73, %v72
  %v89 = vpack.c.b16 %v75, %v74
  %v90 = vpack.c.b16 %v77, %v76
  %v91 = vpack.c.b16 %v79, %v78
  %v92 = vpack.c.b16 %v81, %v80
  %v93 = vpack.c.b16 %v83, %v82
  %v94 = vpack.c.b16 %v85, %v84
  %v95 = vpack.c.b16 %v87, %v86
  %104 = vmatprep.subr.bf16.mxu0 0
  %105 = vmatpush1.bf16.msra.mxu0 %v88
  %106 = vmatprep.subr.bf16.mxu0 0
  %107 = vmatpush1.bf16.msra.mxu0 %v89
  %108 = vmatprep.subr.bf16.mxu0 0
  %109 = vmatpush1.bf16.msra.mxu0 %v90
  %110 = vmatprep.subr.bf16.mxu0 0
  %111 = vmatpush1.bf16.msra.mxu0 %v91
  %112 = vmatprep.subr.bf16.mxu0 0
  %113 = vmatpush1.bf16.msra.mxu0 %v92
  %114 = vmatprep.subr.bf16.mxu0 0
  %115 = vmatpush1.bf16.msra.mxu0 %v93
  %116 = vmatprep.subr.bf16.mxu0 0
  %117 = vmatpush1.bf16.msra.mxu0 %v94
  %118 = vmatprep.subr.bf16.mxu0 0
  %119 = vmatpush1.bf16.msra.mxu0 %v95
  %120 = vmatprep.subr.bf16.mxu0 0
  %121 = vmatpush1.bf16.msra.mxu0 0
  %122 = vmatprep.subr.bf16.mxu0 0
  %123 = vmatpush1.bf16.msra.mxu0 0
  %124 = vmatprep.subr.bf16.mxu0 0
  %125 = vmatpush1.bf16.msra.mxu0 0
  %126 = vmatprep.subr.bf16.mxu0 0
  %127 = vmatpush1.bf16.msra.mxu0 0
  %128 = vmatprep.subr.bf16.mxu0 0
  %129 = vmatpush1.bf16.msra.mxu0 0
  %130 = vmatprep.subr.bf16.mxu0 0
  %131 = vmatpush1.bf16.msra.mxu0 0
  %132 = vmatprep.subr.bf16.mxu0 0
  %133 = vmatpush1.bf16.msra.mxu0 0
  %134 = vmatprep.subr.bf16.mxu0 0
  %135 = vmatpush1.bf16.msra.mxu0 0
  %136 = vmatprep.mubr.bf16.mxu0 0
  %137 = vmatmul.mubr.bf16.gmra.mrb[0].mxu0 %v54
  %v138 = vpop.f32.mrb[0].mxu0
  %v139 = vadd.f32 0.0, %v138
  %v140 = vpop.f32.mrb[0].mxu0
  %v141 = vpop.f32.mrb[0].mxu0
  %v142 = vadd.f32 0.0, %v141
  %v143 = vpop.f32.mrb[0].mxu0
  %144 = vdwg.mxu0
  %v145 = vadd.f32 %v30, %v139
  %v146 = vadd.f32 %v31, %v142
  %147 = vst [vmem:[#allocation2] sm:$0xff] %v145
  %148 = vst [vmem:[#allocation2 + $0x8] sm:$0xff] %v146
  // Predicated region
  $region30: #{decoder_forward.21} parent=0 // pred_check
    %p149 = pneg %p24
  $region31: #{decoder_forward.21} parent=0 // pred_check_branch
    %151 = sbr.rel (%p149) target = $region33
  $region32: #{decoder_forward.21} parent=0 // pred_region
    %v152 = vld [vmem:[#allocation2] sm:$0xff]
    %v153 = vld [vmem:[#allocation2 + $0x8] sm:$0xff]
    %v154 = vld [vmem:[%s2] sm:$0x1]
    %v156 = vlaneseq
    %v157 = vshrl.u32 %v156, 7
    %v158 = vsub.s32 0, %v157
    %v159 = vrot.slane %v154, %v158
    %v161 = vadd.f32 %v152, %v159
    %v162 = vadd.f32 %v153, %v159
    %v163 = vld [vmem:[%s3] sm:$0xf]
    %v164 = vld [vmem:[%s3 + $0x4] sm:$0xf]
    %v165 = vunpack.c.l.bf16 %v163
    %v166 = vunpack.c.l.bf16 %v164
    %v167 = vadd.f32 %v161, %v165
    %v168 = vadd.f32 %v162, %v166
    %169 = vadd.xlane.f32.xlu0 %v167
    %v170 = vpop.xlane.xlu0 %169
    %171 = vadd.xlane.f32.xlu0 %v168
    %v172 = vpop.xlane.xlu0 %171
    %v173 = vrcp.pop 128.0
    %v174 = vmul.f32 %v170, %v173
    %v175 = vmul.f32 %v172, %v173
    %v176 = vsub.f32 %v167, %v174
    %v177 = vsub.f32 %v168, %v175
    %v178 = vmul.f32 %v176, %v176
    %v179 = vmul.f32 %v177, %v177
    %180 = vadd.xlane.f32.xlu0 %v178
    %v181 = vpop.xlane.xlu0 %180
    %182 = vadd.xlane.f32.xlu0 %v179
    %v183 = vpop.xlane.xlu0 %182
    %v184 = vmul.f32 %v181, %v173
    %v185 = vmul.f32 %v183, %v173
    %v186 = vadd.f32 %v184, 1e-05
    %v187 = vadd.f32 %v185, 1e-05
    %v188 = vrsqrt.pop %v186
    %v189 = vrsqrt.pop %v187
    %v190 = vmul.f32 %v176, %v188
    %v191 = vmul.f32 %v177, %v189
    %v192 = vld [vmem:[%s4] sm:$0x1]
    %v194 = vlaneseq
    %v195 = vshrl.u32 %v194, 7
    %v196 = vsub.s32 0, %v195
    %v197 = vrot.slane %v192, %v196
    %v199 = vmul.f32 %v190, %v197
    %v200 = vmul.f32 %v191, %v197
    %v201 = vld [vmem:[%s5] sm:$0x1]
    %v203 = vlaneseq
    %v204 = vshrl.u32 %v203, 7
    %v205 = vsub.s32 0, %v204
    %v206 = vrot.slane %v201, %v205
    %v208 = vadd.f32 %v199, %v206
    %v209 = vadd.f32 %v200, %v206
    %v210 = vpack.c.bf16 %v209, %v208
    %v212 = vunpack.c.l.b16 %v210
    %v213 = vunpack.c.h.b16 %v210
    %v214 = vpack.c.b16 %v212, %v212
    %v215 = vpack.c.b16 %v213, %v213
    %218 = vst [vmem:[%s6] sm:$0xf] %v214
    %219 = vst [vmem:[%s6 + $0x4] sm:$0xf] %v215
  $region33: #{decoder_forward.21} parent=0 // pred_fallthru
    _
  // Predicated region
  $region34: #{decoder_forward.21} parent=0 // pred_check
    _
  $region35: #{decoder_forward.21} parent=0 // pred_check_branch
    %221 = sbr.rel (0) target = $region37
  $region36: #{decoder_forward.21} parent=0 // pred_region
    _
  $region37: #{decoder_forward.21} parent=0 // pred_fallthru
    _
  // Predicated region
  $region38: #{decoder_forward.21} parent=0 // pred_check
    _
  $region39: #{decoder_forward.21} parent=0 // pred_check_branch
    %223 = sbr.rel (0) target = $region41
  $region40: #{decoder_forward.21} parent=0 // pred_region
    _
  $region41: #{decoder_forward.21} parent=0 // pred_fallthru
    _

// kernel: decoder_forward.22
$region0: #{decoder_forward.22}
  #allocation0 [shape = 'u32[]', space=smem, size = 0x4, offset = 0x4, fixed_abs, tag = 'smem constant byte address 0x4 - core index']
  #allocation1 [shape = 'u32[144,128]{1,0:T(1,128)}', space=vmem, size = 0x12000, scoped, tag = 'internal scratch']
  #allocation2 [shape = 'f32[16,128]{1,0:T(8,128)}', space=vmem, size = 0x2000, scoped, tag = 'scratch operand']
  %s0 = inlined_call_operand.vmem [shape: bf16[16,128], index: 0, kind: input, shape index: {}]
  %s1 = inlined_call_operand.vmem [shape: bf16[128,128], index: 1, kind: input, shape index: {}]
  %s2 = inlined_call_operand.vmem [shape: f32[1,128], index: 2, kind: input, shape index: {}]
  %s3 = inlined_call_operand.vmem [shape: bf16[16,128], index: 3, kind: output, shape index: {}]
  %s4 = sld [smem:[#allocation0]]
  $region30: #{decoder_forward.22} parent=0
    _
  %s6 = ssub.s32 1, %s4
  %s7 = scalar_select 0, %s6, %s4
  // Predicated region
  $region2: #{decoder_forward.22} parent=0 // pred_check
    _
  $region3: #{decoder_forward.22} parent=0 // pred_check_branch
    %9 = sbr.rel (0) target = $region5
  $region4: #{decoder_forward.22} parent=0 // pred_region
    _
  $region5: #{decoder_forward.22} parent=0 // pred_fallthru
    _
  // Predicated region
  $region6: #{decoder_forward.22} parent=0 // pred_check
    _
  $region7: #{decoder_forward.22} parent=0 // pred_check_branch
    %11 = sbr.rel (0) target = $region9
  $region8: #{decoder_forward.22} parent=0 // pred_region
    _
  $region9: #{decoder_forward.22} parent=0 // pred_fallthru
    _
  // Predicated region
  $region10: #{decoder_forward.22} parent=0 // pred_check
    _
  $region11: #{decoder_forward.22} parent=0 // pred_check_branch
    %13 = sbr.rel (0) target = $region13
  $region12: #{decoder_forward.22} parent=0 // pred_region
    _
  $region13: #{decoder_forward.22} parent=0 // pred_fallthru
    _
  %p15 = scmp.eq.s32.totalorder 0, 0
  // Predicated region
  $region14: #{decoder_forward.22} parent=0 // pred_check
    %p16 = pneg %p15
  $region15: #{decoder_forward.22} parent=0 // pred_check_branch
    %18 = sbr.rel (%p16) target = $region17
  $region16: #{decoder_forward.22} parent=0 // pred_region
    %19 = vst [vmem:[#allocation2] sm:$0xff] 0.0
    %20 = vst [vmem:[#allocation2 + $0x8] sm:$0xff] 0.0
  $region17: #{decoder_forward.22} parent=0 // pred_fallthru
    _
  %v21 = vld [vmem:[#allocation2] sm:$0xff]
  %v22 = vld [vmem:[#allocation2 + $0x8] sm:$0xff]
  %v23 = vld [vmem:[%s0] sm:$0xf]
  %v24 = vld [vmem:[%s0 + $0x4] sm:$0xf]
  %v25 = vld [vmem:[%s1] sm:$0xf]
  %v26 = vld [vmem:[%s1 + $0x4] sm:$0xf]
  %v27 = vld [vmem:[%s1 + $0x8] sm:$0xf]
  %v28 = vld [vmem:[%s1 + $0xc] sm:$0xf]
  %v29 = vld [vmem:[%s1 + $0x10] sm:$0xf]
  %v30 = vld [vmem:[%s1 + $0x14] sm:$0xf]
  %v31 = vld [vmem:[%s1 + $0x18] sm:$0xf]
  %v32 = vld [vmem:[%s1 + $0x1c] sm:$0xf]
  %v33 = vld [vmem:[%s1 + $0x20] sm:$0xf]
  %v34 = vld [vmem:[%s1 + $0x24] sm:$0xf]
  %v35 = vld [vmem:[%s1 + $0x28] sm:$0xf]
  %v36 = vld [vmem:[%s1 + $0x2c] sm:$0xf]
  %v37 = vld [vmem:[%s1 + $0x30] sm:$0xf]
  %v38 = vld [vmem:[%s1 + $0x34] sm:$0xf]
  %v39 = vld [vmem:[%s1 + $0x38] sm:$0xf]
  %v40 = vld [vmem:[%s1 + $0x3c] sm:$0xf]
  %v43 = vunpack.c.l.b16 %v23
  %v44 = vunpack.c.l.b16 %v24
  %v45 = vpack.c.b16 %v44, %v43
  %v63 = vunpack.c.l.b16 %v25
  %v64 = vunpack.c.l.b16 %v26
  %v65 = vunpack.c.l.b16 %v27
  %v66 = vunpack.c.l.b16 %v28
  %v67 = vunpack.c.l.b16 %v29
  %v68 = vunpack.c.l.b16 %v30
  %v69 = vunpack.c.l.b16 %v31
  %v70 = vunpack.c.l.b16 %v32
  %v71 = vunpack.c.l.b16 %v33
  %v72 = vunpack.c.l.b16 %v34
  %v73 = vunpack.c.l.b16 %v35
  %v74 = vunpack.c.l.b16 %v36
  %v75 = vunpack.c.l.b16 %v37
  %v76 = vunpack.c.l.b16 %v38
  %v77 = vunpack.c.l.b16 %v39
  %v78 = vunpack.c.l.b16 %v40
  %v79 = vpack.c.b16 %v64, %v63
  %v80 = vpack.c.b16 %v66, %v65
  %v81 = vpack.c.b16 %v68, %v67
  %v82 = vpack.c.b16 %v70, %v69
  %v83 = vpack.c.b16 %v72, %v71
  %v84 = vpack.c.b16 %v74, %v73
  %v85 = vpack.c.b16 %v76, %v75
  %v86 = vpack.c.b16 %v78, %v77
  %95 = vmatprep.subr.bf16.mxu0 0
  %96 = vmatpush1.bf16.msra.mxu0 %v79
  %97 = vmatprep.subr.bf16.mxu0 0
  %98 = vmatpush1.bf16.msra.mxu0 %v80
  %99 = vmatprep.subr.bf16.mxu0 0
  %100 = vmatpush1.bf16.msra.mxu0 %v81
  %101 = vmatprep.subr.bf16.mxu0 0
  %102 = vmatpush1.bf16.msra.mxu0 %v82
  %103 = vmatprep.subr.bf16.mxu0 0
  %104 = vmatpush1.bf16.msra.mxu0 %v83
  %105 = vmatprep.subr.bf16.mxu0 0
  %106 = vmatpush1.bf16.msra.mxu0 %v84
  %107 = vmatprep.subr.bf16.mxu0 0
  %108 = vmatpush1.bf16.msra.mxu0 %v85
  %109 = vmatprep.subr.bf16.mxu0 0
  %110 = vmatpush1.bf16.msra.mxu0 %v86
  %111 = vmatprep.subr.bf16.mxu0 0
  %112 = vmatpush1.bf16.msra.mxu0 0
  %113 = vmatprep.subr.bf16.mxu0 0
  %114 = vmatpush1.bf16.msra.mxu0 0
  %115 = vmatprep.subr.bf16.mxu0 0
  %116 = vmatpush1.bf16.msra.mxu0 0
  %117 = vmatprep.subr.bf16.mxu0 0
  %118 = vmatpush1.bf16.msra.mxu0 0
  %119 = vmatprep.subr.bf16.mxu0 0
  %120 = vmatpush1.bf16.msra.mxu0 0
  %121 = vmatprep.subr.bf16.mxu0 0
  %122 = vmatpush1.bf16.msra.mxu0 0
  %123 = vmatprep.subr.bf16.mxu0 0
  %124 = vmatpush1.bf16.msra.mxu0 0
  %125 = vmatprep.subr.bf16.mxu0 0
  %126 = vmatpush1.bf16.msra.mxu0 0
  %127 = vmatprep.mubr.bf16.mxu0 0
  %128 = vmatmul.mubr.bf16.gmra.mrb[0].mxu0 %v45
  %v129 = vpop.f32.mrb[0].mxu0
  %v130 = vadd.f32 0.0, %v129
  %v131 = vpop.f32.mrb[0].mxu0
  %v132 = vpop.f32.mrb[0].mxu0
  %v133 = vadd.f32 0.0, %v132
  %v134 = vpop.f32.mrb[0].mxu0
  %135 = vdwg.mxu0
  %v136 = vadd.f32 %v21, %v130
  %v137 = vadd.f32 %v22, %v133
  %138 = vst [vmem:[#allocation2] sm:$0xff] %v136
  %139 = vst [vmem:[#allocation2 + $0x8] sm:$0xff] %v137
  // Predicated region
  $region18: #{decoder_forward.22} parent=0 // pred_check
    %p140 = pneg %p15
  $region19: #{decoder_forward.22} parent=0 // pred_check_branch
    %142 = sbr.rel (%p140) target = $region21
  $region20: #{decoder_forward.22} parent=0 // pred_region
    %v143 = vld [vmem:[#allocation2] sm:$0xff]
    %v144 = vld [vmem:[#allocation2 + $0x8] sm:$0xff]
    %v145 = vld [vmem:[%s2] sm:$0x1]
    %v147 = vlaneseq
    %v148 = vshrl.u32 %v147, 7
    %v149 = vsub.s32 0, %v148
    %v150 = vrot.slane %v145, %v149
    %v152 = vadd.f32 %v143, %v150
    %v153 = vadd.f32 %v144, %v150
    %v154 = vpack.c.bf16 %v153, %v152
    %v156 = vunpack.c.l.b16 %v154
    %v157 = vunpack.c.h.b16 %v154
    %v158 = vpack.c.b16 %v156, %v156
    %v159 = vpack.c.b16 %v157, %v157
    %162 = vst [vmem:[%s3] sm:$0xf] %v158
    %163 = vst [vmem:[%s3 + $0x4] sm:$0xf] %v159
  $region21: #{decoder_forward.22} parent=0 // pred_fallthru
    _
  // Predicated region
  $region22: #{decoder_forward.22} parent=0 // pred_check
    _
  $region23: #{decoder_forward.22} parent=0 // pred_check_branch
    %165 = sbr.rel (0) target = $region25
  $region24: #{decoder_forward.22} parent=0 // pred_region
    _
  $region25: #{decoder_forward.22} parent=0 // pred_fallthru
    _
  // Predicated region
  $region26: #{decoder_forward.22} parent=0 // pred_check
    _
  $region27: #{decoder_forward.22} parent=0 // pred_check_branch
    %167 = sbr.rel (0) target = $region29
  $region28: #{decoder_forward.22} parent=0 // pred_region
    _
  $region29: #{decoder_forward.22} parent=0 // pred_fallthru
    _

// kernel: decoder_forward.19
$region0: #{decoder_forward.19}
  #allocation0 [shape = 'u32[]', space=smem, size = 0x4, offset = 0x4, fixed_abs, tag = 'smem constant byte address 0x4 - core index']
  #allocation1 [shape = 'u32[144,128]{1,0:T(1,128)}', space=vmem, size = 0x12000, scoped, tag = 'internal scratch']
  #allocation2 [shape = 'f32[16,384]{1,0:T(8,128)}', space=vmem, size = 0x6000, scoped, tag = 'scratch operand']
  %s0 = inlined_call_operand.vmem [shape: bf16[16,128], index: 0, kind: input, shape index: {}]
  %s1 = inlined_call_operand.vmem [shape: bf16[128,384], index: 1, kind: input, shape index: {}]
  %s2 = inlined_call_operand.vmem [shape: f32[1,384], index: 2, kind: input, shape index: {}]
  %s3 = inlined_call_operand.vmem [shape: bf16[16,384], index: 3, kind: output, shape index: {}]
  %s4 = sld [smem:[#allocation0]]
  $region30: #{decoder_forward.19} parent=0
    _
  %s6 = ssub.s32 1, %s4
  %s7 = scalar_select 0, %s6, %s4
  // Predicated region
  $region2: #{decoder_forward.19} parent=0 // pred_check
    _
  $region3: #{decoder_forward.19} parent=0 // pred_check_branch
    %9 = sbr.rel (0) target = $region5
  $region4: #{decoder_forward.19} parent=0 // pred_region
    _
  $region5: #{decoder_forward.19} parent=0 // pred_fallthru
    _
  // Predicated region
  $region6: #{decoder_forward.19} parent=0 // pred_check
    _
  $region7: #{decoder_forward.19} parent=0 // pred_check_branch
    %11 = sbr.rel (0) target = $region9
  $region8: #{decoder_forward.19} parent=0 // pred_region
    _
  $region9: #{decoder_forward.19} parent=0 // pred_fallthru
    _
  // Predicated region
  $region10: #{decoder_forward.19} parent=0 // pred_check
    _
  $region11: #{decoder_forward.19} parent=0 // pred_check_branch
    %13 = sbr.rel (0) target = $region13
  $region12: #{decoder_forward.19} parent=0 // pred_region
    _
  $region13: #{decoder_forward.19} parent=0 // pred_fallthru
    _
  %p15 = scmp.eq.s32.totalorder 0, 0
  // Predicated region
  $region14: #{decoder_forward.19} parent=0 // pred_check
    %p16 = pneg %p15
  $region15: #{decoder_forward.19} parent=0 // pred_check_branch
    %18 = sbr.rel (%p16) target = $region17
  $region16: #{decoder_forward.19} parent=0 // pred_region
    %19 = vst [vmem:[#allocation2] sm:$0xff] 0.0
    %20 = vst [vmem:[#allocation2 + $0x8] sm:$0xff] 0.0
    %21 = vst [vmem:[#allocation2 + $0x10] sm:$0xff] 0.0
    %22 = vst [vmem:[#allocation2 + $0x18] sm:$0xff] 0.0
    %23 = vst [vmem:[#allocation2 + $0x20] sm:$0xff] 0.0
    %24 = vst [vmem:[#allocation2 + $0x28] sm:$0xff] 0.0
  $region17: #{decoder_forward.19} parent=0 // pred_fallthru
    _
  %v25 = vld [vmem:[#allocation2] sm:$0xff]
  %v26 = vld [vmem:[#allocation2 + $0x8] sm:$0xff]
  %v27 = vld [vmem:[#allocation2 + $0x10] sm:$0xff]
  %v28 = vld [vmem:[#allocation2 + $0x18] sm:$0xff]
  %v29 = vld [vmem:[#allocation2 + $0x20] sm:$0xff]
  %v30 = vld [vmem:[#allocation2 + $0x28] sm:$0xff]
  %v31 = vld [vmem:[%s0] sm:$0xf]
  %v32 = vld [vmem:[%s0 + $0x4] sm:$0xf]
  %v33 = vld [vmem:[%s1] sm:$0xff]
  %v34 = vld [vmem:[%s1 + $0x8] sm:$0xf]
  %v35 = vld [vmem:[%s1 + $0xc] sm:$0xff]
  %v36 = vld [vmem:[%s1 + $0x14] sm:$0xf]
  %v37 = vld [vmem:[%s1 + $0x18] sm:$0xff]
  %v38 = vld [vmem:[%s1 + $0x20] sm:$0xf]
  %v39 = vld [vmem:[%s1 + $0x24] sm:$0xff]
  %v40 = vld [vmem:[%s1 + $0x2c] sm:$0xf]
  %v41 = vld [vmem:[%s1 + $0x30] sm:$0xff]
  %v42 = vld [vmem:[%s1 + $0x38] sm:$0xf]
  %v43 = vld [vmem:[%s1 + $0x3c] sm:$0xff]
  %v44 = vld [vmem:[%s1 + $0x44] sm:$0xf]
  %v45 = vld [vmem:[%s1 + $0x48] sm:$0xff]
  %v46 = vld [vmem:[%s1 + $0x50] sm:$0xf]
  %v47 = vld [vmem:[%s1 + $0x54] sm:$0xff]
  %v48 = vld [vmem:[%s1 + $0x5c] sm:$0xf]
  %v49 = vld [vmem:[%s1 + $0x60] sm:$0xff]
  %v50 = vld [vmem:[%s1 + $0x68] sm:$0xf]
  %v51 = vld [vmem:[%s1 + $0x6c] sm:$0xff]
  %v52 = vld [vmem:[%s1 + $0x74] sm:$0xf]
  %v53 = vld [vmem:[%s1 + $0x78] sm:$0xff]
  %v54 = vld [vmem:[%s1 + $0x80] sm:$0xf]
  %v55 = vld [vmem:[%s1 + $0x84] sm:$0xff]
  %v56 = vld [vmem:[%s1 + $0x8c] sm:$0xf]
  %v57 = vld [vmem:[%s1 + $0x90] sm:$0xff]
  %v58 = vld [vmem:[%s1 + $0x98] sm:$0xf]
  %v59 = vld [vmem:[%s1 + $0x9c] sm:$0xff]
  %v60 = vld [vmem:[%s1 + $0xa4] sm:$0xf]
  %v61 = vld [vmem:[%s1 + $0xa8] sm:$0xff]
  %v62 = vld [vmem:[%s1 + $0xb0] sm:$0xf]
  %v63 = vld [vmem:[%s1 + $0xb4] sm:$0xff]
  %v64 = vld [vmem:[%s1 + $0xbc] sm:$0xf]
  %v67 = vunpack.c.l.b16 %v31
  %v68 = vunpack.c.l.b16 %v32
  %v69 = vpack.c.b16 %v68, %v67
  %v103 = vunpack.c.l.b16 %v33
  %v104 = vunpack.c.h.b16 %v33
  %v105 = vunpack.c.l.b16 %v34
  %v106 = vunpack.c.l.b16 %v35
  %v107 = vunpack.c.h.b16 %v35
  %v108 = vunpack.c.l.b16 %v36
  %v109 = vunpack.c.l.b16 %v37
  %v110 = vunpack.c.h.b16 %v37
  %v111 = vunpack.c.l.b16 %v38
  %v112 = vunpack.c.l.b16 %v39
  %v113 = vunpack.c.h.b16 %v39
  %v114 = vunpack.c.l.b16 %v40
  %v115 = vunpack.c.l.b16 %v41
  %v116 = vunpack.c.h.b16 %v41
  %v117 = vunpack.c.l.b16 %v42
  %v118 = vunpack.c.l.b16 %v43
  %v119 = vunpack.c.h.b16 %v43
  %v120 = vunpack.c.l.b16 %v44
  %v121 = vunpack.c.l.b16 %v45
  %v122 = vunpack.c.h.b16 %v45
  %v123 = vunpack.c.l.b16 %v46
  %v124 = vunpack.c.l.b16 %v47
  %v125 = vunpack.c.h.b16 %v47
  %v126 = vunpack.c.l.b16 %v48
  %v127 = vunpack.c.l.b16 %v49
  %v128 = vunpack.c.h.b16 %v49
  %v129 = vunpack.c.l.b16 %v50
  %v130 = vunpack.c.l.b16 %v51
  %v131 = vunpack.c.h.b16 %v51
  %v132 = vunpack.c.l.b16 %v52
  %v133 = vunpack.c.l.b16 %v53
  %v134 = vunpack.c.h.b16 %v53
  %v135 = vunpack.c.l.b16 %v54
  %v136 = vunpack.c.l.b16 %v55
  %v137 = vunpack.c.h.b16 %v55
  %v138 = vunpack.c.l.b16 %v56
  %v139 = vunpack.c.l.b16 %v57
  %v140 = vunpack.c.h.b16 %v57
  %v141 = vunpack.c.l.b16 %v58
  %v142 = vunpack.c.l.b16 %v59
  %v143 = vunpack.c.h.b16 %v59
  %v144 = vunpack.c.l.b16 %v60
  %v145 = vunpack.c.l.b16 %v61
  %v146 = vunpack.c.h.b16 %v61
  %v147 = vunpack.c.l.b16 %v62
  %v148 = vunpack.c.l.b16 %v63
  %v149 = vunpack.c.h.b16 %v63
  %v150 = vunpack.c.l.b16 %v64
  %v151 = vpack.c.b16 %v106, %v103
  %v152 = vpack.c.b16 %v107, %v104
  %v153 = vpack.c.b16 %v108, %v105
  %v154 = vpack.c.b16 %v112, %v109
  %v155 = vpack.c.b16 %v113, %v110
  %v156 = vpack.c.b16 %v114, %v111
  %v157 = vpack.c.b16 %v118, %v115
  %v158 = vpack.c.b16 %v119, %v116
  %v159 = vpack.c.b16 %v120, %v117
  %v160 = vpack.c.b16 %v124, %v121
  %v161 = vpack.c.b16 %v125, %v122
  %v162 = vpack.c.b16 %v126, %v123
  %v163 = vpack.c.b16 %v130, %v127
  %v164 = vpack.c.b16 %v131, %v128
  %v165 = vpack.c.b16 %v132, %v129
  %v166 = vpack.c.b16 %v136, %v133
  %v167 = vpack.c.b16 %v137, %v134
  %v168 = vpack.c.b16 %v138, %v135
  %v169 = vpack.c.b16 %v142, %v139
  %v170 = vpack.c.b16 %v143, %v140
  %v171 = vpack.c.b16 %v144, %v141
  %v172 = vpack.c.b16 %v148, %v145
  %v173 = vpack.c.b16 %v149, %v146
  %v174 = vpack.c.b16 %v150, %v147
  %199 = vmatprep.subr.bf16.mxu0 %v152
  %200 = vmatpush1.bf16.msra.mxu0 %v151
  %201 = vmatprep.subr.bf16.mxu0 %v155
  %202 = vmatpush1.bf16.msra.mxu0 %v154
  %203 = vmatprep.subr.bf16.mxu0 %v158
  %204 = vmatpush1.bf16.msra.mxu0 %v157
  %205 = vmatprep.subr.bf16.mxu0 %v161
  %206 = vmatpush1.bf16.msra.mxu0 %v160
  %207 = vmatprep.subr.bf16.mxu0 %v164
  %208 = vmatpush1.bf16.msra.mxu0 %v163
  %209 = vmatprep.subr.bf16.mxu0 %v167
  %210 = vmatpush1.bf16.msra.mxu0 %v166
  %211 = vmatprep.subr.bf16.mxu0 %v170
  %212 = vmatpush1.bf16.msra.mxu0 %v169
  %213 = vmatprep.subr.bf16.mxu0 %v173
  %214 = vmatpush1.bf16.msra.mxu0 %v172
  %215 = vmatprep.subr.bf16.mxu0 0
  %216 = vmatpush1.bf16.msra.mxu0 0
  %217 = vmatprep.subr.bf16.mxu0 0
  %218 = vmatpush1.bf16.msra.mxu0 0
  %219 = vmatprep.subr.bf16.mxu0 0
  %220 = vmatpush1.bf16.msra.mxu0 0
  %221 = vmatprep.subr.bf16.mxu0 0
  %222 = vmatpush1.bf16.msra.mxu0 0
  %223 = vmatprep.subr.bf16.mxu0 0
  %224 = vmatpush1.bf16.msra.mxu0 0
  %225 = vmatprep.subr.bf16.mxu0 0
  %226 = vmatpush1.bf16.msra.mxu0 0
  %227 = vmatprep.subr.bf16.mxu0 0
  %228 = vmatpush1.bf16.msra.mxu0 0
  %229 = vmatprep.subr.bf16.mxu0 0
  %230 = vmatpush1.bf16.msra.mxu0 0
  %231 = vmatprep.mubr.bf16.mxu0 0
  %232 = vmatmul.mubr.bf16.gmra.mrb[0].mxu0 %v69
  %v233 = vpop.f32.mrb[0].mxu0
  %v234 = vadd.f32 0.0, %v233
  %v235 = vpop.f32.mrb[0].mxu0
  %v236 = vadd.f32 0.0, %v235
  %v237 = vpop.f32.mrb[0].mxu0
  %v238 = vadd.f32 0.0, %v237
  %v239 = vpop.f32.mrb[0].mxu0
  %v240 = vadd.f32 0.0, %v239
  %241 = vdwg.mxu0
  %242 = vmatprep.subr.bf16.mxu0 0
  %243 = vmatpush1.bf16.msra.mxu0 %v153
  %244 = vmatprep.subr.bf16.mxu0 0
  %245 = vmatpush1.bf16.msra.mxu0 %v156
  %246 = vmatprep.subr.bf16.mxu0 0
  %247 = vmatpush1.bf16.msra.mxu0 %v159
  %248 = vmatprep.subr.bf16.mxu0 0
  %249 = vmatpush1.bf16.msra.mxu0 %v162
  %250 = vmatprep.subr.bf16.mxu0 0
  %251 = vmatpush1.bf16.msra.mxu0 %v165
  %252 = vmatprep.subr.bf16.mxu0 0
  %253 = vmatpush1.bf16.msra.mxu0 %v168
  %254 = vmatprep.subr.bf16.mxu0 0
  %255 = vmatpush1.bf16.msra.mxu0 %v171
  %256 = vmatprep.subr.bf16.mxu0 0
  %257 = vmatpush1.bf16.msra.mxu0 %v174
  %258 = vmatprep.subr.bf16.mxu0 0
  %259 = vmatpush1.bf16.msra.mxu0 0
  %260 = vmatprep.subr.bf16.mxu0 0
  %261 = vmatpush1.bf16.msra.mxu0 0
  %262 = vmatprep.subr.bf16.mxu0 0
  %263 = vmatpush1.bf16.msra.mxu0 0
  %264 = vmatprep.subr.bf16.mxu0 0
  %265 = vmatpush1.bf16.msra.mxu0 0
  %266 = vmatprep.subr.bf16.mxu0 0
  %267 = vmatpush1.bf16.msra.mxu0 0
  %268 = vmatprep.subr.bf16.mxu0 0
  %269 = vmatpush1.bf16.msra.mxu0 0
  %270 = vmatprep.subr.bf16.mxu0 0
  %271 = vmatpush1.bf16.msra.mxu0 0
  %272 = vmatprep.subr.bf16.mxu0 0
  %273 = vmatpush1.bf16.msra.mxu0 0
  %274 = vmatprep.mubr.bf16.mxu0 0
  %275 = vmatmul.mubr.bf16.gmra.mrb[0].mxu0 %v69
  %v276 = vpop.f32.mrb[0].mxu0
  %v277 = vadd.f32 0.0, %v276
  %v278 = vpop.f32.mrb[0].mxu0
  %v279 = vpop.f32.mrb[0].mxu0
  %v280 = vadd.f32 0.0, %v279
  %v281 = vpop.f32.mrb[0].mxu0
  %282 = vdwg.mxu0
  %v283 = vadd.f32 %v25, %v234
  %v284 = vadd.f32 %v26, %v236
  %v285 = vadd.f32 %v27, %v277
  %v286 = vadd.f32 %v28, %v238
  %v287 = vadd.f32 %v29, %v240
  %v288 = vadd.f32 %v30, %v280
  %289 = vst [vmem:[#allocation2] sm:$0xff] %v283
  %290 = vst [vmem:[#allocation2 + $0x8] sm:$0xff] %v284
  %291 = vst [vmem:[#allocation2 + $0x10] sm:$0xff] %v285
  %292 = vst [vmem:[#allocation2 + $0x18] sm:$0xff] %v286
  %293 = vst [vmem:[#allocation2 + $0x20] sm:$0xff] %v287
  %294 = vst [vmem:[#allocation2 + $0x28] sm:$0xff] %v288
  // Predicated region
  $region18: #{decoder_forward.19} parent=0 // pred_check
    %p295 = pneg %p15
  $region19: #{decoder_forward.19} parent=0 // pred_check_branch
    %297 = sbr.rel (%p295) target = $region21
  $region20: #{decoder_forward.19} parent=0 // pred_region
    %v298 = vld [vmem:[#allocation2] sm:$0xff]
    %v299 = vld [vmem:[#allocation2 + $0x8] sm:$0xff]
    %v300 = vld [vmem:[#allocation2 + $0x10] sm:$0xff]
    %v301 = vld [vmem:[#allocation2 + $0x18] sm:$0xff]
    %v302 = vld [vmem:[#allocation2 + $0x20] sm:$0xff]
    %v303 = vld [vmem:[#allocation2 + $0x28] sm:$0xff]
    %v304 = vld [vmem:[%s2] sm:$0x7]
    %v306 = vlaneseq
    %v307 = vshrl.u32 %v306, 7
    %v308 = vsub.s32 0, %v307
    %v309 = vrot.slane %v304, %v308
    %v310 = vlaneseq
    %v311 = vshrl.u32 %v310, 7
    %v312 = vsub.s32 1, %v311
    %v313 = vrot.slane %v304, %v312
    %v314 = vlaneseq
    %v315 = vshrl.u32 %v314, 7
    %v316 = vsub.s32 2, %v315
    %v317 = vrot.slane %v304, %v316
    %v321 = vadd.f32 %v298, %v309
    %v322 = vadd.f32 %v299, %v313
    %v323 = vadd.f32 %v300, %v317
    %v324 = vadd.f32 %v301, %v309
    %v325 = vadd.f32 %v302, %v313
    %v326 = vadd.f32 %v303, %v317
    %v327 = vpack.c.bf16 %v324, %v321
    %v328 = vpack.c.bf16 %v325, %v322
    %v329 = vpack.c.bf16 %v326, %v323
    %v333 = vunpack.c.l.b16 %v327
    %v334 = vunpack.c.l.b16 %v328
    %v335 = vunpack.c.l.b16 %v329
    %v336 = vunpack.c.h.b16 %v327
    %v337 = vunpack.c.h.b16 %v328
    %v338 = vunpack.c.h.b16 %v329
    %v339 = vpack.c.b16 %v334, %v333
    %v340 = vpack.c.b16 %v335, %v335
    %v341 = vpack.c.b16 %v337, %v336
    %v342 = vpack.c.b16 %v338, %v338
    %347 = vst [vmem:[%s3] sm:$0xff] %v339
    %348 = vst [vmem:[%s3 + $0x8] sm:$0xf] %v340
    %349 = vst [vmem:[%s3 + $0xc] sm:$0xff] %v341
    %350 = vst [vmem:[%s3 + $0x14] sm:$0xf] %v342
  $region21: #{decoder_forward.19} parent=0 // pred_fallthru
    _
  // Predicated region
  $region22: #{decoder_forward.19} parent=0 // pred_check
    _
  $region23: #{decoder_forward.19} parent=0 // pred_check_branch
    %352 = sbr.rel (0) target = $region25
  $region24: #{decoder_forward.19} parent=0 // pred_region
    _
  $region25: #{decoder_forward.19} parent=0 // pred_fallthru
    _
  // Predicated region
  $region26: #{decoder_forward.19} parent=0 // pred_check
    _
  $region27: #{decoder_forward.19} parent=0 // pred_check_branch
    %354 = sbr.rel (0) target = $region29
  $region28: #{decoder_forward.19} parent=0 // pred_region
    _
  $region29: #{decoder_forward.19} parent=0 // pred_fallthru
    _

// kernel: decoder_forward.20
$region0: #{decoder_forward.20}
  #allocation0 [shape = 'u32[]', space=smem, size = 0x4, offset = 0x4, fixed_abs, tag = 'smem constant byte address 0x4 - core index']
  #allocation1 [shape = 'u32[144,128]{1,0:T(1,128)}', space=vmem, size = 0x12000, scoped, tag = 'internal scratch']
  #allocation2 [shape = 'f32[8,4]{1,0:T(8,128)}', space=vmem, size = 0x1000, scoped, tag = 'scratch operand']
  #allocation3 [shape = 'f32[8,4]{1,0:T(8,128)}', space=vmem, size = 0x1000, scoped, tag = 'scratch operand']
  #allocation4 [shape = 'f32[8,128]{1,0:T(8,128)}', space=vmem, size = 0x1000, scoped, tag = 'scratch operand']
  %s0 = inlined_call_operand.vmem [shape: bf16[2,8,384], index: 0, kind: input, shape index: {}, may-alias: {0,1,2}]
  %s1 = inlined_call_operand.vmem [shape: bf16[2,8,384], index: 1, kind: input, shape index: {}, may-alias: {0,1,2}]
  %s2 = inlined_call_operand.vmem [shape: bf16[2,8,384], index: 2, kind: input, shape index: {}, may-alias: {0,1,2}]
  %s3 = inlined_call_operand.vmem [shape: s8[2,8,8], index: 3, kind: input, shape index: {}]
  %s4 = inlined_call_operand.vmem [shape: bf16[2,8,128], index: 4, kind: output, shape index: {}]
  %s5 = sld [smem:[#allocation0]]
  $region57: #{decoder_forward.20} parent=0
    _
  %s7 = ssub.s32 1, %s5
  %s8 = scalar_select 0, %s7, %s5
  loop: start=0, step=1, limit=4
  $region2: #{decoder_forward.20} parent=0 // loop_pre_header
    _
  $region3: #{decoder_forward.20} parent=0 // loop_header
    %s10 = sphi 0, %s14
    %p11 = scmp.ge.s32.totalorder %s10, 4
    %s17 = sphi 0, %s36
    %s18 = sphi 0, %s32
    %s19 = sphi 0, %s28
    %s20 = sphi 0, %s17
    %s21 = sphi 0, %s18
    %s22 = sphi 0, %s19
    %s23 = sphi 0, %s20
    %s24 = sphi 0, %s21
    %s25 = sphi 0, %s22
    %s41 = sphi 0, %s43
    %s44 = sphi 0, %s41
    %s45 = sphi 0, %s44
    %s61 = sphi 0, %s45
    %s69 = sphi 0, %s71
    %s72 = sphi 0, %s69
    %s73 = sphi 0, %s72
    %s89 = sphi 0, %s73
    %s97 = sphi 0, %s99
    %s100 = sphi 0, %s97
    %s101 = sphi 0, %s100
    %s117 = sphi 0, %s101
    %s127 = sphi 0, %s129
    %s130 = sphi 0, %s127
    %s131 = sphi 0, %s130
    %s147 = sphi 0, %s131
    %s155 = sphi 0, %s157
    %s158 = sphi 0, %s155
    %s159 = sphi 0, %s158
    %s175 = sphi 0, %s159
  $region4: #{decoder_forward.20} parent=0 // loop_header_branch
    %13 = sbr.rel (%p11) target = $region8
  $region5: #{decoder_forward.20} parent=0 // loop_body
    %s15 = ssub.s32 %s10, 1
    %s16 = ssub.s32 %s10, 2
    %s26 = sadd.s32 1, %s19
    %p27 = scmp.ge.s32.totalorder %s26, 1
    %s28 = scalar_select %p27, 0, %s26
    %s29 = sadd.s32 1, %s18
    %s30 = scalar_select %p27, %s29, %s18
    %p31 = scmp.ge.s32.totalorder %s30, 1
    %s32 = scalar_select %p31, 0, %s30
    %s33 = sadd.s32 1, %s17
    %s34 = scalar_select %p31, %s33, %s17
    %p35 = scmp.ge.s32.totalorder %s34, 2
    %s36 = scalar_select %p35, 0, %s34
    %s37 = ssub.s32 %s17, %s36
    %s38 = ssub.s32 %s18, %s32
    %s39 = sor.u32 %s37, %s38
    %p40 = scmp.eq.s32.totalorder %s39, 0
    %s42 = sadd.s32 %s41, 1
    %s43 = scalar_select %p40, %s41, %s42
    %p46 = pneg %p40
    %p47 = scmp.eq.s32.totalorder %s10, 1
    %p48 = por %p46, %p47
    %p49 = scmp.ne.s32.totalorder %s41, %s44
    %p50 = scmp.eq.s32.totalorder %s10, 0
    %p51 = por %p49, %p50
    %p52 = scmp.ne.s32.totalorder %s41, %s44
    %p53 = scmp.eq.s32.totalorder %s15, 1
    %p54 = por %p52, %p53
    %p55 = scmp.ne.s32.totalorder %s44, %s45
    %p56 = scmp.eq.s32.totalorder %s15, 0
    %p57 = por %p55, %p56
    %p58 = scmp.ne.s32.totalorder %s44, %s45
    %p59 = scmp.eq.s32.totalorder %s16, 1
    %p60 = por %p58, %p59
    %p62 = scmp.ne.s32.totalorder %s45, %s61
    %p63 = scmp.eq.s32.totalorder %s16, 0
    %p64 = por %p62, %p63
    %s65 = ssub.s32 %s17, %s36
    %s66 = ssub.s32 %s19, %s28
    %s67 = sor.u32 %s65, %s66
    %p68 = scmp.eq.s32.totalorder %s67, 0
    %s70 = sadd.s32 %s69, 1
    %s71 = scalar_select %p68, %s69, %s70
    %p74 = pneg %p68
    %p75 = scmp.eq.s32.totalorder %s10, 1
    %p76 = por %p74, %p75
    %p77 = scmp.ne.s32.totalorder %s69, %s72
    %p78 = scmp.eq.s32.totalorder %s10, 0
    %p79 = por %p77, %p78
    %p80 = scmp.ne.s32.totalorder %s69, %s72
    %p81 = scmp.eq.s32.totalorder %s15, 1
    %p82 = por %p80, %p81
    %p83 = scmp.ne.s32.totalorder %s72, %s73
    %p84 = scmp.eq.s32.totalorder %s15, 0
    %p85 = por %p83, %p84
    %p86 = scmp.ne.s32.totalorder %s72, %s73
    %p87 = scmp.eq.s32.totalorder %s16, 1
    %p88 = por %p86, %p87
    %p90 = scmp.ne.s32.totalorder %s73, %s89
    %p91 = scmp.eq.s32.totalorder %s16, 0
    %p92 = por %p90, %p91
    %s93 = ssub.s32 %s17, %s36
    %s94 = ssub.s32 %s19, %s28
    %s95 = sor.u32 %s93, %s94
    %p96 = scmp.eq.s32.totalorder %s95, 0
    %s98 = sadd.s32 %s97, 1
    %s99 = scalar_select %p96, %s97, %s98
    %p102 = pneg %p96
    %p103 = scmp.eq.s32.totalorder %s10, 1
    %p104 = por %p102, %p103
    %p105 = scmp.ne.s32.totalorder %s97, %s100
    %p106 = scmp.eq.s32.totalorder %s10, 0
    %p107 = por %p105, %p106
    %p108 = scmp.ne.s32.totalorder %s97, %s100
    %p109 = scmp.eq.s32.totalorder %s15, 1
    %p110 = por %p108, %p109
    %p111 = scmp.ne.s32.totalorder %s100, %s101
    %p112 = scmp.eq.s32.totalorder %s15, 0
    %p113 = por %p111, %p112
    %p114 = scmp.ne.s32.totalorder %s100, %s101
    %p115 = scmp.eq.s32.totalorder %s16, 1
    %p116 = por %p114, %p115
    %p118 = scmp.ne.s32.totalorder %s101, %s117
    %p119 = scmp.eq.s32.totalorder %s16, 0
    %p120 = por %p118, %p119
    %s121 = ssub.s32 %s17, %s36
    %s122 = ssub.s32 %s18, %s32
    %s123 = sor.u32 %s121, %s122
    %s124 = ssub.s32 %s19, %s28
    %s125 = sor.u32 %s123, %s124
    %p126 = scmp.eq.s32.totalorder %s125, 0
    %s128 = sadd.s32 %s127, 1
    %s129 = scalar_select %p126, %s127, %s128
    %p132 = pneg %p126
    %p133 = scmp.eq.s32.totalorder %s10, 1
    %p134 = por %p132, %p133
    %p135 = scmp.ne.s32.totalorder %s127, %s130
    %p136 = scmp.eq.s32.totalorder %s10, 0
    %p137 = por %p135, %p136
    %p138 = scmp.ne.s32.totalorder %s127, %s130
    %p139 = scmp.eq.s32.totalorder %s15, 1
    %p140 = por %p138, %p139
    %p141 = scmp.ne.s32.totalorder %s130, %s131
    %p142 = scmp.eq.s32.totalorder %s15, 0
    %p143 = por %p141, %p142
    %p144 = scmp.ne.s32.totalorder %s130, %s131
    %p145 = scmp.eq.s32.totalorder %s16, 1
    %p146 = por %p144, %p145
    %p148 = scmp.ne.s32.totalorder %s131, %s147
    %p149 = scmp.eq.s32.totalorder %s16, 0
    %p150 = por %p148, %p149
    %s151 = ssub.s32 %s17, %s36
    %s152 = ssub.s32 %s18, %s32
    %s153 = sor.u32 %s151, %s152
    %p154 = scmp.eq.s32.totalorder %s153, 0
    %s156 = sadd.s32 %s155, 1
    %s157 = scalar_select %p154, %s155, %s156
    %p160 = pneg %p154
    %p161 = scmp.eq.s32.totalorder %s10, 1
    %p162 = por %p160, %p161
    %p163 = scmp.ne.s32.totalorder %s155, %s158
    %p164 = scmp.eq.s32.totalorder %s10, 0
    %p165 = por %p163, %p164
    %p166 = scmp.ne.s32.totalorder %s155, %s158
    %p167 = scmp.eq.s32.totalorder %s15, 1
    %p168 = por %p166, %p167
    %p169 = scmp.ne.s32.totalorder %s158, %s159
    %p170 = scmp.eq.s32.totalorder %s15, 0
    %p171 = por %p169, %p170
    %p172 = scmp.ne.s32.totalorder %s158, %s159
    %p173 = scmp.eq.s32.totalorder %s16, 1
    %p174 = por %p172, %p173
    %p176 = scmp.ne.s32.totalorder %s159, %s175
    %p177 = scmp.eq.s32.totalorder %s16, 0
    %p178 = por %p176, %p177
    %p179 = scmp.le.s32.totalorder 1, %s10
    %p180 = scmp.lt.s32.totalorder %s10, 3
    %p181 = pnand %p179, %p180
    %p182 = pneg %p181
    // Predicated region
    $region9: #{decoder_forward.20} parent=5 // pred_check
      _
    $region10: #{decoder_forward.20} parent=5 // pred_check_branch
      %184 = sbr.rel (%p181) target = $region12
    $region11: #{decoder_forward.20} parent=5 // pred_region
      %s185 = ssub.s32 %s10, 1
    $region12: #{decoder_forward.20} parent=5 // pred_fallthru
      _
    %p186 = scmp.lt.s32.totalorder %s10, 2
    // Predicated region
    $region13: #{decoder_forward.20} parent=5 // pred_check
      %p187 = pneg %p186
    $region14: #{decoder_forward.20} parent=5 // pred_check_branch
      %189 = sbr.rel (%p187) target = $region16
    $region15: #{decoder_forward.20} parent=5 // pred_region
      // Predicated region
      $region17: #{decoder_forward.20} parent=15 // pred_check
        %p190 = pneg %p51
      $region18: #{decoder_forward.20} parent=15 // pred_check_branch
        %192 = sbr.rel (%p190) target = $region20
      $region19: #{decoder_forward.20} parent=15 // pred_region
        %p193 = scmp.lt.s32.totalorder %s17, 1
        %s194 = scalar_select %p193, %s17, 1
        %p195 = scmp.lt.s32.totalorder %s18, 0
        %s196 = scalar_select %p195, %s18, 0
        %s197 = smul.addr %s196, 3
        %s198 = smul.addr %s194, 3
        %s199 = sadd.s32 %s197, %s198
        %s200 = smul.addr %s199, 4
        %s201 = scalar_lea.vmem %s0, %s200
      $region20: #{decoder_forward.20} parent=15 // pred_fallthru
        _
      // Predicated region
      $region21: #{decoder_forward.20} parent=15 // pred_check
        %p202 = pneg %p79
      $region22: #{decoder_forward.20} parent=15 // pred_check_branch
        %204 = sbr.rel (%p202) target = $region24
      $region23: #{decoder_forward.20} parent=15 // pred_region
        %p205 = scmp.lt.s32.totalorder %s17, 1
        %s206 = scalar_select %p205, %s17, 1
        %p207 = scmp.lt.s32.totalorder %s19, 0
        %s208 = scalar_select %p207, %s19, 0
        %s209 = smul.addr %s208, 3
        %s210 = sadd.s32 1, %s209
        %s211 = smul.addr %s206, 3
        %s212 = sadd.s32 %s210, %s211
        %s213 = smul.addr %s212, 4
        %s214 = scalar_lea.vmem %s1, %s213
      $region24: #{decoder_forward.20} parent=15 // pred_fallthru
        _
      // Predicated region
      $region25: #{decoder_forward.20} parent=15 // pred_check
        %p215 = pneg %p107
      $region26: #{decoder_forward.20} parent=15 // pred_check_branch
        %217 = sbr.rel (%p215) target = $region28
      $region27: #{decoder_forward.20} parent=15 // pred_region
        %p218 = scmp.lt.s32.totalorder %s17, 1
        %s219 = scalar_select %p218, %s17, 1
        %p220 = scmp.lt.s32.totalorder %s19, 0
        %s221 = scalar_select %p220, %s19, 0
        %s222 = smul.addr %s221, 3
        %s223 = sadd.s32 2, %s222
        %s224 = smul.addr %s219, 3
        %s225 = sadd.s32 %s223, %s224
        %s226 = smul.addr %s225, 4
        %s227 = scalar_lea.vmem %s2, %s226
      $region28: #{decoder_forward.20} parent=15 // pred_fallthru
        _
      // Predicated region
      $region29: #{decoder_forward.20} parent=15 // pred_check
        %p228 = pneg %p137
      $region30: #{decoder_forward.20} parent=15 // pred_check_branch
        %230 = sbr.rel (%p228) target = $region32
      $region31: #{decoder_forward.20} parent=15 // pred_region
        %p231 = scmp.lt.s32.totalorder %s17, 1
        %s232 = scalar_select %p231, %s17, 1
        %p233 = scmp.lt.s32.totalorder %s18, 0
        %s234 = scalar_select %p233, %s18, 0
        %p235 = scmp.lt.s32.totalorder %s19, 0
        %s236 = scalar_select %p235, %s19, 0
        %s237 = sadd.s32 %s236, %s234
        %s238 = sadd.s32 %s237, %s232
        %s239 = smul.addr %s238, 2
        %s240 = scalar_lea.vmem %s3, %s239
      $region32: #{decoder_forward.20} parent=15 // pred_fallthru
        _
    $region16: #{decoder_forward.20} parent=5 // pred_fallthru
      _
    %p241 = scmp.le.s32.totalorder 1, %s10
    %p242 = scmp.lt.s32.totalorder %s10, 3
    %p243 = pnand %p241, %p242
    %p244 = pneg %p243
    // Predicated region
    $region33: #{decoder_forward.20} parent=5 // pred_check
      _
    $region34: #{decoder_forward.20} parent=5 // pred_check_branch
      %246 = sbr.rel (%p243) target = $region36
    $region35: #{decoder_forward.20} parent=5 // pred_region
      %s247 = ssub.s32 %s10, 1
      %p248 = scmp.lt.s32.totalorder %s20, 1
      %s249 = scalar_select %p248, %s20, 1
      %p250 = scmp.lt.s32.totalorder %s21, 0
      %s251 = scalar_select %p250, %s21, 0
      %s252 = smul.addr %s251, 3
      %s253 = smul.addr %s249, 3
      %s254 = sadd.s32 %s252, %s253
      %s255 = smul.addr %s254, 4
      %s256 = scalar_lea.vmem %s0, %s255
      %p257 = pneg %p57
      %p258 = pneg %p54
      %p259 = scmp.lt.s32.totalorder %s20, 1
      %s260 = scalar_select %p259, %s20, 1
      %p261 = scmp.lt.s32.totalorder %s22, 0
      %s262 = scalar_select %p261, %s22, 0
      %s263 = smul.addr %s262, 3
      %s264 = sadd.s32 1, %s263
      %s265 = smul.addr %s260, 3
      %s266 = sadd.s32 %s264, %s265
      %s267 = smul.addr %s266, 4
      %s268 = scalar_lea.vmem %s1, %s267
      %p269 = pneg %p85
      %p270 = pneg %p82
      %p271 = scmp.lt.s32.totalorder %s20, 1
      %s272 = scalar_select %p271, %s20, 1
      %p273 = scmp.lt.s32.totalorder %s22, 0
      %s274 = scalar_select %p273, %s22, 0
      %s275 = smul.addr %s274, 3
      %s276 = sadd.s32 2, %s275
      %s277 = smul.addr %s272, 3
      %s278 = sadd.s32 %s276, %s277
      %s279 = smul.addr %s278, 4
      %s280 = scalar_lea.vmem %s2, %s279
      %p281 = pneg %p113
      %p282 = pneg %p110
      %p283 = scmp.lt.s32.totalorder %s20, 1
      %s284 = scalar_select %p283, %s20, 1
      %p285 = scmp.lt.s32.totalorder %s21, 0
      %s286 = scalar_select %p285, %s21, 0
      %p287 = scmp.lt.s32.totalorder %s22, 0
      %s288 = scalar_select %p287, %s22, 0
      %s289 = sadd.s32 %s288, %s286
      %s290 = sadd.s32 %s289, %s284
      %s291 = smul.addr %s290, 2
      %s292 = scalar_lea.vmem %s3, %s291
      %p293 = pneg %p143
      %p294 = pneg %p140
      %p295 = pneg %p171
      %p296 = pneg %p168
      %p297 = scmp.lt.s32.totalorder %s20, 1
      %s298 = scalar_select %p297, %s20, 1
      %p299 = scmp.lt.s32.totalorder %s21, 0
      %s300 = scalar_select %p299, %s21, 0
      %s301 = sadd.s32 %s300, %s298
      %s302 = smul.addr %s301, 4
      %s303 = scalar_lea.vmem %s4, %s302
      %p304 = scmp.lt.s32.totalorder %s20, 1
      %s305 = scalar_select %p304, %s20, 1
      %p306 = scmp.lt.s32.totalorder %s21, 0
      %s307 = scalar_select %p306, %s21, 0
      %s308 = smul.addr %s307, 3
      %s309 = smul.addr %s305, 3
      %s310 = sadd.s32 %s308, %s309
      %s311 = smul.addr %s310, 4
      %s312 = scalar_lea.vmem %s0, %s311
      %p313 = scmp.lt.s32.totalorder %s20, 1
      %s314 = scalar_select %p313, %s20, 1
      %p315 = scmp.lt.s32.totalorder %s22, 0
      %s316 = scalar_select %p315, %s22, 0
      %s317 = smul.addr %s316, 3
      %s318 = sadd.s32 1, %s317
      %s319 = smul.addr %s314, 3
      %s320 = sadd.s32 %s318, %s319
      %s321 = smul.addr %s320, 4
      %s322 = scalar_lea.vmem %s1, %s321
      %p323 = scmp.lt.s32.totalorder %s20, 1
      %s324 = scalar_select %p323, %s20, 1
      %p325 = scmp.lt.s32.totalorder %s22, 0
      %s326 = scalar_select %p325, %s22, 0
      %s327 = smul.addr %s326, 3
      %s328 = sadd.s32 2, %s327
      %s329 = smul.addr %s324, 3
      %s330 = sadd.s32 %s328, %s329
      %s331 = smul.addr %s330, 4
      %s332 = scalar_lea.vmem %s2, %s331
      %p333 = scmp.lt.s32.totalorder %s20, 1
      %s334 = scalar_select %p333, %s20, 1
      %p335 = scmp.lt.s32.totalorder %s21, 0
      %s336 = scalar_select %p335, %s21, 0
      %p337 = scmp.lt.s32.totalorder %s22, 0
      %s338 = scalar_select %p337, %s22, 0
      %s339 = sadd.s32 %s338, %s336
      %s340 = sadd.s32 %s339, %s334
      %s341 = smul.addr %s340, 2
      %s342 = scalar_lea.vmem %s3, %s341
      %p343 = scmp.lt.s32.totalorder %s20, 1
      %s344 = scalar_select %p343, %s20, 1
      %p345 = scmp.lt.s32.totalorder %s21, 0
      %s346 = scalar_select %p345, %s21, 0
      %s347 = sadd.s32 %s346, %s344
      %s348 = smul.addr %s347, 4
      %s349 = scalar_lea.vmem %s4, %s348
      %p353 = scmp.eq.s32.totalorder %s22, 0
      // Predicated region
      $region37: #{decoder_forward.20} parent=35 // pred_check
        %p354 = pneg %p353
      $region38: #{decoder_forward.20} parent=35 // pred_check_branch
        %356 = sbr.rel (%p354) target = $region40
      $region39: #{decoder_forward.20} parent=35 // pred_region
        %vm357 = vcmask 31744
        %358 = vst.msk [vmem:[#allocation2] sm:$0xff] %vm357, -1e+30
        %359 = vst.msk [vmem:[#allocation3] sm:$0xff] %vm357, 0.0
        %360 = vst [vmem:[#allocation4] sm:$0xff] 0.0
      $region40: #{decoder_forward.20} parent=35 // pred_fallthru
        _
      %v361 = vld [vmem:[%s312] sm:$0xf]
      %v362 = vld [vmem:[%s322] sm:$0xf]
      %v363 = vld [vmem:[%s332] sm:$0xf]
      %v364 = vld [vmem:[%s342] sm:$0x3]
      %vm365 = vnez %v364
      %vm366 = vcmask 261120
      %v368 = vsel %vm366, %v361, 0
      %v371 = vsel %vm366, %v362, 0
      %373 = vmatprep.subr.bf16.mxu0 0
      %374 = vmatpush1.bf16.xpose.msra.mxu0 %v371
      %375 = vmatprep.subr.bf16.mxu0 0
      %376 = vmatpush1.bf16.xpose.msra.mxu0 0
      %377 = vmatprep.subr.bf16.mxu0 0
      %378 = vmatpush1.bf16.xpose.msra.mxu0 0
      %379 = vmatprep.subr.bf16.mxu0 0
      %380 = vmatpush1.bf16.xpose.msra.mxu0 0
      %381 = vmatprep.subr.bf16.mxu0 0
      %382 = vmatpush1.bf16.xpose.msra.mxu0 0
      %383 = vmatprep.subr.bf16.mxu0 0
      %384 = vmatpush1.bf16.xpose.msra.mxu0 0
      %385 = vmatprep.subr.bf16.mxu0 0
      %386 = vmatpush1.bf16.xpose.msra.mxu0 0
      %387 = vmatprep.subr.bf16.mxu0 0
      %388 = vmatpush1.bf16.xpose.msra.mxu0 0
      %389 = vmatprep.subr.bf16.mxu0 0
      %390 = vmatpush1.bf16.xpose.msra.mxu0 0
      %391 = vmatprep.subr.bf16.mxu0 0
      %392 = vmatpush1.bf16.xpose.msra.mxu0 0
      %393 = vmatprep.subr.bf16.mxu0 0
      %394 = vmatpush1.bf16.xpose.msra.mxu0 0
      %395 = vmatprep.subr.bf16.mxu0 0
      %396 = vmatpush1.bf16.xpose.msra.mxu0 0
      %397 = vmatprep.subr.bf16.mxu0 0
      %398 = vmatpush1.bf16.xpose.msra.mxu0 0
      %399 = vmatprep.subr.bf16.mxu0 0
      %400 = vmatpush1.bf16.xpose.msra.mxu0 0
      %401 = vmatprep.subr.bf16.mxu0 0
      %402 = vmatpush1.bf16.xpose.msra.mxu0 0
      %403 = vmatprep.subr.bf16.mxu0 0
      %404 = vmatpush1.bf16.xpose.msra.mxu0 0
      %405 = vmatprep.mubr.bf16.mxu0 0
      %406 = vmatmul.mubr.bf16.gmra.mrb[0].mxu0 %v368
      %v407 = vpop.f32.mrb[0].mxu0
      %v408 = vadd.f32 0.0, %v407
      %v409 = vpop.f32.mrb[0].mxu0
      %v410 = vpop.f32.mrb[0].mxu0
      %v411 = vpop.f32.mrb[0].mxu0
      %412 = vdwg.mxu0
      %v413 = vld [vmem:[#allocation2] sm:$0xff]
      %vm414 = vcmask 64512
      %v415 = vsel %vm414, %v408, -inf
      %416 = vmax.xlane.f32.xlu0 %v415
      %v417 = vpop.xlane.xlu0 %416
      %v418 = vmax.f32 %v413, %v417
      %420 = vset.pattern.permute.xlu0 0
      %421 = vperm.xlu0 %420, %v418
      %v422 = vpop.permute.xlu0 %421
      %v424 = vsub.f32 %v408, %v422
      %v425 = vmul.f32 %v424, 1.442695
      %v426 = vpow.pop %v425
      %v427 = vsel %vm365, 16843009, 0
      %v428 = vunpack.c.0.s8 %v427
      %vm429 = vcmp.ne.s32.totalorder %v428, 0
      %v430 = vsel %vm429, %v426, 0.0
      %v431 = vsub.f32 %v413, %v418
      %v432 = vmul.f32 %v431, 1.442695
      %v433 = vpow.pop %v432
      %v434 = vld [vmem:[#allocation3] sm:$0xff]
      %v435 = vmul.f32 %v433, %v434
      %v436 = vsel %vm414, %v430, 0.0
      %437 = vadd.xlane.f32.xlu0 %v436
      %v438 = vpop.xlane.xlu0 %437
      %v439 = vadd.f32 %v435, %v438
      %vm440 = vcmask 7168
      %441 = vst.msk [vmem:[#allocation3] sm:$0xff] %vm440, %v439
      %v442 = vld [vmem:[#allocation4] sm:$0xff]
      %444 = vset.pattern.permute.xlu0 0
      %445 = vperm.xlu0 %444, %v433
      %v446 = vpop.permute.xlu0 %445
      %v448 = vmul.f32 %v446, %v442
      %v449 = vpack.c.bf16 %v430, %v430
      %v451 = vsel %vm414, %v449, 0
      %vm453 = vcmask 1043456
      %v455 = vsel %vm453, %v363, 0
      %457 = vmatprep.subr.bf16.mxu0 0
      %458 = vmatpush1.bf16.msra.mxu0 %v455
      %459 = vmatprep.subr.bf16.mxu0 0
      %460 = vmatpush1.bf16.msra.mxu0 0
      %461 = vmatprep.subr.bf16.mxu0 0
      %462 = vmatpush1.bf16.msra.mxu0 0
      %463 = vmatprep.subr.bf16.mxu0 0
      %464 = vmatpush1.bf16.msra.mxu0 0
      %465 = vmatprep.subr.bf16.mxu0 0
      %466 = vmatpush1.bf16.msra.mxu0 0
      %467 = vmatprep.subr.bf16.mxu0 0
      %468 = vmatpush1.bf16.msra.mxu0 0
      %469 = vmatprep.subr.bf16.mxu0 0
      %470 = vmatpush1.bf16.msra.mxu0 0
      %471 = vmatprep.subr.bf16.mxu0 0
      %472 = vmatpush1.bf16.msra.mxu0 0
      %473 = vmatprep.subr.bf16.mxu0 0
      %474 = vmatpush1.bf16.msra.mxu0 0
      %475 = vmatprep.subr.bf16.mxu0 0
      %476 = vmatpush1.bf16.msra.mxu0 0
      %477 = vmatprep.subr.bf16.mxu0 0
      %478 = vmatpush1.bf16.msra.mxu0 0
      %479 = vmatprep.subr.bf16.mxu0 0
      %480 = vmatpush1.bf16.msra.mxu0 0
      %481 = vmatprep.subr.bf16.mxu0 0
      %482 = vmatpush1.bf16.msra.mxu0 0
      %483 = vmatprep.subr.bf16.mxu0 0
      %484 = vmatpush1.bf16.msra.mxu0 0
      %485 = vmatprep.subr.bf16.mxu0 0
      %486 = vmatpush1.bf16.msra.mxu0 0
      %487 = vmatprep.subr.bf16.mxu0 0
      %488 = vmatpush1.bf16.msra.mxu0 0
      %489 = vmatprep.mubr.bf16.mxu0 0
      %490 = vmatmul.mubr.bf16.gmra.mrb[0].mxu0 %v451
      %v491 = vpop.f32.mrb[0].mxu0
      %v492 = vadd.f32 0.0, %v491
      %v493 = vpop.f32.mrb[0].mxu0
      %v494 = vpop.f32.mrb[0].mxu0
      %v495 = vpop.f32.mrb[0].mxu0
      %496 = vdwg.mxu0
      %v497 = vadd.f32 %v448, %v492
      %498 = vst.msk [vmem:[#allocation4] sm:$0xff] %vm366, %v497
      %499 = vst.msk [vmem:[#allocation2] sm:$0xff] %vm440, %v418
      %v501 = vunpack.c.l.b16 %v361
      %v502 = vpack.c.b16 %v501, %v501
      %503 = vrot.lane.b32.xlu0 %v502, 96
      %v504 = vpop.permute.xlu0 %503
      %v506 = vunpack.c.l.b16 %v362
      %v507 = vpack.c.b16 %v506, %v506
      %508 = vrot.lane.b32.xlu0 %v507, 96
      %v509 = vpop.permute.xlu0 %508
      %v511 = vsel %vm366, %v504, 0
      %v514 = vsel %vm366, %v509, 0
      %516 = vmatprep.subr.bf16.mxu0 0
      %517 = vmatpush1.bf16.xpose.msra.mxu0 %v514
      %518 = vmatprep.subr.bf16.mxu0 0
      %519 = vmatpush1.bf16.xpose.msra.mxu0 0
      %520 = vmatprep.subr.bf16.mxu0 0
      %521 = vmatpush1.bf16.xpose.msra.mxu0 0
      %522 = vmatprep.subr.bf16.mxu0 0
      %523 = vmatpush1.bf16.xpose.msra.mxu0 0
      %524 = vmatprep.subr.bf16.mxu0 0
      %525 = vmatpush1.bf16.xpose.msra.mxu0 0
      %526 = vmatprep.subr.bf16.mxu0 0
      %527 = vmatpush1.bf16.xpose.msra.mxu0 0
      %528 = vmatprep.subr.bf16.mxu0 0
      %529 = vmatpush1.bf16.xpose.msra.mxu0 0
      %530 = vmatprep.subr.bf16.mxu0 0
      %531 = vmatpush1.bf16.xpose.msra.mxu0 0
      %532 = vmatprep.subr.bf16.mxu0 0
      %533 = vmatpush1.bf16.xpose.msra.mxu0 0
      %534 = vmatprep.subr.bf16.mxu0 0
      %535 = vmatpush1.bf16.xpose.msra.mxu0 0
      %536 = vmatprep.subr.bf16.mxu0 0
      %537 = vmatpush1.bf16.xpose.msra.mxu0 0
      %538 = vmatprep.subr.bf16.mxu0 0
      %539 = vmatpush1.bf16.xpose.msra.mxu0 0
      %540 = vmatprep.subr.bf16.mxu0 0
      %541 = vmatpush1.bf16.xpose.msra.mxu0 0
      %542 = vmatprep.subr.bf16.mxu0 0
      %543 = vmatpush1.bf16.xpose.msra.mxu0 0
      %544 = vmatprep.subr.bf16.mxu0 0
      %545 = vmatpush1.bf16.xpose.msra.mxu0 0
      %546 = vmatprep.subr.bf16.mxu0 0
      %547 = vmatpush1.bf16.xpose.msra.mxu0 0
      %548 = vmatprep.mubr.bf16.mxu0 0
      %549 = vmatmul.mubr.bf16.gmra.mrb[0].mxu0 %v511
      %v550 = vpop.f32.mrb[0].mxu0
      %v551 = vadd.f32 0.0, %v550
      %v552 = vpop.f32.mrb[0].mxu0
      %v553 = vpop.f32.mrb[0].mxu0
      %v554 = vpop.f32.mrb[0].mxu0
      %555 = vdwg.mxu0
      %v556 = vld [vmem:[#allocation2] sm:$0xff]
      %v557 = vsel %vm414, %v551, -inf
      %558 = vmax.xlane.f32.xlu0 %v557
      %v559 = vpop.xlane.xlu0 %558
      %v560 = vmax.f32 %v556, %v559
      %562 = vset.pattern.permute.xlu0 1
      %563 = vperm.xlu0 %562, %v560
      %v564 = vpop.permute.xlu0 %563
      %v566 = vsub.f32 %v551, %v564
      %v567 = vmul.f32 %v566, 1.442695
      %v568 = vpow.pop %v567
      %v569 = vsel %vm429, %v568, 0.0
      %v570 = vsub.f32 %v556, %v560
      %v571 = vmul.f32 %v570, 1.442695
      %v572 = vpow.pop %v571
      %v573 = vld [vmem:[#allocation3] sm:$0xff]
      %v574 = vmul.f32 %v572, %v573
      %v575 = vsel %vm414, %v569, 0.0
      %576 = vadd.xlane.f32.xlu0 %v575
      %v577 = vpop.xlane.xlu0 %576
      %v578 = vadd.f32 %v574, %v577
      %vm579 = vcmask 15368
      %580 = vst.msk [vmem:[#allocation3] sm:$0xff] %vm579, %v578
      %v581 = vld [vmem:[#allocation4] sm:$0xff]
      %583 = vset.pattern.permute.xlu0 1
      %584 = vperm.xlu0 %583, %v572
      %v585 = vpop.permute.xlu0 %584
      %v587 = vmul.f32 %v585, %v581
      %v588 = vpack.c.bf16 %v569, %v569
      %v590 = vunpack.c.l.b16 %v363
      %v591 = vpack.c.b16 %v590, %v590
      %592 = vrot.lane.b32.xlu0 %v591, 96
      %v593 = vpop.permute.xlu0 %592
      %v595 = vsel %vm414, %v588, 0
      %v598 = vsel %vm453, %v593, 0
      %600 = vmatprep.subr.bf16.mxu0 0
      %601 = vmatpush1.bf16.msra.mxu0 %v598
      %602 = vmatprep.subr.bf16.mxu0 0
      %603 = vmatpush1.bf16.msra.mxu0 0
      %604 = vmatprep.subr.bf16.mxu0 0
      %605 = vmatpush1.bf16.msra.mxu0 0
      %606 = vmatprep.subr.bf16.mxu0 0
      %607 = vmatpush1.bf16.msra.mxu0 0
      %608 = vmatprep.subr.bf16.mxu0 0
      %609 = vmatpush1.bf16.msra.mxu0 0
      %610 = vmatprep.subr.bf16.mxu0 0
      %611 = vmatpush1.bf16.msra.mxu0 0
      %612 = vmatprep.subr.bf16.mxu0 0
      %613 = vmatpush1.bf16.msra.mxu0 0
      %614 = vmatprep.subr.bf16.mxu0 0
      %615 = vmatpush1.bf16.msra.mxu0 0
      %616 = vmatprep.subr.bf16.mxu0 0
      %617 = vmatpush1.bf16.msra.mxu0 0
      %618 = vmatprep.subr.bf16.mxu0 0
      %619 = vmatpush1.bf16.msra.mxu0 0
      %620 = vmatprep.subr.bf16.mxu0 0
      %621 = vmatpush1.bf16.msra.mxu0 0
      %622 = vmatprep.subr.bf16.mxu0 0
      %623 = vmatpush1.bf16.msra.mxu0 0
      %624 = vmatprep.subr.bf16.mxu0 0
      %625 = vmatpush1.bf16.msra.mxu0 0
      %626 = vmatprep.subr.bf16.mxu0 0
      %627 = vmatpush1.bf16.msra.mxu0 0
      %628 = vmatprep.subr.bf16.mxu0 0
      %629 = vmatpush1.bf16.msra.mxu0 0
      %630 = vmatprep.subr.bf16.mxu0 0
      %631 = vmatpush1.bf16.msra.mxu0 0
      %632 = vmatprep.mubr.bf16.mxu0 0
      %633 = vmatmul.mubr.bf16.gmra.mrb[0].mxu0 %v595
      %v634 = vpop.f32.mrb[0].mxu0
      %v635 = vadd.f32 0.0, %v634
      %v636 = vpop.f32.mrb[0].mxu0
      %v637 = vpop.f32.mrb[0].mxu0
      %v638 = vpop.f32.mrb[0].mxu0
      %639 = vdwg.mxu0
      %641 = vrot.lane.b32.xlu0 %v635, 32
      %v642 = vpop.permute.xlu0 %641
      %v644 = vadd.f32 %v587, %v642
      %vm645 = vcmask 523520
      %646 = vst.msk [vmem:[#allocation4] sm:$0xff] %vm645, %v644
      %647 = vst.msk [vmem:[#allocation2] sm:$0xff] %vm579, %v560
      %648 = vrot.lane.b32.xlu0 %v502, 64
      %v649 = vpop.permute.xlu0 %648
      %650 = vrot.lane.b32.xlu0 %v507, 64
      %v651 = vpop.permute.xlu0 %650
      %v653 = vsel %vm366, %v649, 0
      %v656 = vsel %vm366, %v651, 0
      %658 = vmatprep.subr.bf16.mxu0 0
      %659 = vmatpush1.bf16.xpose.msra.mxu0 %v656
      %660 = vmatprep.subr.bf16.mxu0 0
      %661 = vmatpush1.bf16.xpose.msra.mxu0 0
      %662 = vmatprep.subr.bf16.mxu0 0
      %663 = vmatpush1.bf16.xpose.msra.mxu0 0
      %664 = vmatprep.subr.bf16.mxu0 0
      %665 = vmatpush1.bf16.xpose.msra.mxu0 0
      %666 = vmatprep.subr.bf16.mxu0 0
      %667 = vmatpush1.bf16.xpose.msra.mxu0 0
      %668 = vmatprep.subr.bf16.mxu0 0
      %669 = vmatpush1.bf16.xpose.msra.mxu0 0
      %670 = vmatprep.subr.bf16.mxu0 0
      %671 = vmatpush1.bf16.xpose.msra.mxu0 0
      %672 = vmatprep.subr.bf16.mxu0 0
      %673 = vmatpush1.bf16.xpose.msra.mxu0 0
      %674 = vmatprep.subr.bf16.mxu0 0
      %675 = vmatpush1.bf16.xpose.msra.mxu0 0
      %676 = vmatprep.subr.bf16.mxu0 0
      %677 = vmatpush1.bf16.xpose.msra.mxu0 0
      %678 = vmatprep.subr.bf16.mxu0 0
      %679 = vmatpush1.bf16.xpose.msra.mxu0 0
      %680 = vmatprep.subr.bf16.mxu0 0
      %681 = vmatpush1.bf16.xpose.msra.mxu0 0
      %682 = vmatprep.subr.bf16.mxu0 0
      %683 = vmatpush1.bf16.xpose.msra.mxu0 0
      %684 = vmatprep.subr.bf16.mxu0 0
      %685 = vmatpush1.bf16.xpose.msra.mxu0 0
      %686 = vmatprep.subr.bf16.mxu0 0
      %687 = vmatpush1.bf16.xpose.msra.mxu0 0
      %688 = vmatprep.subr.bf16.mxu0 0
      %689 = vmatpush1.bf16.xpose.msra.mxu0 0
      %690 = vmatprep.mubr.bf16.mxu0 0
      %691 = vmatmul.mubr.bf16.gmra.mrb[0].mxu0 %v653
      %v692 = vpop.f32.mrb[0].mxu0
      %v693 = vadd.f32 0.0, %v692
      %v694 = vpop.f32.mrb[0].mxu0
      %v695 = vpop.f32.mrb[0].mxu0
      %v696 = vpop.f32.mrb[0].mxu0
      %697 = vdwg.mxu0
      %v698 = vld [vmem:[#allocation2] sm:$0xff]
      %v699 = vsel %vm414, %v693, -inf
      %700 = vmax.xlane.f32.xlu0 %v699
      %v701 = vpop.xlane.xlu0 %700
      %v702 = vmax.f32 %v698, %v701
      %704 = vset.pattern.permute.xlu0 2
      %705 = vperm.xlu0 %704, %v702
      %v706 = vpop.permute.xlu0 %705
      %v708 = vsub.f32 %v693, %v706
      %v709 = vmul.f32 %v708, 1.442695
      %v710 = vpow.pop %v709
      %v711 = vsel %vm429, %v710, 0.0
      %v712 = vsub.f32 %v698, %v702
      %v713 = vmul.f32 %v712, 1.442695
      %v714 = vpow.pop %v713
      %v715 = vld [vmem:[#allocation3] sm:$0xff]
      %v716 = vmul.f32 %v714, %v715
      %v717 = vsel %vm414, %v711, 0.0
      %718 = vadd.xlane.f32.xlu0 %v717
      %v719 = vpop.xlane.xlu0 %718
      %v720 = vadd.f32 %v716, %v719
      %vm721 = vcmask 23568
      %722 = vst.msk [vmem:[#allocation3] sm:$0xff] %vm721, %v720
      %v723 = vld [vmem:[#allocation4] sm:$0xff]
      %725 = vset.pattern.permute.xlu0 2
      %726 = vperm.xlu0 %725, %v714
      %v727 = vpop.permute.xlu0 %726
      %v729 = vmul.f32 %v727, %v723
      %v730 = vpack.c.bf16 %v711, %v711
      %731 = vrot.lane.b32.xlu0 %v591, 64
      %v732 = vpop.permute.xlu0 %731
      %v734 = vsel %vm414, %v730, 0
      %v737 = vsel %vm453, %v732, 0
      %739 = vmatprep.subr.bf16.mxu0 0
      %740 = vmatpush1.bf16.msra.mxu0 %v737
      %741 = vmatprep.subr.bf16.mxu0 0
      %742 = vmatpush1.bf16.msra.mxu0 0
      %743 = vmatprep.subr.bf16.mxu0 0
      %744 = vmatpush1.bf16.msra.mxu0 0
      %745 = vmatprep.subr.bf16.mxu0 0
      %746 = vmatpush1.bf16.msra.mxu0 0
      %747 = vmatprep.subr.bf16.mxu0 0
      %748 = vmatpush1.bf16.msra.mxu0 0
      %749 = vmatprep.subr.bf16.mxu0 0
      %750 = vmatpush1.bf16.msra.mxu0 0
      %751 = vmatprep.subr.bf16.mxu0 0
      %752 = vmatpush1.bf16.msra.mxu0 0
      %753 = vmatprep.subr.bf16.mxu0 0
      %754 = vmatpush1.bf16.msra.mxu0 0
      %755 = vmatprep.subr.bf16.mxu0 0
      %756 = vmatpush1.bf16.msra.mxu0 0
      %757 = vmatprep.subr.bf16.mxu0 0
      %758 = vmatpush1.bf16.msra.mxu0 0
      %759 = vmatprep.subr.bf16.mxu0 0
      %760 = vmatpush1.bf16.msra.mxu0 0
      %761 = vmatprep.subr.bf16.mxu0 0
      %762 = vmatpush1.bf16.msra.mxu0 0
      %763 = vmatprep.subr.bf16.mxu0 0
      %764 = vmatpush1.bf16.msra.mxu0 0
      %765 = vmatprep.subr.bf16.mxu0 0
      %766 = vmatpush1.bf16.msra.mxu0 0
      %767 = vmatprep.subr.bf16.mxu0 0
      %768 = vmatpush1.bf16.msra.mxu0 0
      %769 = vmatprep.subr.bf16.mxu0 0
      %770 = vmatpush1.bf16.msra.mxu0 0
      %771 = vmatprep.mubr.bf16.mxu0 0
      %772 = vmatmul.mubr.bf16.gmra.mrb[0].mxu0 %v734
      %v773 = vpop.f32.mrb[0].mxu0
      %v774 = vadd.f32 0.0, %v773
      %v775 = vpop.f32.mrb[0].mxu0
      %v776 = vpop.f32.mrb[0].mxu0
      %v777 = vpop.f32.mrb[0].mxu0
      %778 = vdwg.mxu0
      %780 = vrot.lane.b32.xlu0 %v774, 64
      %v781 = vpop.permute.xlu0 %780
      %v783 = vadd.f32 %v729, %v781
      %vm784 = vcmask 785920
      %785 = vst.msk [vmem:[#allocation4] sm:$0xff] %vm784, %v783
      %786 = vst.msk [vmem:[#allocation2] sm:$0xff] %vm721, %v702
      %787 = vrot.lane.b32.xlu0 %v502, 32
      %v788 = vpop.permute.xlu0 %787
      %789 = vrot.lane.b32.xlu0 %v507, 32
      %v790 = vpop.permute.xlu0 %789
      %v792 = vsel %vm366, %v788, 0
      %v795 = vsel %vm366, %v790, 0
      %797 = vmatprep.subr.bf16.mxu0 0
      %798 = vmatpush1.bf16.xpose.msra.mxu0 %v795
      %799 = vmatprep.subr.bf16.mxu0 0
      %800 = vmatpush1.bf16.xpose.msra.mxu0 0
      %801 = vmatprep.subr.bf16.mxu0 0
      %802 = vmatpush1.bf16.xpose.msra.mxu0 0
      %803 = vmatprep.subr.bf16.mxu0 0
      %804 = vmatpush1.bf16.xpose.msra.mxu0 0
      %805 = vmatprep.subr.bf16.mxu0 0
      %806 = vmatpush1.bf16.xpose.msra.mxu0 0
      %807 = vmatprep.subr.bf16.mxu0 0
      %808 = vmatpush1.bf16.xpose.msra.mxu0 0
      %809 = vmatprep.subr.bf16.mxu0 0
      %810 = vmatpush1.bf16.xpose.msra.mxu0 0
      %811 = vmatprep.subr.bf16.mxu0 0
      %812 = vmatpush1.bf16.xpose.msra.mxu0 0
      %813 = vmatprep.subr.bf16.mxu0 0
      %814 = vmatpush1.bf16.xpose.msra.mxu0 0
      %815 = vmatprep.subr.bf16.mxu0 0
      %816 = vmatpush1.bf16.xpose.msra.mxu0 0
      %817 = vmatprep.subr.bf16.mxu0 0
      %818 = vmatpush1.bf16.xpose.msra.mxu0 0
      %819 = vmatprep.subr.bf16.mxu0 0
      %820 = vmatpush1.bf16.xpose.msra.mxu0 0
      %821 = vmatprep.subr.bf16.mxu0 0
      %822 = vmatpush1.bf16.xpose.msra.mxu0 0
      %823 = vmatprep.subr.bf16.mxu0 0
      %824 = vmatpush1.bf16.xpose.msra.mxu0 0
      %825 = vmatprep.subr.bf16.mxu0 0
      %826 = vmatpush1.bf16.xpose.msra.mxu0 0
      %827 = vmatprep.subr.bf16.mxu0 0
      %828 = vmatpush1.bf16.xpose.msra.mxu0 0
      %829 = vmatprep.mubr.bf16.mxu0 0
      %830 = vmatmul.mubr.bf16.gmra.mrb[0].mxu0 %v792
      %v831 = vpop.f32.mrb[0].mxu0
      %v832 = vadd.f32 0.0, %v831
      %v833 = vpop.f32.mrb[0].mxu0
      %v834 = vpop.f32.mrb[0].mxu0
      %v835 = vpop.f32.mrb[0].mxu0
      %836 = vdwg.mxu0
      %v837 = vld [vmem:[#allocation2] sm:$0xff]
      %v838 = vsel %vm414, %v832, -inf
      %839 = vmax.xlane.f32.xlu0 %v838
      %v840 = vpop.xlane.xlu0 %839
      %v841 = vmax.f32 %v837, %v840
      %843 = vset.pattern.permute.xlu0 3
      %844 = vperm.xlu0 %843, %v841
      %v845 = vpop.permute.xlu0 %844
      %v847 = vsub.f32 %v832, %v845
      %v848 = vmul.f32 %v847, 1.442695
      %v849 = vpow.pop %v848
      %v850 = vsel %vm429, %v849, 0.0
      %v851 = vsub.f32 %v837, %v841
      %v852 = vmul.f32 %v851, 1.442695
      %v853 = vpow.pop %v852
      %v854 = vld [vmem:[#allocation3] sm:$0xff]
      %v855 = vmul.f32 %v853, %v854
      %v856 = vsel %vm414, %v850, 0.0
      %857 = vadd.xlane.f32.xlu0 %v856
      %v858 = vpop.xlane.xlu0 %857
      %v859 = vadd.f32 %v855, %v858
      %vm860 = vcmask 31768
      %861 = vst.msk [vmem:[#allocation3] sm:$0xff] %vm860, %v859
      %v862 = vld [vmem:[#allocation4] sm:$0xff]
      %864 = vset.pattern.permute.xlu0 3
      %865 = vperm.xlu0 %864, %v853
      %v866 = vpop.permute.xlu0 %865
      %v868 = vmul.f32 %v866, %v862
      %v869 = vpack.c.bf16 %v850, %v850
      %870 = vrot.lane.b32.xlu0 %v591, 32
      %v871 = vpop.permute.xlu0 %870
      %v873 = vsel %vm414, %v869, 0
      %v876 = vsel %vm453, %v871, 0
      %878 = vmatprep.subr.bf16.mxu0 0
      %879 = vmatpush1.bf16.msra.mxu0 %v876
      %880 = vmatprep.subr.bf16.mxu0 0
      %881 = vmatpush1.bf16.msra.mxu0 0
      %882 = vmatprep.subr.bf16.mxu0 0
      %883 = vmatpush1.bf16.msra.mxu0 0
      %884 = vmatprep.subr.bf16.mxu0 0
      %885 = vmatpush1.bf16.msra.mxu0 0
      %886 = vmatprep.subr.bf16.mxu0 0
      %887 = vmatpush1.bf16.msra.mxu0 0
      %888 = vmatprep.subr.bf16.mxu0 0
      %889 = vmatpush1.bf16.msra.mxu0 0
      %890 = vmatprep.subr.bf16.mxu0 0
      %891 = vmatpush1.bf16.msra.mxu0 0
      %892 = vmatprep.subr.bf16.mxu0 0
      %893 = vmatpush1.bf16.msra.mxu0 0
      %894 = vmatprep.subr.bf16.mxu0 0
      %895 = vmatpush1.bf16.msra.mxu0 0
      %896 = vmatprep.subr.bf16.mxu0 0
      %897 = vmatpush1.bf16.msra.mxu0 0
      %898 = vmatprep.subr.bf16.mxu0 0
      %899 = vmatpush1.bf16.msra.mxu0 0
      %900 = vmatprep.subr.bf16.mxu0 0
      %901 = vmatpush1.bf16.msra.mxu0 0
      %902 = vmatprep.subr.bf16.mxu0 0
      %903 = vmatpush1.bf16.msra.mxu0 0
      %904 = vmatprep.subr.bf16.mxu0 0
      %905 = vmatpush1.bf16.msra.mxu0 0
      %906 = vmatprep.subr.bf16.mxu0 0
      %907 = vmatpush1.bf16.msra.mxu0 0
      %908 = vmatprep.subr.bf16.mxu0 0
      %909 = vmatpush1.bf16.msra.mxu0 0
      %910 = vmatprep.mubr.bf16.mxu0 0
      %911 = vmatmul.mubr.bf16.gmra.mrb[0].mxu0 %v873
      %v912 = vpop.f32.mrb[0].mxu0
      %v913 = vadd.f32 0.0, %v912
      %v914 = vpop.f32.mrb[0].mxu0
      %v915 = vpop.f32.mrb[0].mxu0
      %v916 = vpop.f32.mrb[0].mxu0
      %917 = vdwg.mxu0
      %919 = vrot.lane.b32.xlu0 %v913, 96
      %v920 = vpop.permute.xlu0 %919
      %v922 = vadd.f32 %v868, %v920
      %vm923 = vcmask 1048320
      %924 = vst.msk [vmem:[#allocation4] sm:$0xff] %vm923, %v922
      %925 = vst.msk [vmem:[#allocation2] sm:$0xff] %vm860, %v841
      // Predicated region
      $region41: #{decoder_forward.20} parent=35 // pred_check
        %p926 = pneg %p353
      $region42: #{decoder_forward.20} parent=35 // pred_check_branch
        %928 = sbr.rel (%p926) target = $region44
      $region43: #{decoder_forward.20} parent=35 // pred_region
        %v929 = vld [vmem:[#allocation3] sm:$0xff]
        %v930 = vmax.f32 %v929, 1e-30
        %v931 = vrcp.pop %v930
        %v932 = vld [vmem:[#allocation4] sm:$0xff]
        %934 = vset.pattern.permute.xlu0 0
        %935 = vperm.xlu0 %934, %v931
        %v936 = vpop.permute.xlu0 %935
        %v938 = vmul.f32 %v932, %v936
        %v939 = vpack.c.bf16 %v938, %v938
        %vm940 = vcmask 257024
        %941 = vst.msk [vmem:[%s349] sm:$0xf] %vm940, %v939
        %v942 = vld [vmem:[#allocation4] sm:$0xff]
        %943 = vset.pattern.permute.xlu0 1
        %944 = vperm.xlu0 %943, %v931
        %v945 = vpop.permute.xlu0 %944
        %v947 = vmul.f32 %v942, %v945
        %v948 = vpack.c.bf16 %v947, %v947
        %vm949 = vcmask 519424
        %950 = vst.msk [vmem:[%s349] sm:$0xf] %vm949, %v948
        %v951 = vld [vmem:[#allocation4] sm:$0xff]
        %952 = vset.pattern.permute.xlu0 2
        %953 = vperm.xlu0 %952, %v931
        %v954 = vpop.permute.xlu0 %953
        %v956 = vmul.f32 %v951, %v954
        %v957 = vpack.c.bf16 %v956, %v956
        %vm958 = vcmask 781824
        %959 = vst.msk [vmem:[%s349] sm:$0xf] %vm958, %v957
        %v960 = vld [vmem:[#allocation4] sm:$0xff]
        %961 = vset.pattern.permute.xlu0 3
        %962 = vperm.xlu0 %961, %v931
        %v963 = vpop.permute.xlu0 %962
        %v965 = vmul.f32 %v960, %v963
        %v966 = vpack.c.bf16 %v965, %v965
        %vm967 = vcmask 1044224
        %968 = vst.msk [vmem:[%s349] sm:$0xf] %vm967, %v966
      $region44: #{decoder_forward.20} parent=35 // pred_fallthru
        _
      %p969 = scmp.lt.s32.totalorder %s20, 1
      %s970 = scalar_select %p969, %s20, 1
      %p971 = scmp.lt.s32.totalorder %s21, 0
      %s972 = scalar_select %p971, %s21, 0
      %s973 = sadd.s32 %s972, %s970
      %s974 = smul.addr %s973, 4
      %s975 = scalar_lea.vmem %s4, %s974
      // Predicated region
      $region45: #{decoder_forward.20} parent=35 // pred_check
        %p976 = pneg %p168
      $region46: #{decoder_forward.20} parent=35 // pred_check_branch
        %978 = sbr.rel (%p976) target = $region48
      $region47: #{decoder_forward.20} parent=35 // pred_region
        _
      $region48: #{decoder_forward.20} parent=35 // pred_fallthru
        _
    $region36: #{decoder_forward.20} parent=5 // pred_fallthru
      _
    %p979 = scmp.le.s32.totalorder 2, %s10
    // Predicated region
    $region49: #{decoder_forward.20} parent=5 // pred_check
      %p980 = pneg %p979
    $region50: #{decoder_forward.20} parent=5 // pred_check_branch
      %982 = sbr.rel (%p980) target = $region52
    $region51: #{decoder_forward.20} parent=5 // pred_region
      %s983 = ssub.s32 %s10, 2
      // Predicated region
      $region53: #{decoder_forward.20} parent=51 // pred_check
        %p984 = pneg %p174
      $region54: #{decoder_forward.20} parent=51 // pred_check_branch
        %986 = sbr.rel (%p984) target = $region56
      $region55: #{decoder_forward.20} parent=51 // pred_region
        %p987 = scmp.lt.s32.totalorder %s23, 1
        %s988 = scalar_select %p987, %s23, 1
        %p989 = scmp.lt.s32.totalorder %s24, 0
        %s990 = scalar_select %p989, %s24, 0
        %s991 = sadd.s32 %s990, %s988
        %s992 = smul.addr %s991, 4
        %s993 = scalar_lea.vmem %s4, %s992
      $region56: #{decoder_forward.20} parent=51 // pred_fallthru
        _
    $region52: #{decoder_forward.20} parent=5 // pred_fallthru
      _
  $region6: #{decoder_forward.20} parent=0 // loop_footer
    %s14 = sadd.s32 1, %s10
  $region7: #{decoder_forward.20} parent=0 // loop_footer_branch
    %9 = sbr.rel target = $region3
  $region8: #{decoder_forward.20} parent=0 // loop_exit
    _

// kernel: decoder_forward.26
$region0: #{decoder_forward.26}
  #allocation0 [shape = 'u32[]', space=smem, size = 0x4, offset = 0x4, fixed_abs, tag = 'smem constant byte address 0x4 - core index']
  #allocation1 [shape = 'u32[144,128]{1,0:T(1,128)}', space=vmem, size = 0x12000, scoped, tag = 'internal scratch']
  #allocation2 [shape = 'f32[16,256]{1,0:T(8,128)}', space=vmem, size = 0x4000, scoped, tag = 'scratch operand']
  %s0 = inlined_call_operand.vmem [shape: bf16[16,128], index: 0, kind: input, shape index: {}]
  %s1 = inlined_call_operand.vmem [shape: bf16[128,256], index: 1, kind: input, shape index: {}]
  %s2 = inlined_call_operand.vmem [shape: f32[1,256], index: 2, kind: input, shape index: {}]
  %s3 = inlined_call_operand.vmem [shape: bf16[16,256], index: 3, kind: output, shape index: {}]
  %s4 = sld [smem:[#allocation0]]
  $region30: #{decoder_forward.26} parent=0
    _
  %s6 = ssub.s32 1, %s4
  %s7 = scalar_select 0, %s6, %s4
  // Predicated region
  $region2: #{decoder_forward.26} parent=0 // pred_check
    _
  $region3: #{decoder_forward.26} parent=0 // pred_check_branch
    %9 = sbr.rel (0) target = $region5
  $region4: #{decoder_forward.26} parent=0 // pred_region
    _
  $region5: #{decoder_forward.26} parent=0 // pred_fallthru
    _
  // Predicated region
  $region6: #{decoder_forward.26} parent=0 // pred_check
    _
  $region7: #{decoder_forward.26} parent=0 // pred_check_branch
    %11 = sbr.rel (0) target = $region9
  $region8: #{decoder_forward.26} parent=0 // pred_region
    _
  $region9: #{decoder_forward.26} parent=0 // pred_fallthru
    _
  // Predicated region
  $region10: #{decoder_forward.26} parent=0 // pred_check
    _
  $region11: #{decoder_forward.26} parent=0 // pred_check_branch
    %13 = sbr.rel (0) target = $region13
  $region12: #{decoder_forward.26} parent=0 // pred_region
    _
  $region13: #{decoder_forward.26} parent=0 // pred_fallthru
    _
  %p15 = scmp.eq.s32.totalorder 0, 0
  // Predicated region
  $region14: #{decoder_forward.26} parent=0 // pred_check
    %p16 = pneg %p15
  $region15: #{decoder_forward.26} parent=0 // pred_check_branch
    %18 = sbr.rel (%p16) target = $region17
  $region16: #{decoder_forward.26} parent=0 // pred_region
    %19 = vst [vmem:[#allocation2] sm:$0xff] 0.0
    %20 = vst [vmem:[#allocation2 + $0x8] sm:$0xff] 0.0
    %21 = vst [vmem:[#allocation2 + $0x10] sm:$0xff] 0.0
    %22 = vst [vmem:[#allocation2 + $0x18] sm:$0xff] 0.0
  $region17: #{decoder_forward.26} parent=0 // pred_fallthru
    _
  %v23 = vld [vmem:[#allocation2] sm:$0xff]
  %v24 = vld [vmem:[#allocation2 + $0x8] sm:$0xff]
  %v25 = vld [vmem:[#allocation2 + $0x10] sm:$0xff]
  %v26 = vld [vmem:[#allocation2 + $0x18] sm:$0xff]
  %v27 = vld [vmem:[%s0] sm:$0xf]
  %v28 = vld [vmem:[%s0 + $0x4] sm:$0xf]
  %v29 = vld [vmem:[%s1] sm:$0xff]
  %v30 = vld [vmem:[%s1 + $0x8] sm:$0xff]
  %v31 = vld [vmem:[%s1 + $0x10] sm:$0xff]
  %v32 = vld [vmem:[%s1 + $0x18] sm:$0xff]
  %v33 = vld [vmem:[%s1 + $0x20] sm:$0xff]
  %v34 = vld [vmem:[%s1 + $0x28] sm:$0xff]
  %v35 = vld [vmem:[%s1 + $0x30] sm:$0xff]
  %v36 = vld [vmem:[%s1 + $0x38] sm:$0xff]
  %v37 = vld [vmem:[%s1 + $0x40] sm:$0xff]
  %v38 = vld [vmem:[%s1 + $0x48] sm:$0xff]
  %v39 = vld [vmem:[%s1 + $0x50] sm:$0xff]
  %v40 = vld [vmem:[%s1 + $0x58] sm:$0xff]
  %v41 = vld [vmem:[%s1 + $0x60] sm:$0xff]
  %v42 = vld [vmem:[%s1 + $0x68] sm:$0xff]
  %v43 = vld [vmem:[%s1 + $0x70] sm:$0xff]
  %v44 = vld [vmem:[%s1 + $0x78] sm:$0xff]
  %v47 = vunpack.c.l.b16 %v27
  %v48 = vunpack.c.l.b16 %v28
  %v49 = vpack.c.b16 %v48, %v47
  %v67 = vunpack.c.l.b16 %v29
  %v68 = vunpack.c.h.b16 %v29
  %v69 = vunpack.c.l.b16 %v30
  %v70 = vunpack.c.h.b16 %v30
  %v71 = vunpack.c.l.b16 %v31
  %v72 = vunpack.c.h.b16 %v31
  %v73 = vunpack.c.l.b16 %v32
  %v74 = vunpack.c.h.b16 %v32
  %v75 = vunpack.c.l.b16 %v33
  %v76 = vunpack.c.h.b16 %v33
  %v77 = vunpack.c.l.b16 %v34
  %v78 = vunpack.c.h.b16 %v34
  %v79 = vunpack.c.l.b16 %v35
  %v80 = vunpack.c.h.b16 %v35
  %v81 = vunpack.c.l.b16 %v36
  %v82 = vunpack.c.h.b16 %v36
  %v83 = vunpack.c.l.b16 %v37
  %v84 = vunpack.c.h.b16 %v37
  %v85 = vunpack.c.l.b16 %v38
  %v86 = vunpack.c.h.b16 %v38
  %v87 = vunpack.c.l.b16 %v39
  %v88 = vunpack.c.h.b16 %v39
  %v89 = vunpack.c.l.b16 %v40
  %v90 = vunpack.c.h.b16 %v40
  %v91 = vunpack.c.l.b16 %v41
  %v92 = vunpack.c.h.b16 %v41
  %v93 = vunpack.c.l.b16 %v42
  %v94 = vunpack.c.h.b16 %v42
  %v95 = vunpack.c.l.b16 %v43
  %v96 = vunpack.c.h.b16 %v43
  %v97 = vunpack.c.l.b16 %v44
  %v98 = vunpack.c.h.b16 %v44
  %v99 = vpack.c.b16 %v69, %v67
  %v100 = vpack.c.b16 %v70, %v68
  %v101 = vpack.c.b16 %v73, %v71
  %v102 = vpack.c.b16 %v74, %v72
  %v103 = vpack.c.b16 %v77, %v75
  %v104 = vpack.c.b16 %v78, %v76
  %v105 = vpack.c.b16 %v81, %v79
  %v106 = vpack.c.b16 %v82, %v80
  %v107 = vpack.c.b16 %v85, %v83
  %v108 = vpack.c.b16 %v86, %v84
  %v109 = vpack.c.b16 %v89, %v87
  %v110 = vpack.c.b16 %v90, %v88
  %v111 = vpack.c.b16 %v93, %v91
  %v112 = vpack.c.b16 %v94, %v92
  %v113 = vpack.c.b16 %v97, %v95
  %v114 = vpack.c.b16 %v98, %v96
  %131 = vmatprep.subr.bf16.mxu0 %v100
  %132 = vmatpush1.bf16.msra.mxu0 %v99
  %133 = vmatprep.subr.bf16.mxu0 %v102
  %134 = vmatpush1.bf16.msra.mxu0 %v101
  %135 = vmatprep.subr.bf16.mxu0 %v104
  %136 = vmatpush1.bf16.msra.mxu0 %v103
  %137 = vmatprep.subr.bf16.mxu0 %v106
  %138 = vmatpush1.bf16.msra.mxu0 %v105
  %139 = vmatprep.subr.bf16.mxu0 %v108
  %140 = vmatpush1.bf16.msra.mxu0 %v107
  %141 = vmatprep.subr.bf16.mxu0 %v110
  %142 = vmatpush1.bf16.msra.mxu0 %v109
  %143 = vmatprep.subr.bf16.mxu0 %v112
  %144 = vmatpush1.bf16.msra.mxu0 %v111
  %145 = vmatprep.subr.bf16.mxu0 %v114
  %146 = vmatpush1.bf16.msra.mxu0 %v113
  %147 = vmatprep.subr.bf16.mxu0 0
  %148 = vmatpush1.bf16.msra.mxu0 0
  %149 = vmatprep.subr.bf16.mxu0 0
  %150 = vmatpush1.bf16.msra.mxu0 0
  %151 = vmatprep.subr.bf16.mxu0 0
  %152 = vmatpush1.bf16.msra.mxu0 0
  %153 = vmatprep.subr.bf16.mxu0 0
  %154 = vmatpush1.bf16.msra.mxu0 0
  %155 = vmatprep.subr.bf16.mxu0 0
  %156 = vmatpush1.bf16.msra.mxu0 0
  %157 = vmatprep.subr.bf16.mxu0 0
  %158 = vmatpush1.bf16.msra.mxu0 0
  %159 = vmatprep.subr.bf16.mxu0 0
  %160 = vmatpush1.bf16.msra.mxu0 0
  %161 = vmatprep.subr.bf16.mxu0 0
  %162 = vmatpush1.bf16.msra.mxu0 0
  %163 = vmatprep.mubr.bf16.mxu0 0
  %164 = vmatmul.mubr.bf16.gmra.mrb[0].mxu0 %v49
  %v165 = vpop.f32.mrb[0].mxu0
  %v166 = vadd.f32 0.0, %v165
  %v167 = vpop.f32.mrb[0].mxu0
  %v168 = vadd.f32 0.0, %v167
  %v169 = vpop.f32.mrb[0].mxu0
  %v170 = vadd.f32 0.0, %v169
  %v171 = vpop.f32.mrb[0].mxu0
  %v172 = vadd.f32 0.0, %v171
  %173 = vdwg.mxu0
  %v174 = vadd.f32 %v23, %v166
  %v175 = vadd.f32 %v24, %v168
  %v176 = vadd.f32 %v25, %v170
  %v177 = vadd.f32 %v26, %v172
  %178 = vst [vmem:[#allocation2] sm:$0xff] %v174
  %179 = vst [vmem:[#allocation2 + $0x8] sm:$0xff] %v175
  %180 = vst [vmem:[#allocation2 + $0x10] sm:$0xff] %v176
  %181 = vst [vmem:[#allocation2 + $0x18] sm:$0xff] %v177
  // Predicated region
  $region18: #{decoder_forward.26} parent=0 // pred_check
    %p182 = pneg %p15
  $region19: #{decoder_forward.26} parent=0 // pred_check_branch
    %184 = sbr.rel (%p182) target = $region21
  $region20: #{decoder_forward.26} parent=0 // pred_region
    %v185 = vld [vmem:[#allocation2] sm:$0xff]
    %v186 = vld [vmem:[#allocation2 + $0x8] sm:$0xff]
    %v187 = vld [vmem:[#allocation2 + $0x10] sm:$0xff]
    %v188 = vld [vmem:[#allocation2 + $0x18] sm:$0xff]
    %v189 = vld [vmem:[%s2] sm:$0x3]
    %v191 = vlaneseq
    %v192 = vshrl.u32 %v191, 7
    %v193 = vsub.s32 0, %v192
    %v194 = vrot.slane %v189, %v193
    %v195 = vlaneseq
    %v196 = vshrl.u32 %v195, 7
    %v197 = vsub.s32 1, %v196
    %v198 = vrot.slane %v189, %v197
    %v201 = vadd.f32 %v185, %v194
    %v202 = vadd.f32 %v186, %v198
    %v203 = vadd.f32 %v187, %v194
    %v204 = vadd.f32 %v188, %v198
    %v205 = vmax.f32 %v201, 0.0
    %v206 = vmax.f32 %v202, 0.0
    %v207 = vmax.f32 %v203, 0.0
    %v208 = vmax.f32 %v204, 0.0
    %v209 = vpack.c.bf16 %v207, %v205
    %v210 = vpack.c.bf16 %v208, %v206
    %v213 = vunpack.c.l.b16 %v209
    %v214 = vunpack.c.l.b16 %v210
    %v215 = vunpack.c.h.b16 %v209
    %v216 = vunpack.c.h.b16 %v210
    %v217 = vpack.c.b16 %v214, %v213
    %v218 = vpack.c.b16 %v216, %v215
    %221 = vst [vmem:[%s3] sm:$0xff] %v217
    %222 = vst [vmem:[%s3 + $0x8] sm:$0xff] %v218
  $region21: #{decoder_forward.26} parent=0 // pred_fallthru
    _
  // Predicated region
  $region22: #{decoder_forward.26} parent=0 // pred_check
    _
  $region23: #{decoder_forward.26} parent=0 // pred_check_branch
    %224 = sbr.rel (0) target = $region25
  $region24: #{decoder_forward.26} parent=0 // pred_region
    _
  $region25: #{decoder_forward.26} parent=0 // pred_fallthru
    _
  // Predicated region
  $region26: #{decoder_forward.26} parent=0 // pred_check
    _
  $region27: #{decoder_forward.26} parent=0 // pred_check_branch
    %226 = sbr.rel (0) target = $region29
  $region28: #{decoder_forward.26} parent=0 // pred_region
    _
  $region29: #{decoder_forward.26} parent=0 // pred_fallthru
    _

// kernel: decoder_forward.23
$region0: #{decoder_forward.23}
  #allocation0 [shape = 'u32[]', space=smem, size = 0x4, offset = 0x4, fixed_abs, tag = 'smem constant byte address 0x4 - core index']
  #allocation1 [shape = 'u32[144,128]{1,0:T(1,128)}', space=vmem, size = 0x12000, scoped, tag = 'internal scratch']
  #allocation2 [shape = 'f32[16,256]{1,0:T(8,128)}', space=vmem, size = 0x4000, scoped, tag = 'scratch operand']
  %s0 = inlined_call_operand.vmem [shape: bf16[16,128], index: 0, kind: input, shape index: {}]
  %s1 = inlined_call_operand.vmem [shape: bf16[128,256], index: 1, kind: input, shape index: {}]
  %s2 = inlined_call_operand.vmem [shape: f32[1,256], index: 2, kind: input, shape index: {}]
  %s3 = inlined_call_operand.vmem [shape: bf16[16,256], index: 3, kind: output, shape index: {}]
  %s4 = sld [smem:[#allocation0]]
  $region30: #{decoder_forward.23} parent=0
    _
  %s6 = ssub.s32 1, %s4
  %s7 = scalar_select 0, %s6, %s4
  // Predicated region
  $region2: #{decoder_forward.23} parent=0 // pred_check
    _
  $region3: #{decoder_forward.23} parent=0 // pred_check_branch
    %9 = sbr.rel (0) target = $region5
  $region4: #{decoder_forward.23} parent=0 // pred_region
    _
  $region5: #{decoder_forward.23} parent=0 // pred_fallthru
    _
  // Predicated region
  $region6: #{decoder_forward.23} parent=0 // pred_check
    _
  $region7: #{decoder_forward.23} parent=0 // pred_check_branch
    %11 = sbr.rel (0) target = $region9
  $region8: #{decoder_forward.23} parent=0 // pred_region
    _
  $region9: #{decoder_forward.23} parent=0 // pred_fallthru
    _
  // Predicated region
  $region10: #{decoder_forward.23} parent=0 // pred_check
    _
  $region11: #{decoder_forward.23} parent=0 // pred_check_branch
    %13 = sbr.rel (0) target = $region13
  $region12: #{decoder_forward.23} parent=0 // pred_region
    _
  $region13: #{decoder_forward.23} parent=0 // pred_fallthru
    _
  %p15 = scmp.eq.s32.totalorder 0, 0
  // Predicated region
  $region14: #{decoder_forward.23} parent=0 // pred_check
    %p16 = pneg %p15
  $region15: #{decoder_forward.23} parent=0 // pred_check_branch
    %18 = sbr.rel (%p16) target = $region17
  $region16: #{decoder_forward.23} parent=0 // pred_region
    %19 = vst [vmem:[#allocation2] sm:$0xff] 0.0
    %20 = vst [vmem:[#allocation2 + $0x8] sm:$0xff] 0.0
    %21 = vst [vmem:[#allocation2 + $0x10] sm:$0xff] 0.0
    %22 = vst [vmem:[#allocation2 + $0x18] sm:$0xff] 0.0
  $region17: #{decoder_forward.23} parent=0 // pred_fallthru
    _
  %v23 = vld [vmem:[#allocation2] sm:$0xff]
  %v24 = vld [vmem:[#allocation2 + $0x8] sm:$0xff]
  %v25 = vld [vmem:[#allocation2 + $0x10] sm:$0xff]
  %v26 = vld [vmem:[#allocation2 + $0x18] sm:$0xff]
  %v27 = vld [vmem:[%s0] sm:$0xf]
  %v28 = vld [vmem:[%s0 + $0x4] sm:$0xf]
  %v29 = vld [vmem:[%s1] sm:$0xff]
  %v30 = vld [vmem:[%s1 + $0x8] sm:$0xff]
  %v31 = vld [vmem:[%s1 + $0x10] sm:$0xff]
  %v32 = vld [vmem:[%s1 + $0x18] sm:$0xff]
  %v33 = vld [vmem:[%s1 + $0x20] sm:$0xff]
  %v34 = vld [vmem:[%s1 + $0x28] sm:$0xff]
  %v35 = vld [vmem:[%s1 + $0x30] sm:$0xff]
  %v36 = vld [vmem:[%s1 + $0x38] sm:$0xff]
  %v37 = vld [vmem:[%s1 + $0x40] sm:$0xff]
  %v38 = vld [vmem:[%s1 + $0x48] sm:$0xff]
  %v39 = vld [vmem:[%s1 + $0x50] sm:$0xff]
  %v40 = vld [vmem:[%s1 + $0x58] sm:$0xff]
  %v41 = vld [vmem:[%s1 + $0x60] sm:$0xff]
  %v42 = vld [vmem:[%s1 + $0x68] sm:$0xff]
  %v43 = vld [vmem:[%s1 + $0x70] sm:$0xff]
  %v44 = vld [vmem:[%s1 + $0x78] sm:$0xff]
  %v47 = vunpack.c.l.b16 %v27
  %v48 = vunpack.c.l.b16 %v28
  %v49 = vpack.c.b16 %v48, %v47
  %v67 = vunpack.c.l.b16 %v29
  %v68 = vunpack.c.h.b16 %v29
  %v69 = vunpack.c.l.b16 %v30
  %v70 = vunpack.c.h.b16 %v30
  %v71 = vunpack.c.l.b16 %v31
  %v72 = vunpack.c.h.b16 %v31
  %v73 = vunpack.c.l.b16 %v32
  %v74 = vunpack.c.h.b16 %v32
  %v75 = vunpack.c.l.b16 %v33
  %v76 = vunpack.c.h.b16 %v33
  %v77 = vunpack.c.l.b16 %v34
  %v78 = vunpack.c.h.b16 %v34
  %v79 = vunpack.c.l.b16 %v35
  %v80 = vunpack.c.h.b16 %v35
  %v81 = vunpack.c.l.b16 %v36
  %v82 = vunpack.c.h.b16 %v36
  %v83 = vunpack.c.l.b16 %v37
  %v84 = vunpack.c.h.b16 %v37
  %v85 = vunpack.c.l.b16 %v38
  %v86 = vunpack.c.h.b16 %v38
  %v87 = vunpack.c.l.b16 %v39
  %v88 = vunpack.c.h.b16 %v39
  %v89 = vunpack.c.l.b16 %v40
  %v90 = vunpack.c.h.b16 %v40
  %v91 = vunpack.c.l.b16 %v41
  %v92 = vunpack.c.h.b16 %v41
  %v93 = vunpack.c.l.b16 %v42
  %v94 = vunpack.c.h.b16 %v42
  %v95 = vunpack.c.l.b16 %v43
  %v96 = vunpack.c.h.b16 %v43
  %v97 = vunpack.c.l.b16 %v44
  %v98 = vunpack.c.h.b16 %v44
  %v99 = vpack.c.b16 %v69, %v67
  %v100 = vpack.c.b16 %v70, %v68
  %v101 = vpack.c.b16 %v73, %v71
  %v102 = vpack.c.b16 %v74, %v72
  %v103 = vpack.c.b16 %v77, %v75
  %v104 = vpack.c.b16 %v78, %v76
  %v105 = vpack.c.b16 %v81, %v79
  %v106 = vpack.c.b16 %v82, %v80
  %v107 = vpack.c.b16 %v85, %v83
  %v108 = vpack.c.b16 %v86, %v84
  %v109 = vpack.c.b16 %v89, %v87
  %v110 = vpack.c.b16 %v90, %v88
  %v111 = vpack.c.b16 %v93, %v91
  %v112 = vpack.c.b16 %v94, %v92
  %v113 = vpack.c.b16 %v97, %v95
  %v114 = vpack.c.b16 %v98, %v96
  %131 = vmatprep.subr.bf16.mxu0 %v100
  %132 = vmatpush1.bf16.msra.mxu0 %v99
  %133 = vmatprep.subr.bf16.mxu0 %v102
  %134 = vmatpush1.bf16.msra.mxu0 %v101
  %135 = vmatprep.subr.bf16.mxu0 %v104
  %136 = vmatpush1.bf16.msra.mxu0 %v103
  %137 = vmatprep.subr.bf16.mxu0 %v106
  %138 = vmatpush1.bf16.msra.mxu0 %v105
  %139 = vmatprep.subr.bf16.mxu0 %v108
  %140 = vmatpush1.bf16.msra.mxu0 %v107
  %141 = vmatprep.subr.bf16.mxu0 %v110
  %142 = vmatpush1.bf16.msra.mxu0 %v109
  %143 = vmatprep.subr.bf16.mxu0 %v112
  %144 = vmatpush1.bf16.msra.mxu0 %v111
  %145 = vmatprep.subr.bf16.mxu0 %v114
  %146 = vmatpush1.bf16.msra.mxu0 %v113
  %147 = vmatprep.subr.bf16.mxu0 0
  %148 = vmatpush1.bf16.msra.mxu0 0
  %149 = vmatprep.subr.bf16.mxu0 0
  %150 = vmatpush1.bf16.msra.mxu0 0
  %151 = vmatprep.subr.bf16.mxu0 0
  %152 = vmatpush1.bf16.msra.mxu0 0
  %153 = vmatprep.subr.bf16.mxu0 0
  %154 = vmatpush1.bf16.msra.mxu0 0
  %155 = vmatprep.subr.bf16.mxu0 0
  %156 = vmatpush1.bf16.msra.mxu0 0
  %157 = vmatprep.subr.bf16.mxu0 0
  %158 = vmatpush1.bf16.msra.mxu0 0
  %159 = vmatprep.subr.bf16.mxu0 0
  %160 = vmatpush1.bf16.msra.mxu0 0
  %161 = vmatprep.subr.bf16.mxu0 0
  %162 = vmatpush1.bf16.msra.mxu0 0
  %163 = vmatprep.mubr.bf16.mxu0 0
  %164 = vmatmul.mubr.bf16.gmra.mrb[0].mxu0 %v49
  %v165 = vpop.f32.mrb[0].mxu0
  %v166 = vadd.f32 0.0, %v165
  %v167 = vpop.f32.mrb[0].mxu0
  %v168 = vadd.f32 0.0, %v167
  %v169 = vpop.f32.mrb[0].mxu0
  %v170 = vadd.f32 0.0, %v169
  %v171 = vpop.f32.mrb[0].mxu0
  %v172 = vadd.f32 0.0, %v171
  %173 = vdwg.mxu0
  %v174 = vadd.f32 %v23, %v166
  %v175 = vadd.f32 %v24, %v168
  %v176 = vadd.f32 %v25, %v170
  %v177 = vadd.f32 %v26, %v172
  %178 = vst [vmem:[#allocation2] sm:$0xff] %v174
  %179 = vst [vmem:[#allocation2 + $0x8] sm:$0xff] %v175
  %180 = vst [vmem:[#allocation2 + $0x10] sm:$0xff] %v176
  %181 = vst [vmem:[#allocation2 + $0x18] sm:$0xff] %v177
  // Predicated region
  $region18: #{decoder_forward.23} parent=0 // pred_check
    %p182 = pneg %p15
  $region19: #{decoder_forward.23} parent=0 // pred_check_branch
    %184 = sbr.rel (%p182) target = $region21
  $region20: #{decoder_forward.23} parent=0 // pred_region
    %v185 = vld [vmem:[#allocation2] sm:$0xff]
    %v186 = vld [vmem:[#allocation2 + $0x8] sm:$0xff]
    %v187 = vld [vmem:[#allocation2 + $0x10] sm:$0xff]
    %v188 = vld [vmem:[#allocation2 + $0x18] sm:$0xff]
    %v189 = vld [vmem:[%s2] sm:$0x3]
    %v191 = vlaneseq
    %v192 = vshrl.u32 %v191, 7
    %v193 = vsub.s32 0, %v192
    %v194 = vrot.slane %v189, %v193
    %v195 = vlaneseq
    %v196 = vshrl.u32 %v195, 7
    %v197 = vsub.s32 1, %v196
    %v198 = vrot.slane %v189, %v197
    %v201 = vadd.f32 %v185, %v194
    %v202 = vadd.f32 %v186, %v198
    %v203 = vadd.f32 %v187, %v194
    %v204 = vadd.f32 %v188, %v198
    %v205 = vpack.c.bf16 %v203, %v201
    %v206 = vpack.c.bf16 %v204, %v202
    %v209 = vunpack.c.l.b16 %v205
    %v210 = vunpack.c.l.b16 %v206
    %v211 = vunpack.c.h.b16 %v205
    %v212 = vunpack.c.h.b16 %v206
    %v213 = vpack.c.b16 %v210, %v209
    %v214 = vpack.c.b16 %v212, %v211
    %217 = vst [vmem:[%s3] sm:$0xff] %v213
    %218 = vst [vmem:[%s3 + $0x8] sm:$0xff] %v214
  $region21: #{decoder_forward.23} parent=0 // pred_fallthru
    _
  // Predicated region
  $region22: #{decoder_forward.23} parent=0 // pred_check
    _
  $region23: #{decoder_forward.23} parent=0 // pred_check_branch
    %220 = sbr.rel (0) target = $region25
  $region24: #{decoder_forward.23} parent=0 // pred_region
    _
  $region25: #{decoder_forward.23} parent=0 // pred_fallthru
    _
  // Predicated region
  $region26: #{decoder_forward.23} parent=0 // pred_check
    _
  $region27: #{decoder_forward.23} parent=0 // pred_check_branch
    %222 = sbr.rel (0) target = $region29
  $region28: #{decoder_forward.23} parent=0 // pred_region
    _
  $region29: #{decoder_forward.23} parent=0 // pred_fallthru
    _

// kernel: decoder_forward.24
$region0: #{decoder_forward.24}
  #allocation0 [shape = 'u32[]', space=smem, size = 0x4, offset = 0x4, fixed_abs, tag = 'smem constant byte address 0x4 - core index']
  #allocation1 [shape = 'u32[144,128]{1,0:T(1,128)}', space=vmem, size = 0x12000, scoped, tag = 'internal scratch']
  #allocation2 [shape = 'f32[8,4]{1,0:T(8,128)}', space=vmem, size = 0x1000, scoped, tag = 'scratch operand']
  #allocation3 [shape = 'f32[8,4]{1,0:T(8,128)}', space=vmem, size = 0x1000, scoped, tag = 'scratch operand']
  #allocation4 [shape = 'f32[8,128]{1,0:T(8,128)}', space=vmem, size = 0x1000, scoped, tag = 'scratch operand']
  %s0 = inlined_call_operand.vmem [shape: bf16[2,8,128], index: 0, kind: input, shape index: {}]
  %s1 = inlined_call_operand.vmem [shape: bf16[2,8,256], index: 1, kind: input, shape index: {}, may-alias: {1,2}]
  %s2 = inlined_call_operand.vmem [shape: bf16[2,8,256], index: 2, kind: input, shape index: {}, may-alias: {1,2}]
  %s3 = inlined_call_operand.vmem [shape: bf16[2,8,128], index: 3, kind: output, shape index: {}]
  %s4 = sld [smem:[#allocation0]]
  $region53: #{decoder_forward.24} parent=0
    _
  %s6 = ssub.s32 1, %s4
  %s7 = scalar_select 0, %s6, %s4
  loop: start=0, step=1, limit=4
  $region2: #{decoder_forward.24} parent=0 // loop_pre_header
    _
  $region3: #{decoder_forward.24} parent=0 // loop_header
    %s9 = sphi 0, %s13
    %p10 = scmp.ge.s32.totalorder %s9, 4
    %s16 = sphi 0, %s35
    %s17 = sphi 0, %s31
    %s18 = sphi 0, %s27
    %s19 = sphi 0, %s16
    %s20 = sphi 0, %s17
    %s21 = sphi 0, %s18
    %s22 = sphi 0, %s19
    %s23 = sphi 0, %s20
    %s24 = sphi 0, %s21
    %s40 = sphi 0, %s42
    %s43 = sphi 0, %s40
    %s44 = sphi 0, %s43
    %s60 = sphi 0, %s44
    %s68 = sphi 0, %s70
    %s71 = sphi 0, %s68
    %s72 = sphi 0, %s71
    %s88 = sphi 0, %s72
    %s96 = sphi 0, %s98
    %s99 = sphi 0, %s96
    %s100 = sphi 0, %s99
    %s116 = sphi 0, %s100
    %s124 = sphi 0, %s126
    %s127 = sphi 0, %s124
    %s128 = sphi 0, %s127
    %s144 = sphi 0, %s128
  $region4: #{decoder_forward.24} parent=0 // loop_header_branch
    %12 = sbr.rel (%p10) target = $region8
  $region5: #{decoder_forward.24} parent=0 // loop_body
    %s14 = ssub.s32 %s9, 1
    %s15 = ssub.s32 %s9, 2
    %s25 = sadd.s32 1, %s18
    %p26 = scmp.ge.s32.totalorder %s25, 1
    %s27 = scalar_select %p26, 0, %s25
    %s28 = sadd.s32 1, %s17
    %s29 = scalar_select %p26, %s28, %s17
    %p30 = scmp.ge.s32.totalorder %s29, 1
    %s31 = scalar_select %p30, 0, %s29
    %s32 = sadd.s32 1, %s16
    %s33 = scalar_select %p30, %s32, %s16
    %p34 = scmp.ge.s32.totalorder %s33, 2
    %s35 = scalar_select %p34, 0, %s33
    %s36 = ssub.s32 %s16, %s35
    %s37 = ssub.s32 %s17, %s31
    %s38 = sor.u32 %s36, %s37
    %p39 = scmp.eq.s32.totalorder %s38, 0
    %s41 = sadd.s32 %s40, 1
    %s42 = scalar_select %p39, %s40, %s41
    %p45 = pneg %p39
    %p46 = scmp.eq.s32.totalorder %s9, 1
    %p47 = por %p45, %p46
    %p48 = scmp.ne.s32.totalorder %s40, %s43
    %p49 = scmp.eq.s32.totalorder %s9, 0
    %p50 = por %p48, %p49
    %p51 = scmp.ne.s32.totalorder %s40, %s43
    %p52 = scmp.eq.s32.totalorder %s14, 1
    %p53 = por %p51, %p52
    %p54 = scmp.ne.s32.totalorder %s43, %s44
    %p55 = scmp.eq.s32.totalorder %s14, 0
    %p56 = por %p54, %p55
    %p57 = scmp.ne.s32.totalorder %s43, %s44
    %p58 = scmp.eq.s32.totalorder %s15, 1
    %p59 = por %p57, %p58
    %p61 = scmp.ne.s32.totalorder %s44, %s60
    %p62 = scmp.eq.s32.totalorder %s15, 0
    %p63 = por %p61, %p62
    %s64 = ssub.s32 %s16, %s35
    %s65 = ssub.s32 %s18, %s27
    %s66 = sor.u32 %s64, %s65
    %p67 = scmp.eq.s32.totalorder %s66, 0
    %s69 = sadd.s32 %s68, 1
    %s70 = scalar_select %p67, %s68, %s69
    %p73 = pneg %p67
    %p74 = scmp.eq.s32.totalorder %s9, 1
    %p75 = por %p73, %p74
    %p76 = scmp.ne.s32.totalorder %s68, %s71
    %p77 = scmp.eq.s32.totalorder %s9, 0
    %p78 = por %p76, %p77
    %p79 = scmp.ne.s32.totalorder %s68, %s71
    %p80 = scmp.eq.s32.totalorder %s14, 1
    %p81 = por %p79, %p80
    %p82 = scmp.ne.s32.totalorder %s71, %s72
    %p83 = scmp.eq.s32.totalorder %s14, 0
    %p84 = por %p82, %p83
    %p85 = scmp.ne.s32.totalorder %s71, %s72
    %p86 = scmp.eq.s32.totalorder %s15, 1
    %p87 = por %p85, %p86
    %p89 = scmp.ne.s32.totalorder %s72, %s88
    %p90 = scmp.eq.s32.totalorder %s15, 0
    %p91 = por %p89, %p90
    %s92 = ssub.s32 %s16, %s35
    %s93 = ssub.s32 %s18, %s27
    %s94 = sor.u32 %s92, %s93
    %p95 = scmp.eq.s32.totalorder %s94, 0
    %s97 = sadd.s32 %s96, 1
    %s98 = scalar_select %p95, %s96, %s97
    %p101 = pneg %p95
    %p102 = scmp.eq.s32.totalorder %s9, 1
    %p103 = por %p101, %p102
    %p104 = scmp.ne.s32.totalorder %s96, %s99
    %p105 = scmp.eq.s32.totalorder %s9, 0
    %p106 = por %p104, %p105
    %p107 = scmp.ne.s32.totalorder %s96, %s99
    %p108 = scmp.eq.s32.totalorder %s14, 1
    %p109 = por %p107, %p108
    %p110 = scmp.ne.s32.totalorder %s99, %s100
    %p111 = scmp.eq.s32.totalorder %s14, 0
    %p112 = por %p110, %p111
    %p113 = scmp.ne.s32.totalorder %s99, %s100
    %p114 = scmp.eq.s32.totalorder %s15, 1
    %p115 = por %p113, %p114
    %p117 = scmp.ne.s32.totalorder %s100, %s116
    %p118 = scmp.eq.s32.totalorder %s15, 0
    %p119 = por %p117, %p118
    %s120 = ssub.s32 %s16, %s35
    %s121 = ssub.s32 %s17, %s31
    %s122 = sor.u32 %s120, %s121
    %p123 = scmp.eq.s32.totalorder %s122, 0
    %s125 = sadd.s32 %s124, 1
    %s126 = scalar_select %p123, %s124, %s125
    %p129 = pneg %p123
    %p130 = scmp.eq.s32.totalorder %s9, 1
    %p131 = por %p129, %p130
    %p132 = scmp.ne.s32.totalorder %s124, %s127
    %p133 = scmp.eq.s32.totalorder %s9, 0
    %p134 = por %p132, %p133
    %p135 = scmp.ne.s32.totalorder %s124, %s127
    %p136 = scmp.eq.s32.totalorder %s14, 1
    %p137 = por %p135, %p136
    %p138 = scmp.ne.s32.totalorder %s127, %s128
    %p139 = scmp.eq.s32.totalorder %s14, 0
    %p140 = por %p138, %p139
    %p141 = scmp.ne.s32.totalorder %s127, %s128
    %p142 = scmp.eq.s32.totalorder %s15, 1
    %p143 = por %p141, %p142
    %p145 = scmp.ne.s32.totalorder %s128, %s144
    %p146 = scmp.eq.s32.totalorder %s15, 0
    %p147 = por %p145, %p146
    %p148 = scmp.le.s32.totalorder 1, %s9
    %p149 = scmp.lt.s32.totalorder %s9, 3
    %p150 = pnand %p148, %p149
    %p151 = pneg %p150
    // Predicated region
    $region9: #{decoder_forward.24} parent=5 // pred_check
      _
    $region10: #{decoder_forward.24} parent=5 // pred_check_branch
      %153 = sbr.rel (%p150) target = $region12
    $region11: #{decoder_forward.24} parent=5 // pred_region
      %s154 = ssub.s32 %s9, 1
    $region12: #{decoder_forward.24} parent=5 // pred_fallthru
      _
    %p155 = scmp.lt.s32.totalorder %s9, 2
    // Predicated region
    $region13: #{decoder_forward.24} parent=5 // pred_check
      %p156 = pneg %p155
    $region14: #{decoder_forward.24} parent=5 // pred_check_branch
      %158 = sbr.rel (%p156) target = $region16
    $region15: #{decoder_forward.24} parent=5 // pred_region
      // Predicated region
      $region17: #{decoder_forward.24} parent=15 // pred_check
        %p159 = pneg %p50
      $region18: #{decoder_forward.24} parent=15 // pred_check_branch
        %161 = sbr.rel (%p159) target = $region20
      $region19: #{decoder_forward.24} parent=15 // pred_region
        %p162 = scmp.lt.s32.totalorder %s16, 1
        %s163 = scalar_select %p162, %s16, 1
        %p164 = scmp.lt.s32.totalorder %s17, 0
        %s165 = scalar_select %p164, %s17, 0
        %s166 = sadd.s32 %s165, %s163
        %s167 = smul.addr %s166, 4
        %s168 = scalar_lea.vmem %s0, %s167
      $region20: #{decoder_forward.24} parent=15 // pred_fallthru
        _
      // Predicated region
      $region21: #{decoder_forward.24} parent=15 // pred_check
        %p169 = pneg %p78
      $region22: #{decoder_forward.24} parent=15 // pred_check_branch
        %171 = sbr.rel (%p169) target = $region24
      $region23: #{decoder_forward.24} parent=15 // pred_region
        %p172 = scmp.lt.s32.totalorder %s16, 1
        %s173 = scalar_select %p172, %s16, 1
        %p174 = scmp.lt.s32.totalorder %s18, 0
        %s175 = scalar_select %p174, %s18, 0
        %s176 = smul.addr %s175, 2
        %s177 = smul.addr %s173, 2
        %s178 = sadd.s32 %s176, %s177
        %s179 = smul.addr %s178, 4
        %s180 = scalar_lea.vmem %s1, %s179
      $region24: #{decoder_forward.24} parent=15 // pred_fallthru
        _
      // Predicated region
      $region25: #{decoder_forward.24} parent=15 // pred_check
        %p181 = pneg %p106
      $region26: #{decoder_forward.24} parent=15 // pred_check_branch
        %183 = sbr.rel (%p181) target = $region28
      $region27: #{decoder_forward.24} parent=15 // pred_region
        %p184 = scmp.lt.s32.totalorder %s16, 1
        %s185 = scalar_select %p184, %s16, 1
        %p186 = scmp.lt.s32.totalorder %s18, 0
        %s187 = scalar_select %p186, %s18, 0
        %s188 = smul.addr %s187, 2
        %s189 = sadd.s32 1, %s188
        %s190 = smul.addr %s185, 2
        %s191 = sadd.s32 %s189, %s190
        %s192 = smul.addr %s191, 4
        %s193 = scalar_lea.vmem %s2, %s192
      $region28: #{decoder_forward.24} parent=15 // pred_fallthru
        _
    $region16: #{decoder_forward.24} parent=5 // pred_fallthru
      _
    %p194 = scmp.le.s32.totalorder 1, %s9
    %p195 = scmp.lt.s32.totalorder %s9, 3
    %p196 = pnand %p194, %p195
    %p197 = pneg %p196
    // Predicated region
    $region29: #{decoder_forward.24} parent=5 // pred_check
      _
    $region30: #{decoder_forward.24} parent=5 // pred_check_branch
      %199 = sbr.rel (%p196) target = $region32
    $region31: #{decoder_forward.24} parent=5 // pred_region
      %s200 = ssub.s32 %s9, 1
      %p201 = scmp.lt.s32.totalorder %s19, 1
      %s202 = scalar_select %p201, %s19, 1
      %p203 = scmp.lt.s32.totalorder %s20, 0
      %s204 = scalar_select %p203, %s20, 0
      %s205 = sadd.s32 %s204, %s202
      %s206 = smul.addr %s205, 4
      %s207 = scalar_lea.vmem %s0, %s206
      %p208 = pneg %p56
      %p209 = pneg %p53
      %p210 = scmp.lt.s32.totalorder %s19, 1
      %s211 = scalar_select %p210, %s19, 1
      %p212 = scmp.lt.s32.totalorder %s21, 0
      %s213 = scalar_select %p212, %s21, 0
      %s214 = smul.addr %s213, 2
      %s215 = smul.addr %s211, 2
      %s216 = sadd.s32 %s214, %s215
      %s217 = smul.addr %s216, 4
      %s218 = scalar_lea.vmem %s1, %s217
      %p219 = pneg %p84
      %p220 = pneg %p81
      %p221 = scmp.lt.s32.totalorder %s19, 1
      %s222 = scalar_select %p221, %s19, 1
      %p223 = scmp.lt.s32.totalorder %s21, 0
      %s224 = scalar_select %p223, %s21, 0
      %s225 = smul.addr %s224, 2
      %s226 = sadd.s32 1, %s225
      %s227 = smul.addr %s222, 2
      %s228 = sadd.s32 %s226, %s227
      %s229 = smul.addr %s228, 4
      %s230 = scalar_lea.vmem %s2, %s229
      %p231 = pneg %p112
      %p232 = pneg %p109
      %p233 = pneg %p140
      %p234 = pneg %p137
      %p235 = scmp.lt.s32.totalorder %s19, 1
      %s236 = scalar_select %p235, %s19, 1
      %p237 = scmp.lt.s32.totalorder %s20, 0
      %s238 = scalar_select %p237, %s20, 0
      %s239 = sadd.s32 %s238, %s236
      %s240 = smul.addr %s239, 4
      %s241 = scalar_lea.vmem %s3, %s240
      %p242 = scmp.lt.s32.totalorder %s19, 1
      %s243 = scalar_select %p242, %s19, 1
      %p244 = scmp.lt.s32.totalorder %s20, 0
      %s245 = scalar_select %p244, %s20, 0
      %s246 = sadd.s32 %s245, %s243
      %s247 = smul.addr %s246, 4
      %s248 = scalar_lea.vmem %s0, %s247
      %p249 = scmp.lt.s32.totalorder %s19, 1
      %s250 = scalar_select %p249, %s19, 1
      %p251 = scmp.lt.s32.totalorder %s21, 0
      %s252 = scalar_select %p251, %s21, 0
      %s253 = smul.addr %s252, 2
      %s254 = smul.addr %s250, 2
      %s255 = sadd.s32 %s253, %s254
      %s256 = smul.addr %s255, 4
      %s257 = scalar_lea.vmem %s1, %s256
      %p258 = scmp.lt.s32.totalorder %s19, 1
      %s259 = scalar_select %p258, %s19, 1
      %p260 = scmp.lt.s32.totalorder %s21, 0
      %s261 = scalar_select %p260, %s21, 0
      %s262 = smul.addr %s261, 2
      %s263 = sadd.s32 1, %s262
      %s264 = smul.addr %s259, 2
      %s265 = sadd.s32 %s263, %s264
      %s266 = smul.addr %s265, 4
      %s267 = scalar_lea.vmem %s2, %s266
      %p268 = scmp.lt.s32.totalorder %s19, 1
      %s269 = scalar_select %p268, %s19, 1
      %p270 = scmp.lt.s32.totalorder %s20, 0
      %s271 = scalar_select %p270, %s20, 0
      %s272 = sadd.s32 %s271, %s269
      %s273 = smul.addr %s272, 4
      %s274 = scalar_lea.vmem %s3, %s273
      %p276 = scmp.eq.s32.totalorder %s21, 0
      // Predicated region
      $region33: #{decoder_forward.24} parent=31 // pred_check
        %p277 = pneg %p276
      $region34: #{decoder_forward.24} parent=31 // pred_check_branch
        %279 = sbr.rel (%p277) target = $region36
      $region35: #{decoder_forward.24} parent=31 // pred_region
        %vm280 = vcmask 31744
        %281 = vst.msk [vmem:[#allocation2] sm:$0xff] %vm280, -1e+30
        %282 = vst.msk [vmem:[#allocation3] sm:$0xff] %vm280, 0.0
        %283 = vst [vmem:[#allocation4] sm:$0xff] 0.0
      $region36: #{decoder_forward.24} parent=31 // pred_fallthru
        _
      %v284 = vld [vmem:[%s248] sm:$0xf]
      %v285 = vld [vmem:[%s257] sm:$0xf]
      %v286 = vld [vmem:[%s267] sm:$0xf]
      %vm287 = vcmask 261120
      %v289 = vsel %vm287, %v284, 0
      %v292 = vsel %vm287, %v285, 0
      %294 = vmatprep.subr.bf16.mxu0 0
      %295 = vmatpush1.bf16.xpose.msra.mxu0 %v292
      %296 = vmatprep.subr.bf16.mxu0 0
      %297 = vmatpush1.bf16.xpose.msra.mxu0 0
      %298 = vmatprep.subr.bf16.mxu0 0
      %299 = vmatpush1.bf16.xpose.msra.mxu0 0
      %300 = vmatprep.subr.bf16.mxu0 0
      %301 = vmatpush1.bf16.xpose.msra.mxu0 0
      %302 = vmatprep.subr.bf16.mxu0 0
      %303 = vmatpush1.bf16.xpose.msra.mxu0 0
      %304 = vmatprep.subr.bf16.mxu0 0
      %305 = vmatpush1.bf16.xpose.msra.mxu0 0
      %306 = vmatprep.subr.bf16.mxu0 0
      %307 = vmatpush1.bf16.xpose.msra.mxu0 0
      %308 = vmatprep.subr.bf16.mxu0 0
      %309 = vmatpush1.bf16.xpose.msra.mxu0 0
      %310 = vmatprep.subr.bf16.mxu0 0
      %311 = vmatpush1.bf16.xpose.msra.mxu0 0
      %312 = vmatprep.subr.bf16.mxu0 0
      %313 = vmatpush1.bf16.xpose.msra.mxu0 0
      %314 = vmatprep.subr.bf16.mxu0 0
      %315 = vmatpush1.bf16.xpose.msra.mxu0 0
      %316 = vmatprep.subr.bf16.mxu0 0
      %317 = vmatpush1.bf16.xpose.msra.mxu0 0
      %318 = vmatprep.subr.bf16.mxu0 0
      %319 = vmatpush1.bf16.xpose.msra.mxu0 0
      %320 = vmatprep.subr.bf16.mxu0 0
      %321 = vmatpush1.bf16.xpose.msra.mxu0 0
      %322 = vmatprep.subr.bf16.mxu0 0
      %323 = vmatpush1.bf16.xpose.msra.mxu0 0
      %324 = vmatprep.subr.bf16.mxu0 0
      %325 = vmatpush1.bf16.xpose.msra.mxu0 0
      %326 = vmatprep.mubr.bf16.mxu0 0
      %327 = vmatmul.mubr.bf16.gmra.mrb[0].mxu0 %v289
      %v328 = vpop.f32.mrb[0].mxu0
      %v329 = vadd.f32 0.0, %v328
      %v330 = vpop.f32.mrb[0].mxu0
      %v331 = vpop.f32.mrb[0].mxu0
      %v332 = vpop.f32.mrb[0].mxu0
      %333 = vdwg.mxu0
      %v334 = vld [vmem:[#allocation2] sm:$0xff]
      %vm335 = vcmask 64512
      %v336 = vsel %vm335, %v329, -inf
      %337 = vmax.xlane.f32.xlu0 %v336
      %v338 = vpop.xlane.xlu0 %337
      %v339 = vmax.f32 %v334, %v338
      %341 = vset.pattern.permute.xlu0 0
      %342 = vperm.xlu0 %341, %v339
      %v343 = vpop.permute.xlu0 %342
      %v345 = vsub.f32 %v329, %v343
      %v346 = vmul.f32 %v345, 1.442695
      %v347 = vpow.pop %v346
      %v348 = vsub.f32 %v334, %v339
      %v349 = vmul.f32 %v348, 1.442695
      %v350 = vpow.pop %v349
      %v351 = vld [vmem:[#allocation3] sm:$0xff]
      %v352 = vmul.f32 %v350, %v351
      %v353 = vsel %vm335, %v347, 0.0
      %354 = vadd.xlane.f32.xlu0 %v353
      %v355 = vpop.xlane.xlu0 %354
      %v356 = vadd.f32 %v352, %v355
      %vm357 = vcmask 7168
      %358 = vst.msk [vmem:[#allocation3] sm:$0xff] %vm357, %v356
      %v359 = vld [vmem:[#allocation4] sm:$0xff]
      %361 = vset.pattern.permute.xlu0 0
      %362 = vperm.xlu0 %361, %v350
      %v363 = vpop.permute.xlu0 %362
      %v365 = vmul.f32 %v363, %v359
      %v366 = vpack.c.bf16 %v347, %v347
      %v368 = vsel %vm335, %v366, 0
      %vm370 = vcmask 1043456
      %v372 = vsel %vm370, %v286, 0
      %374 = vmatprep.subr.bf16.mxu0 0
      %375 = vmatpush1.bf16.msra.mxu0 %v372
      %376 = vmatprep.subr.bf16.mxu0 0
      %377 = vmatpush1.bf16.msra.mxu0 0
      %378 = vmatprep.subr.bf16.mxu0 0
      %379 = vmatpush1.bf16.msra.mxu0 0
      %380 = vmatprep.subr.bf16.mxu0 0
      %381 = vmatpush1.bf16.msra.mxu0 0
      %382 = vmatprep.subr.bf16.mxu0 0
      %383 = vmatpush1.bf16.msra.mxu0 0
      %384 = vmatprep.subr.bf16.mxu0 0
      %385 = vmatpush1.bf16.msra.mxu0 0
      %386 = vmatprep.subr.bf16.mxu0 0
      %387 = vmatpush1.bf16.msra.mxu0 0
      %388 = vmatprep.subr.bf16.mxu0 0
      %389 = vmatpush1.bf16.msra.mxu0 0
      %390 = vmatprep.subr.bf16.mxu0 0
      %391 = vmatpush1.bf16.msra.mxu0 0
      %392 = vmatprep.subr.bf16.mxu0 0
      %393 = vmatpush1.bf16.msra.mxu0 0
      %394 = vmatprep.subr.bf16.mxu0 0
      %395 = vmatpush1.bf16.msra.mxu0 0
      %396 = vmatprep.subr.bf16.mxu0 0
      %397 = vmatpush1.bf16.msra.mxu0 0
      %398 = vmatprep.subr.bf16.mxu0 0
      %399 = vmatpush1.bf16.msra.mxu0 0
      %400 = vmatprep.subr.bf16.mxu0 0
      %401 = vmatpush1.bf16.msra.mxu0 0
      %402 = vmatprep.subr.bf16.mxu0 0
      %403 = vmatpush1.bf16.msra.mxu0 0
      %404 = vmatprep.subr.bf16.mxu0 0
      %405 = vmatpush1.bf16.msra.mxu0 0
      %406 = vmatprep.mubr.bf16.mxu0 0
      %407 = vmatmul.mubr.bf16.gmra.mrb[0].mxu0 %v368
      %v408 = vpop.f32.mrb[0].mxu0
      %v409 = vadd.f32 0.0, %v408
      %v410 = vpop.f32.mrb[0].mxu0
      %v411 = vpop.f32.mrb[0].mxu0
      %v412 = vpop.f32.mrb[0].mxu0
      %413 = vdwg.mxu0
      %v414 = vadd.f32 %v365, %v409
      %415 = vst.msk [vmem:[#allocation4] sm:$0xff] %vm287, %v414
      %416 = vst.msk [vmem:[#allocation2] sm:$0xff] %vm357, %v339
      %v418 = vunpack.c.l.b16 %v284
      %v419 = vpack.c.b16 %v418, %v418
      %420 = vrot.lane.b32.xlu0 %v419, 96
      %v421 = vpop.permute.xlu0 %420
      %v423 = vunpack.c.l.b16 %v285
      %v424 = vpack.c.b16 %v423, %v423
      %425 = vrot.lane.b32.xlu0 %v424, 96
      %v426 = vpop.permute.xlu0 %425
      %v428 = vsel %vm287, %v421, 0
      %v431 = vsel %vm287, %v426, 0
      %433 = vmatprep.subr.bf16.mxu0 0
      %434 = vmatpush1.bf16.xpose.msra.mxu0 %v431
      %435 = vmatprep.subr.bf16.mxu0 0
      %436 = vmatpush1.bf16.xpose.msra.mxu0 0
      %437 = vmatprep.subr.bf16.mxu0 0
      %438 = vmatpush1.bf16.xpose.msra.mxu0 0
      %439 = vmatprep.subr.bf16.mxu0 0
      %440 = vmatpush1.bf16.xpose.msra.mxu0 0
      %441 = vmatprep.subr.bf16.mxu0 0
      %442 = vmatpush1.bf16.xpose.msra.mxu0 0
      %443 = vmatprep.subr.bf16.mxu0 0
      %444 = vmatpush1.bf16.xpose.msra.mxu0 0
      %445 = vmatprep.subr.bf16.mxu0 0
      %446 = vmatpush1.bf16.xpose.msra.mxu0 0
      %447 = vmatprep.subr.bf16.mxu0 0
      %448 = vmatpush1.bf16.xpose.msra.mxu0 0
      %449 = vmatprep.subr.bf16.mxu0 0
      %450 = vmatpush1.bf16.xpose.msra.mxu0 0
      %451 = vmatprep.subr.bf16.mxu0 0
      %452 = vmatpush1.bf16.xpose.msra.mxu0 0
      %453 = vmatprep.subr.bf16.mxu0 0
      %454 = vmatpush1.bf16.xpose.msra.mxu0 0
      %455 = vmatprep.subr.bf16.mxu0 0
      %456 = vmatpush1.bf16.xpose.msra.mxu0 0
      %457 = vmatprep.subr.bf16.mxu0 0
      %458 = vmatpush1.bf16.xpose.msra.mxu0 0
      %459 = vmatprep.subr.bf16.mxu0 0
      %460 = vmatpush1.bf16.xpose.msra.mxu0 0
      %461 = vmatprep.subr.bf16.mxu0 0
      %462 = vmatpush1.bf16.xpose.msra.mxu0 0
      %463 = vmatprep.subr.bf16.mxu0 0
      %464 = vmatpush1.bf16.xpose.msra.mxu0 0
      %465 = vmatprep.mubr.bf16.mxu0 0
      %466 = vmatmul.mubr.bf16.gmra.mrb[0].mxu0 %v428
      %v467 = vpop.f32.mrb[0].mxu0
      %v468 = vadd.f32 0.0, %v467
      %v469 = vpop.f32.mrb[0].mxu0
      %v470 = vpop.f32.mrb[0].mxu0
      %v471 = vpop.f32.mrb[0].mxu0
      %472 = vdwg.mxu0
      %v473 = vld [vmem:[#allocation2] sm:$0xff]
      %v474 = vsel %vm335, %v468, -inf
      %475 = vmax.xlane.f32.xlu0 %v474
      %v476 = vpop.xlane.xlu0 %475
      %v477 = vmax.f32 %v473, %v476
      %479 = vset.pattern.permute.xlu0 1
      %480 = vperm.xlu0 %479, %v477
      %v481 = vpop.permute.xlu0 %480
      %v483 = vsub.f32 %v468, %v481
      %v484 = vmul.f32 %v483, 1.442695
      %v485 = vpow.pop %v484
      %v486 = vsub.f32 %v473, %v477
      %v487 = vmul.f32 %v486, 1.442695
      %v488 = vpow.pop %v487
      %v489 = vld [vmem:[#allocation3] sm:$0xff]
      %v490 = vmul.f32 %v488, %v489
      %v491 = vsel %vm335, %v485, 0.0
      %492 = vadd.xlane.f32.xlu0 %v491
      %v493 = vpop.xlane.xlu0 %492
      %v494 = vadd.f32 %v490, %v493
      %vm495 = vcmask 15368
      %496 = vst.msk [vmem:[#allocation3] sm:$0xff] %vm495, %v494
      %v497 = vld [vmem:[#allocation4] sm:$0xff]
      %499 = vset.pattern.permute.xlu0 1
      %500 = vperm.xlu0 %499, %v488
      %v501 = vpop.permute.xlu0 %500
      %v503 = vmul.f32 %v501, %v497
      %v504 = vpack.c.bf16 %v485, %v485
      %v506 = vunpack.c.l.b16 %v286
      %v507 = vpack.c.b16 %v506, %v506
      %508 = vrot.lane.b32.xlu0 %v507, 96
      %v509 = vpop.permute.xlu0 %508
      %v511 = vsel %vm335, %v504, 0
      %v514 = vsel %vm370, %v509, 0
      %516 = vmatprep.subr.bf16.mxu0 0
      %517 = vmatpush1.bf16.msra.mxu0 %v514
      %518 = vmatprep.subr.bf16.mxu0 0
      %519 = vmatpush1.bf16.msra.mxu0 0
      %520 = vmatprep.subr.bf16.mxu0 0
      %521 = vmatpush1.bf16.msra.mxu0 0
      %522 = vmatprep.subr.bf16.mxu0 0
      %523 = vmatpush1.bf16.msra.mxu0 0
      %524 = vmatprep.subr.bf16.mxu0 0
      %525 = vmatpush1.bf16.msra.mxu0 0
      %526 = vmatprep.subr.bf16.mxu0 0
      %527 = vmatpush1.bf16.msra.mxu0 0
      %528 = vmatprep.subr.bf16.mxu0 0
      %529 = vmatpush1.bf16.msra.mxu0 0
      %530 = vmatprep.subr.bf16.mxu0 0
      %531 = vmatpush1.bf16.msra.mxu0 0
      %532 = vmatprep.subr.bf16.mxu0 0
      %533 = vmatpush1.bf16.msra.mxu0 0
      %534 = vmatprep.subr.bf16.mxu0 0
      %535 = vmatpush1.bf16.msra.mxu0 0
      %536 = vmatprep.subr.bf16.mxu0 0
      %537 = vmatpush1.bf16.msra.mxu0 0
      %538 = vmatprep.subr.bf16.mxu0 0
      %539 = vmatpush1.bf16.msra.mxu0 0
      %540 = vmatprep.subr.bf16.mxu0 0
      %541 = vmatpush1.bf16.msra.mxu0 0
      %542 = vmatprep.subr.bf16.mxu0 0
      %543 = vmatpush1.bf16.msra.mxu0 0
      %544 = vmatprep.subr.bf16.mxu0 0
      %545 = vmatpush1.bf16.msra.mxu0 0
      %546 = vmatprep.subr.bf16.mxu0 0
      %547 = vmatpush1.bf16.msra.mxu0 0
      %548 = vmatprep.mubr.bf16.mxu0 0
      %549 = vmatmul.mubr.bf16.gmra.mrb[0].mxu0 %v511
      %v550 = vpop.f32.mrb[0].mxu0
      %v551 = vadd.f32 0.0, %v550
      %v552 = vpop.f32.mrb[0].mxu0
      %v553 = vpop.f32.mrb[0].mxu0
      %v554 = vpop.f32.mrb[0].mxu0
      %555 = vdwg.mxu0
      %557 = vrot.lane.b32.xlu0 %v551, 32
      %v558 = vpop.permute.xlu0 %557
      %v560 = vadd.f32 %v503, %v558
      %vm561 = vcmask 523520
      %562 = vst.msk [vmem:[#allocation4] sm:$0xff] %vm561, %v560
      %563 = vst.msk [vmem:[#allocation2] sm:$0xff] %vm495, %v477
      %564 = vrot.lane.b32.xlu0 %v419, 64
      %v565 = vpop.permute.xlu0 %564
      %566 = vrot.lane.b32.xlu0 %v424, 64
      %v567 = vpop.permute.xlu0 %566
      %v569 = vsel %vm287, %v565, 0
      %v572 = vsel %vm287, %v567, 0
      %574 = vmatprep.subr.bf16.mxu0 0
      %575 = vmatpush1.bf16.xpose.msra.mxu0 %v572
      %576 = vmatprep.subr.bf16.mxu0 0
      %577 = vmatpush1.bf16.xpose.msra.mxu0 0
      %578 = vmatprep.subr.bf16.mxu0 0
      %579 = vmatpush1.bf16.xpose.msra.mxu0 0
      %580 = vmatprep.subr.bf16.mxu0 0
      %581 = vmatpush1.bf16.xpose.msra.mxu0 0
      %582 = vmatprep.subr.bf16.mxu0 0
      %583 = vmatpush1.bf16.xpose.msra.mxu0 0
      %584 = vmatprep.subr.bf16.mxu0 0
      %585 = vmatpush1.bf16.xpose.msra.mxu0 0
      %586 = vmatprep.subr.bf16.mxu0 0
      %587 = vmatpush1.bf16.xpose.msra.mxu0 0
      %588 = vmatprep.subr.bf16.mxu0 0
      %589 = vmatpush1.bf16.xpose.msra.mxu0 0
      %590 = vmatprep.subr.bf16.mxu0 0
      %591 = vmatpush1.bf16.xpose.msra.mxu0 0
      %592 = vmatprep.subr.bf16.mxu0 0
      %593 = vmatpush1.bf16.xpose.msra.mxu0 0
      %594 = vmatprep.subr.bf16.mxu0 0
      %595 = vmatpush1.bf16.xpose.msra.mxu0 0
      %596 = vmatprep.subr.bf16.mxu0 0
      %597 = vmatpush1.bf16.xpose.msra.mxu0 0
      %598 = vmatprep.subr.bf16.mxu0 0
      %599 = vmatpush1.bf16.xpose.msra.mxu0 0
      %600 = vmatprep.subr.bf16.mxu0 0
      %601 = vmatpush1.bf16.xpose.msra.mxu0 0
      %602 = vmatprep.subr.bf16.mxu0 0
      %603 = vmatpush1.bf16.xpose.msra.mxu0 0
      %604 = vmatprep.subr.bf16.mxu0 0
      %605 = vmatpush1.bf16.xpose.msra.mxu0 0
      %606 = vmatprep.mubr.bf16.mxu0 0
      %607 = vmatmul.mubr.bf16.gmra.mrb[0].mxu0 %v569
      %v608 = vpop.f32.mrb[0].mxu0
      %v609 = vadd.f32 0.0, %v608
      %v610 = vpop.f32.mrb[0].mxu0
      %v611 = vpop.f32.mrb[0].mxu0
      %v612 = vpop.f32.mrb[0].mxu0
      %613 = vdwg.mxu0
      %v614 = vld [vmem:[#allocation2] sm:$0xff]
      %v615 = vsel %vm335, %v609, -inf
      %616 = vmax.xlane.f32.xlu0 %v615
      %v617 = vpop.xlane.xlu0 %616
      %v618 = vmax.f32 %v614, %v617
      %620 = vset.pattern.permute.xlu0 2
      %621 = vperm.xlu0 %620, %v618
      %v622 = vpop.permute.xlu0 %621
      %v624 = vsub.f32 %v609, %v622
      %v625 = vmul.f32 %v624, 1.442695
      %v626 = vpow.pop %v625
      %v627 = vsub.f32 %v614, %v618
      %v628 = vmul.f32 %v627, 1.442695
      %v629 = vpow.pop %v628
      %v630 = vld [vmem:[#allocation3] sm:$0xff]
      %v631 = vmul.f32 %v629, %v630
      %v632 = vsel %vm335, %v626, 0.0
      %633 = vadd.xlane.f32.xlu0 %v632
      %v634 = vpop.xlane.xlu0 %633
      %v635 = vadd.f32 %v631, %v634
      %vm636 = vcmask 23568
      %637 = vst.msk [vmem:[#allocation3] sm:$0xff] %vm636, %v635
      %v638 = vld [vmem:[#allocation4] sm:$0xff]
      %640 = vset.pattern.permute.xlu0 2
      %641 = vperm.xlu0 %640, %v629
      %v642 = vpop.permute.xlu0 %641
      %v644 = vmul.f32 %v642, %v638
      %v645 = vpack.c.bf16 %v626, %v626
      %646 = vrot.lane.b32.xlu0 %v507, 64
      %v647 = vpop.permute.xlu0 %646
      %v649 = vsel %vm335, %v645, 0
      %v652 = vsel %vm370, %v647, 0
      %654 = vmatprep.subr.bf16.mxu0 0
      %655 = vmatpush1.bf16.msra.mxu0 %v652
      %656 = vmatprep.subr.bf16.mxu0 0
      %657 = vmatpush1.bf16.msra.mxu0 0
      %658 = vmatprep.subr.bf16.mxu0 0
      %659 = vmatpush1.bf16.msra.mxu0 0
      %660 = vmatprep.subr.bf16.mxu0 0
      %661 = vmatpush1.bf16.msra.mxu0 0
      %662 = vmatprep.subr.bf16.mxu0 0
      %663 = vmatpush1.bf16.msra.mxu0 0
      %664 = vmatprep.subr.bf16.mxu0 0
      %665 = vmatpush1.bf16.msra.mxu0 0
      %666 = vmatprep.subr.bf16.mxu0 0
      %667 = vmatpush1.bf16.msra.mxu0 0
      %668 = vmatprep.subr.bf16.mxu0 0
      %669 = vmatpush1.bf16.msra.mxu0 0
      %670 = vmatprep.subr.bf16.mxu0 0
      %671 = vmatpush1.bf16.msra.mxu0 0
      %672 = vmatprep.subr.bf16.mxu0 0
      %673 = vmatpush1.bf16.msra.mxu0 0
      %674 = vmatprep.subr.bf16.mxu0 0
      %675 = vmatpush1.bf16.msra.mxu0 0
      %676 = vmatprep.subr.bf16.mxu0 0
      %677 = vmatpush1.bf16.msra.mxu0 0
      %678 = vmatprep.subr.bf16.mxu0 0
      %679 = vmatpush1.bf16.msra.mxu0 0
      %680 = vmatprep.subr.bf16.mxu0 0
      %681 = vmatpush1.bf16.msra.mxu0 0
      %682 = vmatprep.subr.bf16.mxu0 0
      %683 = vmatpush1.bf16.msra.mxu0 0
      %684 = vmatprep.subr.bf16.mxu0 0
      %685 = vmatpush1.bf16.msra.mxu0 0
      %686 = vmatprep.mubr.bf16.mxu0 0
      %687 = vmatmul.mubr.bf16.gmra.mrb[0].mxu0 %v649
      %v688 = vpop.f32.mrb[0].mxu0
      %v689 = vadd.f32 0.0, %v688
      %v690 = vpop.f32.mrb[0].mxu0
      %v691 = vpop.f32.mrb[0].mxu0
      %v692 = vpop.f32.mrb[0].mxu0
      %693 = vdwg.mxu0
      %695 = vrot.lane.b32.xlu0 %v689, 64
      %v696 = vpop.permute.xlu0 %695
      %v698 = vadd.f32 %v644, %v696
      %vm699 = vcmask 785920
      %700 = vst.msk [vmem:[#allocation4] sm:$0xff] %vm699, %v698
      %701 = vst.msk [vmem:[#allocation2] sm:$0xff] %vm636, %v618
      %702 = vrot.lane.b32.xlu0 %v419, 32
      %v703 = vpop.permute.xlu0 %702
      %704 = vrot.lane.b32.xlu0 %v424, 32
      %v705 = vpop.permute.xlu0 %704
      %v707 = vsel %vm287, %v703, 0
      %v710 = vsel %vm287, %v705, 0
      %712 = vmatprep.subr.bf16.mxu0 0
      %713 = vmatpush1.bf16.xpose.msra.mxu0 %v710
      %714 = vmatprep.subr.bf16.mxu0 0
      %715 = vmatpush1.bf16.xpose.msra.mxu0 0
      %716 = vmatprep.subr.bf16.mxu0 0
      %717 = vmatpush1.bf16.xpose.msra.mxu0 0
      %718 = vmatprep.subr.bf16.mxu0 0
      %719 = vmatpush1.bf16.xpose.msra.mxu0 0
      %720 = vmatprep.subr.bf16.mxu0 0
      %721 = vmatpush1.bf16.xpose.msra.mxu0 0
      %722 = vmatprep.subr.bf16.mxu0 0
      %723 = vmatpush1.bf16.xpose.msra.mxu0 0
      %724 = vmatprep.subr.bf16.mxu0 0
      %725 = vmatpush1.bf16.xpose.msra.mxu0 0
      %726 = vmatprep.subr.bf16.mxu0 0
      %727 = vmatpush1.bf16.xpose.msra.mxu0 0
      %728 = vmatprep.subr.bf16.mxu0 0
      %729 = vmatpush1.bf16.xpose.msra.mxu0 0
      %730 = vmatprep.subr.bf16.mxu0 0
      %731 = vmatpush1.bf16.xpose.msra.mxu0 0
      %732 = vmatprep.subr.bf16.mxu0 0
      %733 = vmatpush1.bf16.xpose.msra.mxu0 0
      %734 = vmatprep.subr.bf16.mxu0 0
      %735 = vmatpush1.bf16.xpose.msra.mxu0 0
      %736 = vmatprep.subr.bf16.mxu0 0
      %737 = vmatpush1.bf16.xpose.msra.mxu0 0
      %738 = vmatprep.subr.bf16.mxu0 0
      %739 = vmatpush1.bf16.xpose.msra.mxu0 0
      %740 = vmatprep.subr.bf16.mxu0 0
      %741 = vmatpush1.bf16.xpose.msra.mxu0 0
      %742 = vmatprep.subr.bf16.mxu0 0
      %743 = vmatpush1.bf16.xpose.msra.mxu0 0
      %744 = vmatprep.mubr.bf16.mxu0 0
      %745 = vmatmul.mubr.bf16.gmra.mrb[0].mxu0 %v707
      %v746 = vpop.f32.mrb[0].mxu0
      %v747 = vadd.f32 0.0, %v746
      %v748 = vpop.f32.mrb[0].mxu0
      %v749 = vpop.f32.mrb[0].mxu0
      %v750 = vpop.f32.mrb[0].mxu0
      %751 = vdwg.mxu0
      %v752 = vld [vmem:[#allocation2] sm:$0xff]
      %v753 = vsel %vm335, %v747, -inf
      %754 = vmax.xlane.f32.xlu0 %v753
      %v755 = vpop.xlane.xlu0 %754
      %v756 = vmax.f32 %v752, %v755
      %758 = vset.pattern.permute.xlu0 3
      %759 = vperm.xlu0 %758, %v756
      %v760 = vpop.permute.xlu0 %759
      %v762 = vsub.f32 %v747, %v760
      %v763 = vmul.f32 %v762, 1.442695
      %v764 = vpow.pop %v763
      %v765 = vsub.f32 %v752, %v756
      %v766 = vmul.f32 %v765, 1.442695
      %v767 = vpow.pop %v766
      %v768 = vld [vmem:[#allocation3] sm:$0xff]
      %v769 = vmul.f32 %v767, %v768
      %v770 = vsel %vm335, %v764, 0.0
      %771 = vadd.xlane.f32.xlu0 %v770
      %v772 = vpop.xlane.xlu0 %771
      %v773 = vadd.f32 %v769, %v772
      %vm774 = vcmask 31768
      %775 = vst.msk [vmem:[#allocation3] sm:$0xff] %vm774, %v773
      %v776 = vld [vmem:[#allocation4] sm:$0xff]
      %778 = vset.pattern.permute.xlu0 3
      %779 = vperm.xlu0 %778, %v767
      %v780 = vpop.permute.xlu0 %779
      %v782 = vmul.f32 %v780, %v776
      %v783 = vpack.c.bf16 %v764, %v764
      %784 = vrot.lane.b32.xlu0 %v507, 32
      %v785 = vpop.permute.xlu0 %784
      %v787 = vsel %vm335, %v783, 0
      %v790 = vsel %vm370, %v785, 0
      %792 = vmatprep.subr.bf16.mxu0 0
      %793 = vmatpush1.bf16.msra.mxu0 %v790
      %794 = vmatprep.subr.bf16.mxu0 0
      %795 = vmatpush1.bf16.msra.mxu0 0
      %796 = vmatprep.subr.bf16.mxu0 0
      %797 = vmatpush1.bf16.msra.mxu0 0
      %798 = vmatprep.subr.bf16.mxu0 0
      %799 = vmatpush1.bf16.msra.mxu0 0
      %800 = vmatprep.subr.bf16.mxu0 0
      %801 = vmatpush1.bf16.msra.mxu0 0
      %802 = vmatprep.subr.bf16.mxu0 0
      %803 = vmatpush1.bf16.msra.mxu0 0
      %804 = vmatprep.subr.bf16.mxu0 0
      %805 = vmatpush1.bf16.msra.mxu0 0
      %806 = vmatprep.subr.bf16.mxu0 0
      %807 = vmatpush1.bf16.msra.mxu0 0
      %808 = vmatprep.subr.bf16.mxu0 0
      %809 = vmatpush1.bf16.msra.mxu0 0
      %810 = vmatprep.subr.bf16.mxu0 0
      %811 = vmatpush1.bf16.msra.mxu0 0
      %812 = vmatprep.subr.bf16.mxu0 0
      %813 = vmatpush1.bf16.msra.mxu0 0
      %814 = vmatprep.subr.bf16.mxu0 0
      %815 = vmatpush1.bf16.msra.mxu0 0
      %816 = vmatprep.subr.bf16.mxu0 0
      %817 = vmatpush1.bf16.msra.mxu0 0
      %818 = vmatprep.subr.bf16.mxu0 0
      %819 = vmatpush1.bf16.msra.mxu0 0
      %820 = vmatprep.subr.bf16.mxu0 0
      %821 = vmatpush1.bf16.msra.mxu0 0
      %822 = vmatprep.subr.bf16.mxu0 0
      %823 = vmatpush1.bf16.msra.mxu0 0
      %824 = vmatprep.mubr.bf16.mxu0 0
      %825 = vmatmul.mubr.bf16.gmra.mrb[0].mxu0 %v787
      %v826 = vpop.f32.mrb[0].mxu0
      %v827 = vadd.f32 0.0, %v826
      %v828 = vpop.f32.mrb[0].mxu0
      %v829 = vpop.f32.mrb[0].mxu0
      %v830 = vpop.f32.mrb[0].mxu0
      %831 = vdwg.mxu0
      %833 = vrot.lane.b32.xlu0 %v827, 96
      %v834 = vpop.permute.xlu0 %833
      %v836 = vadd.f32 %v782, %v834
      %vm837 = vcmask 1048320
      %838 = vst.msk [vmem:[#allocation4] sm:$0xff] %vm837, %v836
      %839 = vst.msk [vmem:[#allocation2] sm:$0xff] %vm774, %v756
      // Predicated region
      $region37: #{decoder_forward.24} parent=31 // pred_check
        %p840 = pneg %p276
      $region38: #{decoder_forward.24} parent=31 // pred_check_branch
        %842 = sbr.rel (%p840) target = $region40
      $region39: #{decoder_forward.24} parent=31 // pred_region
        %v843 = vld [vmem:[#allocation3] sm:$0xff]
        %v844 = vmax.f32 %v843, 1e-30
        %v845 = vrcp.pop %v844
        %v846 = vld [vmem:[#allocation4] sm:$0xff]
        %848 = vset.pattern.permute.xlu0 0
        %849 = vperm.xlu0 %848, %v845
        %v850 = vpop.permute.xlu0 %849
        %v852 = vmul.f32 %v846, %v850
        %v853 = vpack.c.bf16 %v852, %v852
        %vm854 = vcmask 257024
        %855 = vst.msk [vmem:[%s274] sm:$0xf] %vm854, %v853
        %v856 = vld [vmem:[#allocation4] sm:$0xff]
        %857 = vset.pattern.permute.xlu0 1
        %858 = vperm.xlu0 %857, %v845
        %v859 = vpop.permute.xlu0 %858
        %v861 = vmul.f32 %v856, %v859
        %v862 = vpack.c.bf16 %v861, %v861
        %vm863 = vcmask 519424
        %864 = vst.msk [vmem:[%s274] sm:$0xf] %vm863, %v862
        %v865 = vld [vmem:[#allocation4] sm:$0xff]
        %866 = vset.pattern.permute.xlu0 2
        %867 = vperm.xlu0 %866, %v845
        %v868 = vpop.permute.xlu0 %867
        %v870 = vmul.f32 %v865, %v868
        %v871 = vpack.c.bf16 %v870, %v870
        %vm872 = vcmask 781824
        %873 = vst.msk [vmem:[%s274] sm:$0xf] %vm872, %v871
        %v874 = vld [vmem:[#allocation4] sm:$0xff]
        %875 = vset.pattern.permute.xlu0 3
        %876 = vperm.xlu0 %875, %v845
        %v877 = vpop.permute.xlu0 %876
        %v879 = vmul.f32 %v874, %v877
        %v880 = vpack.c.bf16 %v879, %v879
        %vm881 = vcmask 1044224
        %882 = vst.msk [vmem:[%s274] sm:$0xf] %vm881, %v880
      $region40: #{decoder_forward.24} parent=31 // pred_fallthru
        _
      %p883 = scmp.lt.s32.totalorder %s19, 1
      %s884 = scalar_select %p883, %s19, 1
      %p885 = scmp.lt.s32.totalorder %s20, 0
      %s886 = scalar_select %p885, %s20, 0
      %s887 = sadd.s32 %s886, %s884
      %s888 = smul.addr %s887, 4
      %s889 = scalar_lea.vmem %s3, %s888
      // Predicated region
      $region41: #{decoder_forward.24} parent=31 // pred_check
        %p890 = pneg %p137
      $region42: #{decoder_forward.24} parent=31 // pred_check_branch
        %892 = sbr.rel (%p890) target = $region44
      $region43: #{decoder_forward.24} parent=31 // pred_region
        _
      $region44: #{decoder_forward.24} parent=31 // pred_fallthru
        _
    $region32: #{decoder_forward.24} parent=5 // pred_fallthru
      _
    %p893 = scmp.le.s32.totalorder 2, %s9
    // Predicated region
    $region45: #{decoder_forward.24} parent=5 // pred_check
      %p894 = pneg %p893
    $region46: #{decoder_forward.24} parent=5 // pred_check_branch
      %896 = sbr.rel (%p894) target = $region48
    $region47: #{decoder_forward.24} parent=5 // pred_region
      %s897 = ssub.s32 %s9, 2
      // Predicated region
      $region49: #{decoder_forward.24} parent=47 // pred_check
        %p898 = pneg %p143
      $region50: #{decoder_forward.24} parent=47 // pred_check_branch
        %900 = sbr.rel (%p898) target = $region52
      $region51: #{decoder_forward.24} parent=47 // pred_region
        %p901 = scmp.lt.s32.totalorder %s22, 1
        %s902 = scalar_select %p901, %s22, 1
        %p903 = scmp.lt.s32.totalorder %s23, 0
        %s904 = scalar_select %p903, %s23, 0
        %s905 = sadd.s32 %s904, %s902
        %s906 = smul.addr %s905, 4
        %s907 = scalar_lea.vmem %s3, %s906
      $region52: #{decoder_forward.24} parent=47 // pred_fallthru
        _
    $region48: #{decoder_forward.24} parent=5 // pred_fallthru
      _
  $region6: #{decoder_forward.24} parent=0 // loop_footer
    %s13 = sadd.s32 1, %s9
  $region7: #{decoder_forward.24} parent=0 // loop_footer_branch
    %8 = sbr.rel target = $region3
  $region8: #{decoder_forward.24} parent=0 // loop_exit
    _

// kernel: decoder_forward.27
$region0: #{decoder_forward.27}
  #allocation0 [shape = 'u32[]', space=smem, size = 0x4, offset = 0x4, fixed_abs, tag = 'smem constant byte address 0x4 - core index']
  #allocation1 [shape = 'u32[144,128]{1,0:T(1,128)}', space=vmem, size = 0x12000, scoped, tag = 'internal scratch']
  #allocation2 [shape = 'f32[16,128]{1,0:T(8,128)}', space=vmem, size = 0x2000, scoped, tag = 'scratch operand']
  %s0 = inlined_call_operand.vmem [shape: bf16[16,256], index: 0, kind: input, shape index: {}]
  %s1 = inlined_call_operand.vmem [shape: bf16[256,128], index: 1, kind: input, shape index: {}]
  %s2 = inlined_call_operand.vmem [shape: f32[1,128], index: 2, kind: input, shape index: {}]
  %s3 = inlined_call_operand.vmem [shape: bf16[16,128], index: 3, kind: input, shape index: {}]
  %s4 = inlined_call_operand.vmem [shape: f32[1,128], index: 4, kind: input, shape index: {}]
  %s5 = inlined_call_operand.vmem [shape: f32[1,128], index: 5, kind: input, shape index: {}]
  %s6 = inlined_call_operand.vmem [shape: bf16[16,128], index: 6, kind: output, shape index: {}]
  %s7 = sld [smem:[#allocation0]]
  $region42: #{decoder_forward.27} parent=0
    _
  %s9 = ssub.s32 1, %s7
  %s10 = scalar_select 0, %s9, %s7
  // Predicated region
  $region2: #{decoder_forward.27} parent=0 // pred_check
    _
  $region3: #{decoder_forward.27} parent=0 // pred_check_branch
    %12 = sbr.rel (0) target = $region5
  $region4: #{decoder_forward.27} parent=0 // pred_region
    _
  $region5: #{decoder_forward.27} parent=0 // pred_fallthru
    _
  // Predicated region
  $region6: #{decoder_forward.27} parent=0 // pred_check
    _
  $region7: #{decoder_forward.27} parent=0 // pred_check_branch
    %14 = sbr.rel (0) target = $region9
  $region8: #{decoder_forward.27} parent=0 // pred_region
    _
  $region9: #{decoder_forward.27} parent=0 // pred_fallthru
    _
  // Predicated region
  $region10: #{decoder_forward.27} parent=0 // pred_check
    _
  $region11: #{decoder_forward.27} parent=0 // pred_check_branch
    %16 = sbr.rel (0) target = $region13
  $region12: #{decoder_forward.27} parent=0 // pred_region
    _
  $region13: #{decoder_forward.27} parent=0 // pred_fallthru
    _
  // Predicated region
  $region14: #{decoder_forward.27} parent=0 // pred_check
    _
  $region15: #{decoder_forward.27} parent=0 // pred_check_branch
    %18 = sbr.rel (0) target = $region17
  $region16: #{decoder_forward.27} parent=0 // pred_region
    _
  $region17: #{decoder_forward.27} parent=0 // pred_fallthru
    _
  // Predicated region
  $region18: #{decoder_forward.27} parent=0 // pred_check
    _
  $region19: #{decoder_forward.27} parent=0 // pred_check_branch
    %20 = sbr.rel (0) target = $region21
  $region20: #{decoder_forward.27} parent=0 // pred_region
    _
  $region21: #{decoder_forward.27} parent=0 // pred_fallthru
    _
  // Predicated region
  $region22: #{decoder_forward.27} parent=0 // pred_check
    _
  $region23: #{decoder_forward.27} parent=0 // pred_check_branch
    %22 = sbr.rel (0) target = $region25
  $region24: #{decoder_forward.27} parent=0 // pred_region
    _
  $region25: #{decoder_forward.27} parent=0 // pred_fallthru
    _
  %p24 = scmp.eq.s32.totalorder 0, 0
  // Predicated region
  $region26: #{decoder_forward.27} parent=0 // pred_check
    %p25 = pneg %p24
  $region27: #{decoder_forward.27} parent=0 // pred_check_branch
    %27 = sbr.rel (%p25) target = $region29
  $region28: #{decoder_forward.27} parent=0 // pred_region
    %28 = vst [vmem:[#allocation2] sm:$0xff] 0.0
    %29 = vst [vmem:[#allocation2 + $0x8] sm:$0xff] 0.0
  $region29: #{decoder_forward.27} parent=0 // pred_fallthru
    _
  %v30 = vld [vmem:[#allocation2] sm:$0xff]
  %v31 = vld [vmem:[#allocation2 + $0x8] sm:$0xff]
  %v32 = vld [vmem:[%s0] sm:$0xff]
  %v33 = vld [vmem:[%s0 + $0x8] sm:$0xff]
  %v34 = vld [vmem:[%s1] sm:$0xf]
  %v35 = vld [vmem:[%s1 + $0x4] sm:$0xf]
  %v36 = vld [vmem:[%s1 + $0x8] sm:$0xf]
  %v37 = vld [vmem:[%s1 + $0xc] sm:$0xf]
  %v38 = vld [vmem:[%s1 + $0x10] sm:$0xf]
  %v39 = vld [vmem:[%s1 + $0x14] sm:$0xf]
  %v40 = vld [vmem:[%s1 + $0x18] sm:$0xf]
  %v41 = vld [vmem:[%s1 + $0x1c] sm:$0xf]
  %v42 = vld [vmem:[%s1 + $0x20] sm:$0xf]
  %v43 = vld [vmem:[%s1 + $0x24] sm:$0xf]
  %v44 = vld [vmem:[%s1 + $0x28] sm:$0xf]
  %v45 = vld [vmem:[%s1 + $0x2c] sm:$0xf]
  %v46 = vld [vmem:[%s1 + $0x30] sm:$0xf]
  %v47 = vld [vmem:[%s1 + $0x34] sm:$0xf]
  %v48 = vld [vmem:[%s1 + $0x38] sm:$0xf]
  %v49 = vld [vmem:[%s1 + $0x3c] sm:$0xf]
  %v50 = vld [vmem:[%s1 + $0x40] sm:$0xf]
  %v51 = vld [vmem:[%s1 + $0x44] sm:$0xf]
  %v52 = vld [vmem:[%s1 + $0x48] sm:$0xf]
  %v53 = vld [vmem:[%s1 + $0x4c] sm:$0xf]
  %v54 = vld [vmem:[%s1 + $0x50] sm:$0xf]
  %v55 = vld [vmem:[%s1 + $0x54] sm:$0xf]
  %v56 = vld [vmem:[%s1 + $0x58] sm:$0xf]
  %v57 = vld [vmem:[%s1 + $0x5c] sm:$0xf]
  %v58 = vld [vmem:[%s1 + $0x60] sm:$0xf]
  %v59 = vld [vmem:[%s1 + $0x64] sm:$0xf]
  %v60 = vld [vmem:[%s1 + $0x68] sm:$0xf]
  %v61 = vld [vmem:[%s1 + $0x6c] sm:$0xf]
  %v62 = vld [vmem:[%s1 + $0x70] sm:$0xf]
  %v63 = vld [vmem:[%s1 + $0x74] sm:$0xf]
  %v64 = vld [vmem:[%s1 + $0x78] sm:$0xf]
  %v65 = vld [vmem:[%s1 + $0x7c] sm:$0xf]
  %v68 = vunpack.c.l.b16 %v32
  %v69 = vunpack.c.h.b16 %v32
  %v70 = vunpack.c.l.b16 %v33
  %v71 = vunpack.c.h.b16 %v33
  %v72 = vpack.c.b16 %v70, %v68
  %v73 = vpack.c.b16 %v71, %v69
  %v108 = vunpack.c.l.b16 %v34
  %v109 = vunpack.c.l.b16 %v35
  %v110 = vunpack.c.l.b16 %v36
  %v111 = vunpack.c.l.b16 %v37
  %v112 = vunpack.c.l.b16 %v38
  %v113 = vunpack.c.l.b16 %v39
  %v114 = vunpack.c.l.b16 %v40
  %v115 = vunpack.c.l.b16 %v41
  %v116 = vunpack.c.l.b16 %v42
  %v117 = vunpack.c.l.b16 %v43
  %v118 = vunpack.c.l.b16 %v44
  %v119 = vunpack.c.l.b16 %v45
  %v120 = vunpack.c.l.b16 %v46
  %v121 = vunpack.c.l.b16 %v47
  %v122 = vunpack.c.l.b16 %v48
  %v123 = vunpack.c.l.b16 %v49
  %v124 = vunpack.c.l.b16 %v50
  %v125 = vunpack.c.l.b16 %v51
  %v126 = vunpack.c.l.b16 %v52
  %v127 = vunpack.c.l.b16 %v53
  %v128 = vunpack.c.l.b16 %v54
  %v129 = vunpack.c.l.b16 %v55
  %v130 = vunpack.c.l.b16 %v56
  %v131 = vunpack.c.l.b16 %v57
  %v132 = vunpack.c.l.b16 %v58
  %v133 = vunpack.c.l.b16 %v59
  %v134 = vunpack.c.l.b16 %v60
  %v135 = vunpack.c.l.b16 %v61
  %v136 = vunpack.c.l.b16 %v62
  %v137 = vunpack.c.l.b16 %v63
  %v138 = vunpack.c.l.b16 %v64
  %v139 = vunpack.c.l.b16 %v65
  %v140 = vpack.c.b16 %v109, %v108
  %v141 = vpack.c.b16 %v111, %v110
  %v142 = vpack.c.b16 %v113, %v112
  %v143 = vpack.c.b16 %v115, %v114
  %v144 = vpack.c.b16 %v117, %v116
  %v145 = vpack.c.b16 %v119, %v118
  %v146 = vpack.c.b16 %v121, %v120
  %v147 = vpack.c.b16 %v123, %v122
  %v148 = vpack.c.b16 %v125, %v124
  %v149 = vpack.c.b16 %v127, %v126
  %v150 = vpack.c.b16 %v129, %v128
  %v151 = vpack.c.b16 %v131, %v130
  %v152 = vpack.c.b16 %v133, %v132
  %v153 = vpack.c.b16 %v135, %v134
  %v154 = vpack.c.b16 %v137, %v136
  %v155 = vpack.c.b16 %v139, %v138
  %172 = vmatprep.subr.bf16.mxu0 0
  %173 = vmatpush1.bf16.msra.mxu0 %v140
  %174 = vmatprep.subr.bf16.mxu0 0
  %175 = vmatpush1.bf16.msra.mxu0 %v141
  %176 = vmatprep.subr.bf16.mxu0 0
  %177 = vmatpush1.bf16.msra.mxu0 %v142
  %178 = vmatprep.subr.bf16.mxu0 0
  %179 = vmatpush1.bf16.msra.mxu0 %v143
  %180 = vmatprep.subr.bf16.mxu0 0
  %181 = vmatpush1.bf16.msra.mxu0 %v144
  %182 = vmatprep.subr.bf16.mxu0 0
  %183 = vmatpush1.bf16.msra.mxu0 %v145
  %184 = vmatprep.subr.bf16.mxu0 0
  %185 = vmatpush1.bf16.msra.mxu0 %v146
  %186 = vmatprep.subr.bf16.mxu0 0
  %187 = vmatpush1.bf16.msra.mxu0 %v147
  %188 = vmatprep.subr.bf16.mxu0 0
  %189 = vmatpush1.bf16.msra.mxu0 %v148
  %190 = vmatprep.subr.bf16.mxu0 0
  %191 = vmatpush1.bf16.msra.mxu0 %v149
  %192 = vmatprep.subr.bf16.mxu0 0
  %193 = vmatpush1.bf16.msra.mxu0 %v150
  %194 = vmatprep.subr.bf16.mxu0 0
  %195 = vmatpush1.bf16.msra.mxu0 %v151
  %196 = vmatprep.subr.bf16.mxu0 0
  %197 = vmatpush1.bf16.msra.mxu0 %v152
  %198 = vmatprep.subr.bf16.mxu0 0
  %199 = vmatpush1.bf16.msra.mxu0 %v153
  %200 = vmatprep.subr.bf16.mxu0 0
  %201 = vmatpush1.bf16.msra.mxu0 %v154
  %202 = vmatprep.subr.bf16.mxu0 0
  %203 = vmatpush1.bf16.msra.mxu0 %v155
  %204 = vmatprep.mubr.bf16.mxu0 %v73
  %205 = vmatmul.mubr.bf16.gmra.mrb[0].mxu0 %v72
  %v206 = vpop.f32.mrb[0].mxu0
  %v207 = vadd.f32 0.0, %v206
  %v208 = vpop.f32.mrb[0].mxu0
  %v209 = vpop.f32.mrb[0].mxu0
  %v210 = vadd.f32 0.0, %v209
  %v211 = vpop.f32.mrb[0].mxu0
  %212 = vdwg.mxu0
  %v213 = vadd.f32 %v30, %v207
  %v214 = vadd.f32 %v31, %v210
  %215 = vst [vmem:[#allocation2] sm:$0xff] %v213
  %216 = vst [vmem:[#allocation2 + $0x8] sm:$0xff] %v214
  // Predicated region
  $region30: #{decoder_forward.27} parent=0 // pred_check
    %p217 = pneg %p24
  $region31: #{decoder_forward.27} parent=0 // pred_check_branch
    %219 = sbr.rel (%p217) target = $region33
  $region32: #{decoder_forward.27} parent=0 // pred_region
    %v220 = vld [vmem:[#allocation2] sm:$0xff]
    %v221 = vld [vmem:[#allocation2 + $0x8] sm:$0xff]
    %v222 = vld [vmem:[%s2] sm:$0x1]
    %v224 = vlaneseq
    %v225 = vshrl.u32 %v224, 7
    %v226 = vsub.s32 0, %v225
    %v227 = vrot.slane %v222, %v226
    %v229 = vadd.f32 %v220, %v227
    %v230 = vadd.f32 %v221, %v227
    %v231 = vld [vmem:[%s3] sm:$0xf]
    %v232 = vld [vmem:[%s3 + $0x4] sm:$0xf]
    %v233 = vunpack.c.l.bf16 %v231
    %v234 = vunpack.c.l.bf16 %v232
    %v235 = vadd.f32 %v229, %v233
    %v236 = vadd.f32 %v230, %v234
    %237 = vadd.xlane.f32.xlu0 %v235
    %v238 = vpop.xlane.xlu0 %237
    %239 = vadd.xlane.f32.xlu0 %v236
    %v240 = vpop.xlane.xlu0 %239
    %v241 = vrcp.pop 128.0
    %v242 = vmul.f32 %v238, %v241
    %v243 = vmul.f32 %v240, %v241
    %v244 = vsub.f32 %v235, %v242
    %v245 = vsub.f32 %v236, %v243
    %v246 = vmul.f32 %v244, %v244
    %v247 = vmul.f32 %v245, %v245
    %248 = vadd.xlane.f32.xlu0 %v246
    %v249 = vpop.xlane.xlu0 %248
    %250 = vadd.xlane.f32.xlu0 %v247
    %v251 = vpop.xlane.xlu0 %250
    %v252 = vmul.f32 %v249, %v241
    %v253 = vmul.f32 %v251, %v241
    %v254 = vadd.f32 %v252, 1e-05
    %v255 = vadd.f32 %v253, 1e-05
    %v256 = vrsqrt.pop %v254
    %v257 = vrsqrt.pop %v255
    %v258 = vmul.f32 %v244, %v256
    %v259 = vmul.f32 %v245, %v257
    %v260 = vld [vmem:[%s4] sm:$0x1]
    %v262 = vlaneseq
    %v263 = vshrl.u32 %v262, 7
    %v264 = vsub.s32 0, %v263
    %v265 = vrot.slane %v260, %v264
    %v267 = vmul.f32 %v258, %v265
    %v268 = vmul.f32 %v259, %v265
    %v269 = vld [vmem:[%s5] sm:$0x1]
    %v271 = vlaneseq
    %v272 = vshrl.u32 %v271, 7
    %v273 = vsub.s32 0, %v272
    %v274 = vrot.slane %v269, %v273
    %v276 = vadd.f32 %v267, %v274
    %v277 = vadd.f32 %v268, %v274
    %v278 = vpack.c.bf16 %v277, %v276
    %v280 = vunpack.c.l.b16 %v278
    %v281 = vunpack.c.h.b16 %v278
    %v282 = vpack.c.b16 %v280, %v280
    %v283 = vpack.c.b16 %v281, %v281
    %286 = vst [vmem:[%s6] sm:$0xf] %v282
    %287 = vst [vmem:[%s6 + $0x4] sm:$0xf] %v283
  $region33: #{decoder_forward.27} parent=0 // pred_fallthru
    _
  // Predicated region
  $region34: #{decoder_forward.27} parent=0 // pred_check
    _
  $region35: #{decoder_forward.27} parent=0 // pred_check_branch
    %289 = sbr.rel (0) target = $region37
  $region36: #{decoder_forward.27} parent=0 // pred_region
    _
  $region37: #{decoder_forward.27} parent=0 // pred_fallthru
    _
  // Predicated region
  $region38: #{decoder_forward.27} parent=0 // pred_check
    _
  $region39: #{decoder_forward.27} parent=0 // pred_check_branch
    %291 = sbr.rel (0) target = $region41
  $region40: #{decoder_forward.27} parent=0 // pred_region
    _
  $region41: #{decoder_forward.27} parent=0 // pred_fallthru
    _

// kernel: decoder_forward.37
$region0: #{decoder_forward.37}
  #allocation0 [shape = 'u32[]', space=smem, size = 0x4, offset = 0x4, fixed_abs, tag = 'smem constant byte address 0x4 - core index']
  #allocation1 [shape = 'u32[144,128]{1,0:T(1,128)}', space=vmem, size = 0x12000, scoped, tag = 'internal scratch']
  #allocation2 [shape = 'f32[16,256]{1,0:T(8,128)}', space=vmem, size = 0x4000, scoped, tag = 'scratch operand']
  %s0 = inlined_call_operand.vmem [shape: bf16[16,128], index: 0, kind: input, shape index: {}]
  %s1 = inlined_call_operand.vmem [shape: bf16[128,256], index: 1, kind: input, shape index: {}]
  %s2 = inlined_call_operand.vmem [shape: f32[1,256], index: 2, kind: input, shape index: {}]
  %s3 = inlined_call_operand.hbm [shape: f32[16,256], index: 3, kind: output, shape index: {}]
  %s4 = sld [smem:[#allocation0]]
  $region30: #{decoder_forward.37} parent=0
    _
  %s6 = ssub.s32 1, %s4
  %s7 = scalar_select 0, %s6, %s4
  $region1: #{decoder_forward.37} parent=0
    #allocation3 [shape = 'u8[16384]{0}', space=vmem, size = 0x4000, scoped, tag = 'output window, operand 0, single buffered']
    #allocation4 [shape = 's32[1]{0}', space=sflag, size = 0x4, scoped, tag = 'scoped memory for decoder_forward.37']
    %8 = vsyncpa [#allocation4], 0
    // Predicated region
    $region2: #{decoder_forward.37} parent=1 // pred_check
      _
    $region3: #{decoder_forward.37} parent=1 // pred_check_branch
      %10 = sbr.rel (0) target = $region5
    $region4: #{decoder_forward.37} parent=1 // pred_region
      _
    $region5: #{decoder_forward.37} parent=1 // pred_fallthru
      _
    // Predicated region
    $region6: #{decoder_forward.37} parent=1 // pred_check
      _
    $region7: #{decoder_forward.37} parent=1 // pred_check_branch
      %12 = sbr.rel (0) target = $region9
    $region8: #{decoder_forward.37} parent=1 // pred_region
      _
    $region9: #{decoder_forward.37} parent=1 // pred_fallthru
      _
    // Predicated region
    $region10: #{decoder_forward.37} parent=1 // pred_check
      _
    $region11: #{decoder_forward.37} parent=1 // pred_check_branch
      %14 = sbr.rel (0) target = $region13
    $region12: #{decoder_forward.37} parent=1 // pred_region
      _
    $region13: #{decoder_forward.37} parent=1 // pred_fallthru
      _
    %p16 = scmp.eq.s32.totalorder 0, 0
    // Predicated region
    $region14: #{decoder_forward.37} parent=1 // pred_check
      %p17 = pneg %p16
    $region15: #{decoder_forward.37} parent=1 // pred_check_branch
      %19 = sbr.rel (%p17) target = $region17
    $region16: #{decoder_forward.37} parent=1 // pred_region
      %20 = vst [vmem:[#allocation2] sm:$0xff] 0.0
      %21 = vst [vmem:[#allocation2 + $0x8] sm:$0xff] 0.0
      %22 = vst [vmem:[#allocation2 + $0x10] sm:$0xff] 0.0
      %23 = vst [vmem:[#allocation2 + $0x18] sm:$0xff] 0.0
    $region17: #{decoder_forward.37} parent=1 // pred_fallthru
      _
    %v24 = vld [vmem:[#allocation2] sm:$0xff]
    %v25 = vld [vmem:[#allocation2 + $0x8] sm:$0xff]
    %v26 = vld [vmem:[#allocation2 + $0x10] sm:$0xff]
    %v27 = vld [vmem:[#allocation2 + $0x18] sm:$0xff]
    %v28 = vld [vmem:[%s0] sm:$0xf]
    %v29 = vld [vmem:[%s0 + $0x4] sm:$0xf]
    %v30 = vld [vmem:[%s1] sm:$0xff]
    %v31 = vld [vmem:[%s1 + $0x8] sm:$0xff]
    %v32 = vld [vmem:[%s1 + $0x10] sm:$0xff]
    %v33 = vld [vmem:[%s1 + $0x18] sm:$0xff]
    %v34 = vld [vmem:[%s1 + $0x20] sm:$0xff]
    %v35 = vld [vmem:[%s1 + $0x28] sm:$0xff]
    %v36 = vld [vmem:[%s1 + $0x30] sm:$0xff]
    %v37 = vld [vmem:[%s1 + $0x38] sm:$0xff]
    %v38 = vld [vmem:[%s1 + $0x40] sm:$0xff]
    %v39 = vld [vmem:[%s1 + $0x48] sm:$0xff]
    %v40 = vld [vmem:[%s1 + $0x50] sm:$0xff]
    %v41 = vld [vmem:[%s1 + $0x58] sm:$0xff]
    %v42 = vld [vmem:[%s1 + $0x60] sm:$0xff]
    %v43 = vld [vmem:[%s1 + $0x68] sm:$0xff]
    %v44 = vld [vmem:[%s1 + $0x70] sm:$0xff]
    %v45 = vld [vmem:[%s1 + $0x78] sm:$0xff]
    %v48 = vunpack.c.l.b16 %v28
    %v49 = vunpack.c.l.b16 %v29
    %v50 = vpack.c.b16 %v49, %v48
    %v68 = vunpack.c.l.b16 %v30
    %v69 = vunpack.c.h.b16 %v30
    %v70 = vunpack.c.l.b16 %v31
    %v71 = vunpack.c.h.b16 %v31
    %v72 = vunpack.c.l.b16 %v32
    %v73 = vunpack.c.h.b16 %v32
    %v74 = vunpack.c.l.b16 %v33
    %v75 = vunpack.c.h.b16 %v33
    %v76 = vunpack.c.l.b16 %v34
    %v77 = vunpack.c.h.b16 %v34
    %v78 = vunpack.c.l.b16 %v35
    %v79 = vunpack.c.h.b16 %v35
    %v80 = vunpack.c.l.b16 %v36
    %v81 = vunpack.c.h.b16 %v36
    %v82 = vunpack.c.l.b16 %v37
    %v83 = vunpack.c.h.b16 %v37
    %v84 = vunpack.c.l.b16 %v38
    %v85 = vunpack.c.h.b16 %v38
    %v86 = vunpack.c.l.b16 %v39
    %v87 = vunpack.c.h.b16 %v39
    %v88 = vunpack.c.l.b16 %v40
    %v89 = vunpack.c.h.b16 %v40
    %v90 = vunpack.c.l.b16 %v41
    %v91 = vunpack.c.h.b16 %v41
    %v92 = vunpack.c.l.b16 %v42
    %v93 = vunpack.c.h.b16 %v42
    %v94 = vunpack.c.l.b16 %v43
    %v95 = vunpack.c.h.b16 %v43
    %v96 = vunpack.c.l.b16 %v44
    %v97 = vunpack.c.h.b16 %v44
    %v98 = vunpack.c.l.b16 %v45
    %v99 = vunpack.c.h.b16 %v45
    %v100 = vpack.c.b16 %v70, %v68
    %v101 = vpack.c.b16 %v71, %v69
    %v102 = vpack.c.b16 %v74, %v72
    %v103 = vpack.c.b16 %v75, %v73
    %v104 = vpack.c.b16 %v78, %v76
    %v105 = vpack.c.b16 %v79, %v77
    %v106 = vpack.c.b16 %v82, %v80
    %v107 = vpack.c.b16 %v83, %v81
    %v108 = vpack.c.b16 %v86, %v84
    %v109 = vpack.c.b16 %v87, %v85
    %v110 = vpack.c.b16 %v90, %v88
    %v111 = vpack.c.b16 %v91, %v89
    %v112 = vpack.c.b16 %v94, %v92
    %v113 = vpack.c.b16 %v95, %v93
    %v114 = vpack.c.b16 %v98, %v96
    %v115 = vpack.c.b16 %v99, %v97
    %132 = vmatprep.subr.bf16.mxu0 %v101
    %133 = vmatpush1.bf16.msra.mxu0 %v100
    %134 = vmatprep.subr.bf16.mxu0 %v103
    %135 = vmatpush1.bf16.msra.mxu0 %v102
    %136 = vmatprep.subr.bf16.mxu0 %v105
    %137 = vmatpush1.bf16.msra.mxu0 %v104
    %138 = vmatprep.subr.bf16.mxu0 %v107
    %139 = vmatpush1.bf16.msra.mxu0 %v106
    %140 = vmatprep.subr.bf16.mxu0 %v109
    %141 = vmatpush1.bf16.msra.mxu0 %v108
    %142 = vmatprep.subr.bf16.mxu0 %v111
    %143 = vmatpush1.bf16.msra.mxu0 %v110
    %144 = vmatprep.subr.bf16.mxu0 %v113
    %145 = vmatpush1.bf16.msra.mxu0 %v112
    %146 = vmatprep.subr.bf16.mxu0 %v115
    %147 = vmatpush1.bf16.msra.mxu0 %v114
    %148 = vmatprep.subr.bf16.mxu0 0
    %149 = vmatpush1.bf16.msra.mxu0 0
    %150 = vmatprep.subr.bf16.mxu0 0
    %151 = vmatpush1.bf16.msra.mxu0 0
    %152 = vmatprep.subr.bf16.mxu0 0
    %153 = vmatpush1.bf16.msra.mxu0 0
    %154 = vmatprep.subr.bf16.mxu0 0
    %155 = vmatpush1.bf16.msra.mxu0 0
    %156 = vmatprep.subr.bf16.mxu0 0
    %157 = vmatpush1.bf16.msra.mxu0 0
    %158 = vmatprep.subr.bf16.mxu0 0
    %159 = vmatpush1.bf16.msra.mxu0 0
    %160 = vmatprep.subr.bf16.mxu0 0
    %161 = vmatpush1.bf16.msra.mxu0 0
    %162 = vmatprep.subr.bf16.mxu0 0
    %163 = vmatpush1.bf16.msra.mxu0 0
    %164 = vmatprep.mubr.bf16.mxu0 0
    %165 = vmatmul.mubr.bf16.gmra.mrb[0].mxu0 %v50
    %v166 = vpop.f32.mrb[0].mxu0
    %v167 = vadd.f32 0.0, %v166
    %v168 = vpop.f32.mrb[0].mxu0
    %v169 = vadd.f32 0.0, %v168
    %v170 = vpop.f32.mrb[0].mxu0
    %v171 = vadd.f32 0.0, %v170
    %v172 = vpop.f32.mrb[0].mxu0
    %v173 = vadd.f32 0.0, %v172
    %174 = vdwg.mxu0
    %v175 = vadd.f32 %v24, %v167
    %v176 = vadd.f32 %v25, %v169
    %v177 = vadd.f32 %v26, %v171
    %v178 = vadd.f32 %v27, %v173
    %179 = vst [vmem:[#allocation2] sm:$0xff] %v175
    %180 = vst [vmem:[#allocation2 + $0x8] sm:$0xff] %v176
    %181 = vst [vmem:[#allocation2 + $0x10] sm:$0xff] %v177
    %182 = vst [vmem:[#allocation2 + $0x18] sm:$0xff] %v178
    // Predicated region
    $region18: #{decoder_forward.37} parent=1 // pred_check
      %p183 = pneg %p16
    $region19: #{decoder_forward.37} parent=1 // pred_check_branch
      %185 = sbr.rel (%p183) target = $region21
    $region20: #{decoder_forward.37} parent=1 // pred_region
      %v186 = vld [vmem:[#allocation2] sm:$0xff]
      %v187 = vld [vmem:[#allocation2 + $0x8] sm:$0xff]
      %v188 = vld [vmem:[#allocation2 + $0x10] sm:$0xff]
      %v189 = vld [vmem:[#allocation2 + $0x18] sm:$0xff]
      %v190 = vld [vmem:[%s2] sm:$0x3]
      %v192 = vlaneseq
      %v193 = vshrl.u32 %v192, 7
      %v194 = vsub.s32 0, %v193
      %v195 = vrot.slane %v190, %v194
      %v196 = vlaneseq
      %v197 = vshrl.u32 %v196, 7
      %v198 = vsub.s32 1, %v197
      %v199 = vrot.slane %v190, %v198
      %v202 = vadd.f32 %v186, %v195
      %v203 = vadd.f32 %v187, %v199
      %v204 = vadd.f32 %v188, %v195
      %v205 = vadd.f32 %v189, %v199
      %206 = vst [vmem:[#allocation3] sm:$0xff] %v202
      %207 = vst [vmem:[#allocation3 + $0x8] sm:$0xff] %v203
      %208 = vst [vmem:[#allocation3 + $0x10] sm:$0xff] %v204
      %209 = vst [vmem:[#allocation3 + $0x18] sm:$0xff] %v205
    $region21: #{decoder_forward.37} parent=1 // pred_fallthru
      _
    // Predicated region
    $region22: #{decoder_forward.37} parent=1 // pred_check
      _
    $region23: #{decoder_forward.37} parent=1 // pred_check_branch
      %211 = sbr.rel (0) target = $region25
    $region24: #{decoder_forward.37} parent=1 // pred_region
      %s213 = ssub.s32 512, 512
      %214 = vsyncadd [#allocation4], %s213
      %s215 = sshll.u32 [#allocation3], 4
      %s216 = int_to_ptr.vmem [resolvable:$true] %s215
      %221 = dma.vmem_to_hbm [thread:$0]  %s216, 512, %s3, [#allocation4], 256, 256, 16
    $region25: #{decoder_forward.37} parent=1 // pred_fallthru
      _
    // Predicated region
    $region26: #{decoder_forward.37} parent=1 // pred_check
      _
    $region27: #{decoder_forward.37} parent=1 // pred_check_branch
      %223 = sbr.rel (0) target = $region29
    $region28: #{decoder_forward.37} parent=1 // pred_region
      %224 = dma.done [#allocation4], 512
    $region29: #{decoder_forward.37} parent=1 // pred_fallthru
      _
    %225 = vsyncpa [#allocation4], 1

</llo_original>
